<compile_context>
chip_gen: v6e
topology: v6e:2x2x1
jax: 0.10.0
libtpu: 0.0.40
codegen_flags: <defaults>
</compile_context>

<pallas_src>
import math

import jax
import jax.numpy as jnp
from jax.experimental import pallas as pl
from jax.experimental.pallas import tpu as pltpu

# ----- scaled-down config (vit_base_patch16_224 uses 224/16/768/12/12) -----
IMG = 32             # image size
PATCH = 16           # patch size
CIN = 3              # input channels
DIM = 32             # embed dim
HEADS = 4            # attention heads
DEPTH = 2            # transformer blocks
MLP = 4 * DIM        # mlp hidden dim (mlp_ratio=4)
NUM_CLASSES = 2      # replaced head: nn.Linear(num_features, 2)
EPS = 1e-6           # timm ViT LayerNorm eps
HEAD_DIM = DIM // HEADS
NPATCH = (IMG // PATCH) ** 2
NTOK = NPATCH + 1    # + cls token
NPAD = 8             # token axis padded to a sublane-aligned count
HEAD_PAD = 128       # classification-head / bias-slab lane width (full tile)
NEG_INF = -1e30

# bias-slab row layout: rows 0..2 = norm_g, norm_b, head_b; then 8 rows/block
BIAS_BLK0 = 3
BIAS_ROWS_PER_BLK = 8
# fused weight-slab column layout: [qkv_w | proj_w | fc1_w]
WCOL_QKV = 0
WCOL_PROJ = 3 * DIM
WCOL_FC1 = 4 * DIM


def _vmem_specs(n):
    return [pl.BlockSpec(memory_space=pltpu.MemorySpace.VMEM) for _ in range(n)]


# --------------------------- in-kernel helpers -------------------------------

def _dot(a, b):
    return jnp.dot(a, b, preferred_element_type=jnp.float32)


def _layernorm(x, g, b):
    mu = jnp.mean(x, axis=-1, keepdims=True)
    xc = x - mu
    var = jnp.mean(xc * xc, axis=-1, keepdims=True)
    return xc * jax.lax.rsqrt(var + EPS) * g + b


def _gelu(y):
    # exact (erf) GELU, matching torch.nn.GELU default used by timm ViT
    return 0.5 * y * (1.0 + jax.lax.erf(y * (1.0 / math.sqrt(2.0))))


# ------------------------------ fused kernel ---------------------------------

def _vit_kernel(patches_ref, patch_w_ref, base_ref, bias_ref,
                wblk_ref, fc2_ref, head_w_ref, out_ref):
    # Patch embed (Conv2d k=s=PATCH == matmul on the pre-scattered patch slab);
    # the conv bias, cls token and pos embedding are already folded into `base`
    # host-side, so tokenisation is one matmul + one add.
    x = base_ref[...] + _dot(patches_ref[...], patch_w_ref[...])   # (B*NPAD, DIM)
    nrows = x.shape[0]
    nbatch = nrows // NPAD
    nblk = wblk_ref.shape[0] // DIM

    # mask for padded key columns (NTOK..NPAD-1); broadcasts over (batch, q).
    kcol = jax.lax.broadcasted_iota(jnp.int32, (NPAD, NPAD), 1)
    kmask = jnp.where(kcol < NTOK, 0.0, NEG_INF).astype(jnp.float32)
    scale = 1.0 / math.sqrt(HEAD_DIM)

    for d in range(nblk):
        br = BIAS_BLK0 + BIAS_ROWS_PER_BLK * d
        ln1_g = bias_ref[br + 0:br + 1, :DIM]
        ln1_b = bias_ref[br + 1:br + 2, :DIM]
        qkv_b = bias_ref[br + 2:br + 3, :3 * DIM]
        proj_b = bias_ref[br + 3:br + 4, :DIM]
        ln2_g = bias_ref[br + 4:br + 5, :DIM]
        ln2_b = bias_ref[br + 5:br + 6, :DIM]
        fc1_b = bias_ref[br + 6:br + 7, :MLP]
        fc2_b = bias_ref[br + 7:br + 8, :DIM]

        wr = d * DIM
        qkv_w = wblk_ref[wr:wr + DIM, WCOL_QKV:WCOL_QKV + 3 * DIM]
        proj_w = wblk_ref[wr:wr + DIM, WCOL_PROJ:WCOL_PROJ + DIM]
        fc1_w = wblk_ref[wr:wr + DIM, WCOL_FC1:WCOL_FC1 + MLP]
        fc2_w = fc2_ref[d * MLP:(d + 1) * MLP, :]

        # --- attention: batched over B per head (qkv columns are head-major,
        #     so each head view is a static lane slice + pure reshape) ---
        h = _layernorm(x, ln1_g, ln1_b)
        qkv = _dot(h, qkv_w) + qkv_b                    # (B*NPAD, 3*DIM)

        head_out = []
        for hh in range(HEADS):
            c0 = hh * HEAD_DIM
            qh = qkv[:, c0:c0 + HEAD_DIM].reshape(nbatch, NPAD, HEAD_DIM)
            kh = qkv[:, DIM + c0:DIM + c0 + HEAD_DIM].reshape(
                nbatch, NPAD, HEAD_DIM)
            vh = qkv[:, 2 * DIM + c0:2 * DIM + c0 + HEAD_DIM].reshape(
                nbatch, NPAD, HEAD_DIM)
            s = jnp.einsum('bqd,bkd->bqk', qh, kh,
                           preferred_element_type=jnp.float32) * scale + kmask
            s = s - jnp.max(s, axis=-1, keepdims=True)
            e = jnp.exp(s)
            p = e * pl.reciprocal(jnp.sum(e, axis=-1, keepdims=True),
                                  approx=True)
            head_out.append(jnp.einsum('bqk,bkd->bqd', p, vh,
                                       preferred_element_type=jnp.float32))
        attn = jnp.concatenate(head_out, axis=-1).reshape(nrows, DIM)

        x = x + _dot(attn, proj_w) + proj_b

        # --- mlp ---
        h2 = _layernorm(x, ln2_g, ln2_b)
        h2 = _gelu(_dot(h2, fc1_w) + fc1_b)
        x = x + _dot(h2, fc2_w) + fc2_b

    # --- pick the B cls rows (row b*NPAD) with a constant one-hot matmul, then
    #     final LN + lane-padded classification head on those rows only ---
    out_rows = out_ref.shape[0]
    rr = jax.lax.broadcasted_iota(jnp.int32, (out_rows, nrows), 0)
    cc = jax.lax.broadcasted_iota(jnp.int32, (out_rows, nrows), 1)
    sel = (cc == rr * NPAD).astype(jnp.float32)          # rows >= B select nothing
    xc = _dot(sel, x)                                    # (out_rows, DIM)
    xn = _layernorm(xc, bias_ref[0:1, :DIM], bias_ref[1:2, :DIM])
    out_ref[...] = _dot(xn, head_w_ref[...]) + bias_ref[2:3, :HEAD_PAD]


# --------------------------- parameters (synthetic) --------------------------
# TODO(synk): timm pretrained checkpoint loading is replaced by deterministic
# random init (same parameter shapes as the scaled-down architecture).

def init_params(key):
    def nrm(k, shape, scale=0.02):
        return scale * jax.random.normal(k, shape, dtype=jnp.float32)

    keys = jax.random.split(key, 8 + DEPTH)
    patch_dim = CIN * PATCH * PATCH
    params = {
        # conv weight (D, C, P, P) stored pre-flattened/transposed as (C*P*P, D)
        "patch_w": nrm(keys[0], (patch_dim, DIM)),
        "patch_b": jnp.zeros((DIM,), jnp.float32),
        "cls": nrm(keys[1], (1, 1, DIM)),
        "pos": nrm(keys[2], (1, NTOK, DIM)),
        "norm_g": jnp.ones((DIM,), jnp.float32),
        "norm_b": jnp.zeros((DIM,), jnp.float32),
        "head_w": nrm(keys[3], (DIM, NUM_CLASSES)),
        "head_b": jnp.zeros((NUM_CLASSES,), jnp.float32),
        "blocks": [],
    }
    for d in range(DEPTH):
        bk = jax.random.split(keys[8 + d], 4)
        params["blocks"].append({
            "ln1_g": jnp.ones((DIM,), jnp.float32),
            "ln1_b": jnp.zeros((DIM,), jnp.float32),
            "qkv_w": nrm(bk[0], (DIM, 3 * DIM)),
            "qkv_b": jnp.zeros((3 * DIM,), jnp.float32),
            "proj_w": nrm(bk[1], (DIM, DIM)),
            "proj_b": jnp.zeros((DIM,), jnp.float32),
            "ln2_g": jnp.ones((DIM,), jnp.float32),
            "ln2_b": jnp.zeros((DIM,), jnp.float32),
            "fc1_w": nrm(bk[2], (DIM, MLP)),
            "fc1_b": jnp.zeros((MLP,), jnp.float32),
            "fc2_w": nrm(bk[3], (MLP, DIM)),
            "fc2_b": jnp.zeros((DIM,), jnp.float32),
        })
    return params


# ---------------------------------- forward ----------------------------------

def vit_forward(params, x):
    B, C, H, W = x.shape
    hp, wp = H // PATCH, W // PATCH
    npatch = hp * wp
    patch_dim = C * PATCH * PATCH

    # ---- host-side glue: tiny reshapes / packing only, math runs in-kernel ---
    # Patch extraction flattened in (C, P, P) order to match Conv2d weights,
    # pre-scattered into the padded token grid (zero rows at cls/pad positions).
    patches = x.reshape(B, C, hp, PATCH, wp, PATCH)
    patches = patches.transpose(0, 2, 4, 1, 3, 5).reshape(B, npatch, patch_dim)
    patches_pad = jnp.concatenate([
        jnp.zeros((B, 1, patch_dim), jnp.float32),
        patches,
        jnp.zeros((B, NPAD - npatch - 1, patch_dim), jnp.float32)],
        axis=1).reshape(B * NPAD, patch_dim)

    # Base token slab (B*NPAD, DIM): cls + pos[0] on row 0 of each batch,
    # pos[1:] + conv bias on the patch rows, zeros on padded rows.
    pos = params["pos"][0]                                     # (NTOK, DIM)
    base_one = jnp.concatenate([
        params["cls"].reshape(1, DIM) + pos[0:1],
        pos[1:NTOK] + params["patch_b"].reshape(1, DIM),
        jnp.zeros((NPAD - NTOK, DIM), jnp.float32)], axis=0)    # (NPAD, DIM)
    base = jnp.tile(base_one, (B, 1))                           # (B*NPAD, DIM)

    # One lane-padded (R, 128) slab holding every bias / LayerNorm vector.
    def _row(v):
        v = v.reshape(1, -1)
        return jnp.pad(v, ((0, 0), (0, HEAD_PAD - v.shape[1])))
    rows = [_row(params["norm_g"]), _row(params["norm_b"]), _row(params["head_b"])]
    for blk in params["blocks"]:
        rows += [_row(blk["ln1_g"]), _row(blk["ln1_b"]), _row(blk["qkv_b"]),
                 _row(blk["proj_b"]), _row(blk["ln2_g"]), _row(blk["ln2_b"]),
                 _row(blk["fc1_b"]), _row(blk["fc2_b"])]
    bias_slab = jnp.concatenate(rows, axis=0)
    bias_slab = jnp.pad(bias_slab, ((0, (-bias_slab.shape[0]) % 8), (0, 0)))

    # Per-block [qkv_w | proj_w | fc1_w] fused along lanes, blocks stacked on
    # rows; fc2_w (different row count) gets its own stacked slab.
    wblk = jnp.concatenate([
        jnp.concatenate([blk["qkv_w"], blk["proj_w"], blk["fc1_w"]], axis=1)
        for blk in params["blocks"]], axis=0)        # (DEPTH*DIM, 4*DIM+MLP)
    fc2 = jnp.concatenate([blk["fc2_w"] for blk in params["blocks"]], axis=0)

    # Lane-pad the classification head to a full 128-lane tile.
    head_w = jnp.pad(params["head_w"], ((0, 0), (0, HEAD_PAD - NUM_CLASSES)))

    out_rows = max(8, -(-B // 8) * 8)                # sublane-aligned cls rows

    args = [patches_pad, params["patch_w"], base, bias_slab, wblk, fc2, head_w]
    out = pl.pallas_call(
        _vit_kernel,
        out_shape=jax.ShapeDtypeStruct((out_rows, HEAD_PAD), jnp.float32),
        in_specs=_vmem_specs(len(args)),
        out_specs=pl.BlockSpec(memory_space=pltpu.MemorySpace.VMEM),
    )(*args)

    # cls logits: first B rows, first NUM_CLASSES lanes (contiguous slice).
    return out[:B, :NUM_CLASSES]                     # (B, NUM_CLASSES)


if __name__ == "__main__":
    key = jax.random.PRNGKey(0)
    pkey, xkey = jax.random.split(key)
    params = init_params(pkey)
    x = jax.random.normal(xkey, (2, CIN, IMG, IMG), dtype=jnp.float32)
    logits = jax.jit(vit_forward)(params, x)
    jax.block_until_ready(logits)
    assert logits.shape == (2, NUM_CLASSES)
    assert logits.dtype == jnp.float32
    assert bool(jnp.all(jnp.isfinite(logits)))
    print("KERNEL_OK")
</pallas_src>

<mosaic_0001>
module attributes {stable_mosaic.version = 11 : i64} {
  func.func @_vit_kernel(%arg0: memref<16x768xf32, #tpu.memory_space<vmem>>, %arg1: memref<768x32xf32, #tpu.memory_space<vmem>>, %arg2: memref<16x32xf32, #tpu.memory_space<vmem>>, %arg3: memref<24x128xf32, #tpu.memory_space<vmem>>, %arg4: memref<64x256xf32, #tpu.memory_space<vmem>>, %arg5: memref<256x32xf32, #tpu.memory_space<vmem>>, %arg6: memref<32x128xf32, #tpu.memory_space<vmem>>, %arg7: memref<8x128xf32, #tpu.memory_space<vmem>>) attributes {dimension_semantics = [], scalar_prefetch = 0 : i64, scratch_operands = 0 : i64, tpu.core_type = #tpu.core_type<tc>} {
    %c0 = arith.constant 0 : index
    %c0_0 = arith.constant 0 : index
    %0 = vector.load %arg2[%c0, %c0_0] : memref<16x32xf32, #tpu.memory_space<vmem>>, vector<16x32xf32>
    %c0_1 = arith.constant 0 : index
    %c0_2 = arith.constant 0 : index
    %1 = vector.load %arg0[%c0_1, %c0_2] : memref<16x768xf32, #tpu.memory_space<vmem>>, vector<16x768xf32>
    %c0_3 = arith.constant 0 : index
    %c0_4 = arith.constant 0 : index
    %2 = vector.load %arg1[%c0_3, %c0_4] : memref<768x32xf32, #tpu.memory_space<vmem>>, vector<768x32xf32>
    %cst = arith.constant dense<0.000000e+00> : vector<16x32xf32>
    %3 = tpu.matmul %1, %2, %cst {dimension_numbers = #tpu.dot_dimension_numbers<[1], [0], [0], [1], [0, 0, 1, 1], [], []>} : vector<16x768xf32>, vector<768x32xf32>, vector<16x32xf32> -> vector<16x32xf32>
    %4 = arith.addf %0, %3 : vector<16x32xf32>
    %5 = tpu.iota {dimensions = array<i32: 1>} : vector<8x8xi32>
    %c5_i32 = arith.constant 5 : i32
    %6 = vector.broadcast %c5_i32 : i32 to vector<8x8xi32>
    %7 = arith.cmpi slt, %5, %6 : vector<8x8xi32>
    %cst_5 = arith.constant 0.000000e+00 : f32
    %cst_6 = arith.constant -1.000000e+30 : f32
    %8 = vector.broadcast %cst_5 : f32 to vector<8x8xf32>
    %9 = vector.broadcast %cst_6 : f32 to vector<8x8xf32>
    %10 = arith.select %7, %8, %9 : vector<8x8xi1>, vector<8x8xf32>
    %c3 = arith.constant 3 : index
    %c0_7 = arith.constant 0 : index
    %11 = vector.load %arg3[%c3, %c0_7] : memref<24x128xf32, #tpu.memory_space<vmem>>, vector<1x32xf32>
    %c4 = arith.constant 4 : index
    %c0_8 = arith.constant 0 : index
    %12 = vector.load %arg3[%c4, %c0_8] : memref<24x128xf32, #tpu.memory_space<vmem>>, vector<1x32xf32>
    %c5 = arith.constant 5 : index
    %c0_9 = arith.constant 0 : index
    %13 = vector.load %arg3[%c5, %c0_9] : memref<24x128xf32, #tpu.memory_space<vmem>>, vector<1x96xf32>
    %c6 = arith.constant 6 : index
    %c0_10 = arith.constant 0 : index
    %14 = vector.load %arg3[%c6, %c0_10] : memref<24x128xf32, #tpu.memory_space<vmem>>, vector<1x32xf32>
    %c7 = arith.constant 7 : index
    %c0_11 = arith.constant 0 : index
    %15 = vector.load %arg3[%c7, %c0_11] : memref<24x128xf32, #tpu.memory_space<vmem>>, vector<1x32xf32>
    %c8 = arith.constant 8 : index
    %c0_12 = arith.constant 0 : index
    %16 = vector.load %arg3[%c8, %c0_12] : memref<24x128xf32, #tpu.memory_space<vmem>>, vector<1x32xf32>
    %c9 = arith.constant 9 : index
    %c0_13 = arith.constant 0 : index
    %17 = vector.load %arg3[%c9, %c0_13] : memref<24x128xf32, #tpu.memory_space<vmem>>, vector<1x128xf32>
    %c10 = arith.constant 10 : index
    %c0_14 = arith.constant 0 : index
    %18 = vector.load %arg3[%c10, %c0_14] : memref<24x128xf32, #tpu.memory_space<vmem>>, vector<1x32xf32>
    %c0_15 = arith.constant 0 : index
    %c0_16 = arith.constant 0 : index
    %19 = vector.load %arg4[%c0_15, %c0_16] : memref<64x256xf32, #tpu.memory_space<vmem>>, vector<32x96xf32>
    %c0_17 = arith.constant 0 : index
    %c96 = arith.constant 96 : index
    %20 = vector.load %arg4[%c0_17, %c96] : memref<64x256xf32, #tpu.memory_space<vmem>>, vector<32x32xf32>
    %c0_18 = arith.constant 0 : index
    %c128 = arith.constant 128 : index
    %21 = vector.load %arg4[%c0_18, %c128] : memref<64x256xf32, #tpu.memory_space<vmem>>, vector<32x128xf32>
    %c0_19 = arith.constant 0 : index
    %c0_20 = arith.constant 0 : index
    %22 = vector.load %arg5[%c0_19, %c0_20] : memref<256x32xf32, #tpu.memory_space<vmem>>, vector<128x32xf32>
    %cst_21 = arith.constant dense<0.000000e+00> : vector<16xf32>
    %23 = vector.multi_reduction <add>, %4, %cst_21 [1] : vector<16x32xf32> to vector<16xf32>
    %24 = vector.shape_cast %23 : vector<16xf32> to vector<16x1xf32>
    %cst_22 = arith.constant 3.200000e+01 : f32
    %25 = vector.broadcast %cst_22 : f32 to vector<16x1xf32>
    %26 = arith.divf %24, %25 : vector<16x1xf32>
    %27 = vector.broadcast %26 : vector<16x1xf32> to vector<16x32xf32>
    %28 = arith.subf %4, %27 : vector<16x32xf32>
    %29 = arith.mulf %28, %28 : vector<16x32xf32>
    %cst_23 = arith.constant dense<0.000000e+00> : vector<16xf32>
    %30 = vector.multi_reduction <add>, %29, %cst_23 [1] : vector<16x32xf32> to vector<16xf32>
    %31 = vector.shape_cast %30 : vector<16xf32> to vector<16x1xf32>
    %cst_24 = arith.constant 3.200000e+01 : f32
    %32 = vector.broadcast %cst_24 : f32 to vector<16x1xf32>
    %33 = arith.divf %31, %32 : vector<16x1xf32>
    %cst_25 = arith.constant 9.99999997E-7 : f32
    %34 = vector.broadcast %cst_25 : f32 to vector<16x1xf32>
    %35 = arith.addf %33, %34 : vector<16x1xf32>
    %36 = math.rsqrt %35 : vector<16x1xf32>
    %37 = vector.broadcast %36 : vector<16x1xf32> to vector<16x32xf32>
    %38 = arith.mulf %28, %37 : vector<16x32xf32>
    %39 = vector.broadcast %11 : vector<1x32xf32> to vector<16x32xf32>
    %40 = arith.mulf %38, %39 : vector<16x32xf32>
    %41 = vector.broadcast %12 : vector<1x32xf32> to vector<16x32xf32>
    %42 = arith.addf %40, %41 : vector<16x32xf32>
    %cst_26 = arith.constant dense<0.000000e+00> : vector<16x96xf32>
    %43 = tpu.matmul %42, %19, %cst_26 {dimension_numbers = #tpu.dot_dimension_numbers<[1], [0], [0], [1], [0, 0, 1, 1], [], []>} : vector<16x32xf32>, vector<32x96xf32>, vector<16x96xf32> -> vector<16x96xf32>
    %44 = vector.broadcast %13 : vector<1x96xf32> to vector<16x96xf32>
    %45 = arith.addf %43, %44 : vector<16x96xf32>
    %46 = vector.extract_strided_slice %45 {offsets = [0, 0], sizes = [16, 8], strides = [1, 1]} : vector<16x96xf32> to vector<16x8xf32>
    %47 = vector.shape_cast %46 : vector<16x8xf32> to vector<2x8x8xf32>
    %48 = vector.extract_strided_slice %45 {offsets = [0, 32], sizes = [16, 8], strides = [1, 1]} : vector<16x96xf32> to vector<16x8xf32>
    %49 = vector.shape_cast %48 : vector<16x8xf32> to vector<2x8x8xf32>
    %50 = vector.extract_strided_slice %45 {offsets = [0, 64], sizes = [16, 8], strides = [1, 1]} : vector<16x96xf32> to vector<16x8xf32>
    %51 = vector.shape_cast %50 : vector<16x8xf32> to vector<2x8x8xf32>
    "tpu.trace_start"() <{level = 10 : i32, message = "bqd,bkd->bqk"}> : () -> ()
    %cst_27 = arith.constant dense<0.000000e+00> : vector<2x8x8xf32>
    %52 = tpu.matmul %47, %49, %cst_27 {dimension_numbers = #tpu.dot_dimension_numbers<[2], [2], [1], [1], [0, 0, 0, 1, 1, 1], [0], [0]>} : vector<2x8x8xf32>, vector<2x8x8xf32>, vector<2x8x8xf32> -> vector<2x8x8xf32>
    "tpu.trace_stop"() : () -> ()
    %cst_28 = arith.constant 0.353553385 : f32
    %53 = vector.broadcast %cst_28 : f32 to vector<2x8x8xf32>
    %54 = arith.mulf %52, %53 : vector<2x8x8xf32>
    %55 = vector.shape_cast %10 : vector<8x8xf32> to vector<1x8x8xf32>
    %56 = vector.broadcast %55 : vector<1x8x8xf32> to vector<2x8x8xf32>
    %57 = arith.addf %54, %56 : vector<2x8x8xf32>
    %cst_29 = arith.constant dense<0xFF800000> : vector<2x8xf32>
    %58 = vector.multi_reduction <maximumf>, %57, %cst_29 [2] : vector<2x8x8xf32> to vector<2x8xf32>
    %59 = vector.shape_cast %58 : vector<2x8xf32> to vector<2x8x1xf32>
    %60 = vector.broadcast %59 : vector<2x8x1xf32> to vector<2x8x8xf32>
    %61 = arith.subf %57, %60 : vector<2x8x8xf32>
    %62 = math.exp %61 : vector<2x8x8xf32>
    %cst_30 = arith.constant dense<0.000000e+00> : vector<2x8xf32>
    %63 = vector.multi_reduction <add>, %62, %cst_30 [2] : vector<2x8x8xf32> to vector<2x8xf32>
    %64 = vector.shape_cast %63 : vector<2x8xf32> to vector<2x8x1xf32>
    %65 = tpu.reciprocal %64 {approx = true} : vector<2x8x1xf32> -> vector<2x8x1xf32>
    %66 = vector.broadcast %65 : vector<2x8x1xf32> to vector<2x8x8xf32>
    %67 = arith.mulf %62, %66 : vector<2x8x8xf32>
    "tpu.trace_start"() <{level = 10 : i32, message = "bqk,bkd->bqd"}> : () -> ()
    %cst_31 = arith.constant dense<0.000000e+00> : vector<2x8x8xf32>
    %68 = tpu.matmul %67, %51, %cst_31 {dimension_numbers = #tpu.dot_dimension_numbers<[2], [1], [1], [2], [0, 0, 0, 1, 1, 2], [0], [0]>} : vector<2x8x8xf32>, vector<2x8x8xf32>, vector<2x8x8xf32> -> vector<2x8x8xf32>
    "tpu.trace_stop"() : () -> ()
    %69 = vector.extract_strided_slice %45 {offsets = [0, 8], sizes = [16, 8], strides = [1, 1]} : vector<16x96xf32> to vector<16x8xf32>
    %70 = vector.shape_cast %69 : vector<16x8xf32> to vector<2x8x8xf32>
    %71 = vector.extract_strided_slice %45 {offsets = [0, 40], sizes = [16, 8], strides = [1, 1]} : vector<16x96xf32> to vector<16x8xf32>
    %72 = vector.shape_cast %71 : vector<16x8xf32> to vector<2x8x8xf32>
    %73 = vector.extract_strided_slice %45 {offsets = [0, 72], sizes = [16, 8], strides = [1, 1]} : vector<16x96xf32> to vector<16x8xf32>
    %74 = vector.shape_cast %73 : vector<16x8xf32> to vector<2x8x8xf32>
    "tpu.trace_start"() <{level = 10 : i32, message = "bqd,bkd->bqk"}> : () -> ()
    %cst_32 = arith.constant dense<0.000000e+00> : vector<2x8x8xf32>
    %75 = tpu.matmul %70, %72, %cst_32 {dimension_numbers = #tpu.dot_dimension_numbers<[2], [2], [1], [1], [0, 0, 0, 1, 1, 1], [0], [0]>} : vector<2x8x8xf32>, vector<2x8x8xf32>, vector<2x8x8xf32> -> vector<2x8x8xf32>
    "tpu.trace_stop"() : () -> ()
    %cst_33 = arith.constant 0.353553385 : f32
    %76 = vector.broadcast %cst_33 : f32 to vector<2x8x8xf32>
    %77 = arith.mulf %75, %76 : vector<2x8x8xf32>
    %78 = vector.shape_cast %10 : vector<8x8xf32> to vector<1x8x8xf32>
    %79 = vector.broadcast %78 : vector<1x8x8xf32> to vector<2x8x8xf32>
    %80 = arith.addf %77, %79 : vector<2x8x8xf32>
    %cst_34 = arith.constant dense<0xFF800000> : vector<2x8xf32>
    %81 = vector.multi_reduction <maximumf>, %80, %cst_34 [2] : vector<2x8x8xf32> to vector<2x8xf32>
    %82 = vector.shape_cast %81 : vector<2x8xf32> to vector<2x8x1xf32>
    %83 = vector.broadcast %82 : vector<2x8x1xf32> to vector<2x8x8xf32>
    %84 = arith.subf %80, %83 : vector<2x8x8xf32>
    %85 = math.exp %84 : vector<2x8x8xf32>
    %cst_35 = arith.constant dense<0.000000e+00> : vector<2x8xf32>
    %86 = vector.multi_reduction <add>, %85, %cst_35 [2] : vector<2x8x8xf32> to vector<2x8xf32>
    %87 = vector.shape_cast %86 : vector<2x8xf32> to vector<2x8x1xf32>
    %88 = tpu.reciprocal %87 {approx = true} : vector<2x8x1xf32> -> vector<2x8x1xf32>
    %89 = vector.broadcast %88 : vector<2x8x1xf32> to vector<2x8x8xf32>
    %90 = arith.mulf %85, %89 : vector<2x8x8xf32>
    "tpu.trace_start"() <{level = 10 : i32, message = "bqk,bkd->bqd"}> : () -> ()
    %cst_36 = arith.constant dense<0.000000e+00> : vector<2x8x8xf32>
    %91 = tpu.matmul %90, %74, %cst_36 {dimension_numbers = #tpu.dot_dimension_numbers<[2], [1], [1], [2], [0, 0, 0, 1, 1, 2], [0], [0]>} : vector<2x8x8xf32>, vector<2x8x8xf32>, vector<2x8x8xf32> -> vector<2x8x8xf32>
    "tpu.trace_stop"() : () -> ()
    %92 = vector.extract_strided_slice %45 {offsets = [0, 16], sizes = [16, 8], strides = [1, 1]} : vector<16x96xf32> to vector<16x8xf32>
    %93 = vector.shape_cast %92 : vector<16x8xf32> to vector<2x8x8xf32>
    %94 = vector.extract_strided_slice %45 {offsets = [0, 48], sizes = [16, 8], strides = [1, 1]} : vector<16x96xf32> to vector<16x8xf32>
    %95 = vector.shape_cast %94 : vector<16x8xf32> to vector<2x8x8xf32>
    %96 = vector.extract_strided_slice %45 {offsets = [0, 80], sizes = [16, 8], strides = [1, 1]} : vector<16x96xf32> to vector<16x8xf32>
    %97 = vector.shape_cast %96 : vector<16x8xf32> to vector<2x8x8xf32>
    "tpu.trace_start"() <{level = 10 : i32, message = "bqd,bkd->bqk"}> : () -> ()
    %cst_37 = arith.constant dense<0.000000e+00> : vector<2x8x8xf32>
    %98 = tpu.matmul %93, %95, %cst_37 {dimension_numbers = #tpu.dot_dimension_numbers<[2], [2], [1], [1], [0, 0, 0, 1, 1, 1], [0], [0]>} : vector<2x8x8xf32>, vector<2x8x8xf32>, vector<2x8x8xf32> -> vector<2x8x8xf32>
    "tpu.trace_stop"() : () -> ()
    %cst_38 = arith.constant 0.353553385 : f32
    %99 = vector.broadcast %cst_38 : f32 to vector<2x8x8xf32>
    %100 = arith.mulf %98, %99 : vector<2x8x8xf32>
    %101 = vector.shape_cast %10 : vector<8x8xf32> to vector<1x8x8xf32>
    %102 = vector.broadcast %101 : vector<1x8x8xf32> to vector<2x8x8xf32>
    %103 = arith.addf %100, %102 : vector<2x8x8xf32>
    %cst_39 = arith.constant dense<0xFF800000> : vector<2x8xf32>
    %104 = vector.multi_reduction <maximumf>, %103, %cst_39 [2] : vector<2x8x8xf32> to vector<2x8xf32>
    %105 = vector.shape_cast %104 : vector<2x8xf32> to vector<2x8x1xf32>
    %106 = vector.broadcast %105 : vector<2x8x1xf32> to vector<2x8x8xf32>
    %107 = arith.subf %103, %106 : vector<2x8x8xf32>
    %108 = math.exp %107 : vector<2x8x8xf32>
    %cst_40 = arith.constant dense<0.000000e+00> : vector<2x8xf32>
    %109 = vector.multi_reduction <add>, %108, %cst_40 [2] : vector<2x8x8xf32> to vector<2x8xf32>
    %110 = vector.shape_cast %109 : vector<2x8xf32> to vector<2x8x1xf32>
    %111 = tpu.reciprocal %110 {approx = true} : vector<2x8x1xf32> -> vector<2x8x1xf32>
    %112 = vector.broadcast %111 : vector<2x8x1xf32> to vector<2x8x8xf32>
    %113 = arith.mulf %108, %112 : vector<2x8x8xf32>
    "tpu.trace_start"() <{level = 10 : i32, message = "bqk,bkd->bqd"}> : () -> ()
    %cst_41 = arith.constant dense<0.000000e+00> : vector<2x8x8xf32>
    %114 = tpu.matmul %113, %97, %cst_41 {dimension_numbers = #tpu.dot_dimension_numbers<[2], [1], [1], [2], [0, 0, 0, 1, 1, 2], [0], [0]>} : vector<2x8x8xf32>, vector<2x8x8xf32>, vector<2x8x8xf32> -> vector<2x8x8xf32>
    "tpu.trace_stop"() : () -> ()
    %115 = vector.extract_strided_slice %45 {offsets = [0, 24], sizes = [16, 8], strides = [1, 1]} : vector<16x96xf32> to vector<16x8xf32>
    %116 = vector.shape_cast %115 : vector<16x8xf32> to vector<2x8x8xf32>
    %117 = vector.extract_strided_slice %45 {offsets = [0, 56], sizes = [16, 8], strides = [1, 1]} : vector<16x96xf32> to vector<16x8xf32>
    %118 = vector.shape_cast %117 : vector<16x8xf32> to vector<2x8x8xf32>
    %119 = vector.extract_strided_slice %45 {offsets = [0, 88], sizes = [16, 8], strides = [1, 1]} : vector<16x96xf32> to vector<16x8xf32>
    %120 = vector.shape_cast %119 : vector<16x8xf32> to vector<2x8x8xf32>
    "tpu.trace_start"() <{level = 10 : i32, message = "bqd,bkd->bqk"}> : () -> ()
    %cst_42 = arith.constant dense<0.000000e+00> : vector<2x8x8xf32>
    %121 = tpu.matmul %116, %118, %cst_42 {dimension_numbers = #tpu.dot_dimension_numbers<[2], [2], [1], [1], [0, 0, 0, 1, 1, 1], [0], [0]>} : vector<2x8x8xf32>, vector<2x8x8xf32>, vector<2x8x8xf32> -> vector<2x8x8xf32>
    "tpu.trace_stop"() : () -> ()
    %cst_43 = arith.constant 0.353553385 : f32
    %122 = vector.broadcast %cst_43 : f32 to vector<2x8x8xf32>
    %123 = arith.mulf %121, %122 : vector<2x8x8xf32>
    %124 = vector.shape_cast %10 : vector<8x8xf32> to vector<1x8x8xf32>
    %125 = vector.broadcast %124 : vector<1x8x8xf32> to vector<2x8x8xf32>
    %126 = arith.addf %123, %125 : vector<2x8x8xf32>
    %cst_44 = arith.constant dense<0xFF800000> : vector<2x8xf32>
    %127 = vector.multi_reduction <maximumf>, %126, %cst_44 [2] : vector<2x8x8xf32> to vector<2x8xf32>
    %128 = vector.shape_cast %127 : vector<2x8xf32> to vector<2x8x1xf32>
    %129 = vector.broadcast %128 : vector<2x8x1xf32> to vector<2x8x8xf32>
    %130 = arith.subf %126, %129 : vector<2x8x8xf32>
    %131 = math.exp %130 : vector<2x8x8xf32>
    %cst_45 = arith.constant dense<0.000000e+00> : vector<2x8xf32>
    %132 = vector.multi_reduction <add>, %131, %cst_45 [2] : vector<2x8x8xf32> to vector<2x8xf32>
    %133 = vector.shape_cast %132 : vector<2x8xf32> to vector<2x8x1xf32>
    %134 = tpu.reciprocal %133 {approx = true} : vector<2x8x1xf32> -> vector<2x8x1xf32>
    %135 = vector.broadcast %134 : vector<2x8x1xf32> to vector<2x8x8xf32>
    %136 = arith.mulf %131, %135 : vector<2x8x8xf32>
    "tpu.trace_start"() <{level = 10 : i32, message = "bqk,bkd->bqd"}> : () -> ()
    %cst_46 = arith.constant dense<0.000000e+00> : vector<2x8x8xf32>
    %137 = tpu.matmul %136, %120, %cst_46 {dimension_numbers = #tpu.dot_dimension_numbers<[2], [1], [1], [2], [0, 0, 0, 1, 1, 2], [0], [0]>} : vector<2x8x8xf32>, vector<2x8x8xf32>, vector<2x8x8xf32> -> vector<2x8x8xf32>
    "tpu.trace_stop"() : () -> ()
    %138 = tpu.concatenate %68, %91, %114, %137 in 2 : vector<2x8x8xf32>, vector<2x8x8xf32>, vector<2x8x8xf32>, vector<2x8x8xf32> -> vector<2x8x32xf32>
    %139 = vector.shape_cast %138 : vector<2x8x32xf32> to vector<16x32xf32>
    %cst_47 = arith.constant dense<0.000000e+00> : vector<16x32xf32>
    %140 = tpu.matmul %139, %20, %cst_47 {dimension_numbers = #tpu.dot_dimension_numbers<[1], [0], [0], [1], [0, 0, 1, 1], [], []>} : vector<16x32xf32>, vector<32x32xf32>, vector<16x32xf32> -> vector<16x32xf32>
    %141 = arith.addf %4, %140 : vector<16x32xf32>
    %142 = vector.broadcast %14 : vector<1x32xf32> to vector<16x32xf32>
    %143 = arith.addf %141, %142 : vector<16x32xf32>
    %cst_48 = arith.constant dense<0.000000e+00> : vector<16xf32>
    %144 = vector.multi_reduction <add>, %143, %cst_48 [1] : vector<16x32xf32> to vector<16xf32>
    %145 = vector.shape_cast %144 : vector<16xf32> to vector<16x1xf32>
    %cst_49 = arith.constant 3.200000e+01 : f32
    %146 = vector.broadcast %cst_49 : f32 to vector<16x1xf32>
    %147 = arith.divf %145, %146 : vector<16x1xf32>
    %148 = vector.broadcast %147 : vector<16x1xf32> to vector<16x32xf32>
    %149 = arith.subf %143, %148 : vector<16x32xf32>
    %150 = arith.mulf %149, %149 : vector<16x32xf32>
    %cst_50 = arith.constant dense<0.000000e+00> : vector<16xf32>
    %151 = vector.multi_reduction <add>, %150, %cst_50 [1] : vector<16x32xf32> to vector<16xf32>
    %152 = vector.shape_cast %151 : vector<16xf32> to vector<16x1xf32>
    %cst_51 = arith.constant 3.200000e+01 : f32
    %153 = vector.broadcast %cst_51 : f32 to vector<16x1xf32>
    %154 = arith.divf %152, %153 : vector<16x1xf32>
    %cst_52 = arith.constant 9.99999997E-7 : f32
    %155 = vector.broadcast %cst_52 : f32 to vector<16x1xf32>
    %156 = arith.addf %154, %155 : vector<16x1xf32>
    %157 = math.rsqrt %156 : vector<16x1xf32>
    %158 = vector.broadcast %157 : vector<16x1xf32> to vector<16x32xf32>
    %159 = arith.mulf %149, %158 : vector<16x32xf32>
    %160 = vector.broadcast %15 : vector<1x32xf32> to vector<16x32xf32>
    %161 = arith.mulf %159, %160 : vector<16x32xf32>
    %162 = vector.broadcast %16 : vector<1x32xf32> to vector<16x32xf32>
    %163 = arith.addf %161, %162 : vector<16x32xf32>
    %cst_53 = arith.constant dense<0.000000e+00> : vector<16x128xf32>
    %164 = tpu.matmul %163, %21, %cst_53 {dimension_numbers = #tpu.dot_dimension_numbers<[1], [0], [0], [1], [0, 0, 1, 1], [], []>} : vector<16x32xf32>, vector<32x128xf32>, vector<16x128xf32> -> vector<16x128xf32>
    %165 = vector.broadcast %17 : vector<1x128xf32> to vector<16x128xf32>
    %166 = arith.addf %164, %165 : vector<16x128xf32>
    %cst_54 = arith.constant 5.000000e-01 : f32
    %167 = vector.broadcast %cst_54 : f32 to vector<16x128xf32>
    %168 = arith.mulf %167, %166 : vector<16x128xf32>
    %cst_55 = arith.constant 0.707106769 : f32
    %169 = vector.broadcast %cst_55 : f32 to vector<16x128xf32>
    %170 = arith.mulf %166, %169 : vector<16x128xf32>
    %171 = math.erf %170 : vector<16x128xf32>
    %cst_56 = arith.constant 1.000000e+00 : f32
    %172 = vector.broadcast %cst_56 : f32 to vector<16x128xf32>
    %173 = arith.addf %172, %171 : vector<16x128xf32>
    %174 = arith.mulf %168, %173 : vector<16x128xf32>
    %cst_57 = arith.constant dense<0.000000e+00> : vector<16x32xf32>
    %175 = tpu.matmul %174, %22, %cst_57 {dimension_numbers = #tpu.dot_dimension_numbers<[1], [0], [0], [1], [0, 0, 1, 1], [], []>} : vector<16x128xf32>, vector<128x32xf32>, vector<16x32xf32> -> vector<16x32xf32>
    %176 = arith.addf %143, %175 : vector<16x32xf32>
    %177 = vector.broadcast %18 : vector<1x32xf32> to vector<16x32xf32>
    %178 = arith.addf %176, %177 : vector<16x32xf32>
    %c11 = arith.constant 11 : index
    %c0_58 = arith.constant 0 : index
    %179 = vector.load %arg3[%c11, %c0_58] : memref<24x128xf32, #tpu.memory_space<vmem>>, vector<1x32xf32>
    %c12 = arith.constant 12 : index
    %c0_59 = arith.constant 0 : index
    %180 = vector.load %arg3[%c12, %c0_59] : memref<24x128xf32, #tpu.memory_space<vmem>>, vector<1x32xf32>
    %c13 = arith.constant 13 : index
    %c0_60 = arith.constant 0 : index
    %181 = vector.load %arg3[%c13, %c0_60] : memref<24x128xf32, #tpu.memory_space<vmem>>, vector<1x96xf32>
    %c14 = arith.constant 14 : index
    %c0_61 = arith.constant 0 : index
    %182 = vector.load %arg3[%c14, %c0_61] : memref<24x128xf32, #tpu.memory_space<vmem>>, vector<1x32xf32>
    %c15 = arith.constant 15 : index
    %c0_62 = arith.constant 0 : index
    %183 = vector.load %arg3[%c15, %c0_62] : memref<24x128xf32, #tpu.memory_space<vmem>>, vector<1x32xf32>
    %c16 = arith.constant 16 : index
    %c0_63 = arith.constant 0 : index
    %184 = vector.load %arg3[%c16, %c0_63] : memref<24x128xf32, #tpu.memory_space<vmem>>, vector<1x32xf32>
    %c17 = arith.constant 17 : index
    %c0_64 = arith.constant 0 : index
    %185 = vector.load %arg3[%c17, %c0_64] : memref<24x128xf32, #tpu.memory_space<vmem>>, vector<1x128xf32>
    %c18 = arith.constant 18 : index
    %c0_65 = arith.constant 0 : index
    %186 = vector.load %arg3[%c18, %c0_65] : memref<24x128xf32, #tpu.memory_space<vmem>>, vector<1x32xf32>
    %c32 = arith.constant 32 : index
    %c0_66 = arith.constant 0 : index
    %187 = vector.load %arg4[%c32, %c0_66] : memref<64x256xf32, #tpu.memory_space<vmem>>, vector<32x96xf32>
    %c32_67 = arith.constant 32 : index
    %c96_68 = arith.constant 96 : index
    %188 = vector.load %arg4[%c32_67, %c96_68] : memref<64x256xf32, #tpu.memory_space<vmem>>, vector<32x32xf32>
    %c32_69 = arith.constant 32 : index
    %c128_70 = arith.constant 128 : index
    %189 = vector.load %arg4[%c32_69, %c128_70] : memref<64x256xf32, #tpu.memory_space<vmem>>, vector<32x128xf32>
    %c128_71 = arith.constant 128 : index
    %c0_72 = arith.constant 0 : index
    %190 = vector.load %arg5[%c128_71, %c0_72] : memref<256x32xf32, #tpu.memory_space<vmem>>, vector<128x32xf32>
    %cst_73 = arith.constant dense<0.000000e+00> : vector<16xf32>
    %191 = vector.multi_reduction <add>, %178, %cst_73 [1] : vector<16x32xf32> to vector<16xf32>
    %192 = vector.shape_cast %191 : vector<16xf32> to vector<16x1xf32>
    %cst_74 = arith.constant 3.200000e+01 : f32
    %193 = vector.broadcast %cst_74 : f32 to vector<16x1xf32>
    %194 = arith.divf %192, %193 : vector<16x1xf32>
    %195 = vector.broadcast %194 : vector<16x1xf32> to vector<16x32xf32>
    %196 = arith.subf %178, %195 : vector<16x32xf32>
    %197 = arith.mulf %196, %196 : vector<16x32xf32>
    %cst_75 = arith.constant dense<0.000000e+00> : vector<16xf32>
    %198 = vector.multi_reduction <add>, %197, %cst_75 [1] : vector<16x32xf32> to vector<16xf32>
    %199 = vector.shape_cast %198 : vector<16xf32> to vector<16x1xf32>
    %cst_76 = arith.constant 3.200000e+01 : f32
    %200 = vector.broadcast %cst_76 : f32 to vector<16x1xf32>
    %201 = arith.divf %199, %200 : vector<16x1xf32>
    %cst_77 = arith.constant 9.99999997E-7 : f32
    %202 = vector.broadcast %cst_77 : f32 to vector<16x1xf32>
    %203 = arith.addf %201, %202 : vector<16x1xf32>
    %204 = math.rsqrt %203 : vector<16x1xf32>
    %205 = vector.broadcast %204 : vector<16x1xf32> to vector<16x32xf32>
    %206 = arith.mulf %196, %205 : vector<16x32xf32>
    %207 = vector.broadcast %179 : vector<1x32xf32> to vector<16x32xf32>
    %208 = arith.mulf %206, %207 : vector<16x32xf32>
    %209 = vector.broadcast %180 : vector<1x32xf32> to vector<16x32xf32>
    %210 = arith.addf %208, %209 : vector<16x32xf32>
    %cst_78 = arith.constant dense<0.000000e+00> : vector<16x96xf32>
    %211 = tpu.matmul %210, %187, %cst_78 {dimension_numbers = #tpu.dot_dimension_numbers<[1], [0], [0], [1], [0, 0, 1, 1], [], []>} : vector<16x32xf32>, vector<32x96xf32>, vector<16x96xf32> -> vector<16x96xf32>
    %212 = vector.broadcast %181 : vector<1x96xf32> to vector<16x96xf32>
    %213 = arith.addf %211, %212 : vector<16x96xf32>
    %214 = vector.extract_strided_slice %213 {offsets = [0, 0], sizes = [16, 8], strides = [1, 1]} : vector<16x96xf32> to vector<16x8xf32>
    %215 = vector.shape_cast %214 : vector<16x8xf32> to vector<2x8x8xf32>
    %216 = vector.extract_strided_slice %213 {offsets = [0, 32], sizes = [16, 8], strides = [1, 1]} : vector<16x96xf32> to vector<16x8xf32>
    %217 = vector.shape_cast %216 : vector<16x8xf32> to vector<2x8x8xf32>
    %218 = vector.extract_strided_slice %213 {offsets = [0, 64], sizes = [16, 8], strides = [1, 1]} : vector<16x96xf32> to vector<16x8xf32>
    %219 = vector.shape_cast %218 : vector<16x8xf32> to vector<2x8x8xf32>
    "tpu.trace_start"() <{level = 10 : i32, message = "bqd,bkd->bqk"}> : () -> ()
    %cst_79 = arith.constant dense<0.000000e+00> : vector<2x8x8xf32>
    %220 = tpu.matmul %215, %217, %cst_79 {dimension_numbers = #tpu.dot_dimension_numbers<[2], [2], [1], [1], [0, 0, 0, 1, 1, 1], [0], [0]>} : vector<2x8x8xf32>, vector<2x8x8xf32>, vector<2x8x8xf32> -> vector<2x8x8xf32>
    "tpu.trace_stop"() : () -> ()
    %cst_80 = arith.constant 0.353553385 : f32
    %221 = vector.broadcast %cst_80 : f32 to vector<2x8x8xf32>
    %222 = arith.mulf %220, %221 : vector<2x8x8xf32>
    %223 = vector.shape_cast %10 : vector<8x8xf32> to vector<1x8x8xf32>
    %224 = vector.broadcast %223 : vector<1x8x8xf32> to vector<2x8x8xf32>
    %225 = arith.addf %222, %224 : vector<2x8x8xf32>
    %cst_81 = arith.constant dense<0xFF800000> : vector<2x8xf32>
    %226 = vector.multi_reduction <maximumf>, %225, %cst_81 [2] : vector<2x8x8xf32> to vector<2x8xf32>
    %227 = vector.shape_cast %226 : vector<2x8xf32> to vector<2x8x1xf32>
    %228 = vector.broadcast %227 : vector<2x8x1xf32> to vector<2x8x8xf32>
    %229 = arith.subf %225, %228 : vector<2x8x8xf32>
    %230 = math.exp %229 : vector<2x8x8xf32>
    %cst_82 = arith.constant dense<0.000000e+00> : vector<2x8xf32>
    %231 = vector.multi_reduction <add>, %230, %cst_82 [2] : vector<2x8x8xf32> to vector<2x8xf32>
    %232 = vector.shape_cast %231 : vector<2x8xf32> to vector<2x8x1xf32>
    %233 = tpu.reciprocal %232 {approx = true} : vector<2x8x1xf32> -> vector<2x8x1xf32>
    %234 = vector.broadcast %233 : vector<2x8x1xf32> to vector<2x8x8xf32>
    %235 = arith.mulf %230, %234 : vector<2x8x8xf32>
    "tpu.trace_start"() <{level = 10 : i32, message = "bqk,bkd->bqd"}> : () -> ()
    %cst_83 = arith.constant dense<0.000000e+00> : vector<2x8x8xf32>
    %236 = tpu.matmul %235, %219, %cst_83 {dimension_numbers = #tpu.dot_dimension_numbers<[2], [1], [1], [2], [0, 0, 0, 1, 1, 2], [0], [0]>} : vector<2x8x8xf32>, vector<2x8x8xf32>, vector<2x8x8xf32> -> vector<2x8x8xf32>
    "tpu.trace_stop"() : () -> ()
    %237 = vector.extract_strided_slice %213 {offsets = [0, 8], sizes = [16, 8], strides = [1, 1]} : vector<16x96xf32> to vector<16x8xf32>
    %238 = vector.shape_cast %237 : vector<16x8xf32> to vector<2x8x8xf32>
    %239 = vector.extract_strided_slice %213 {offsets = [0, 40], sizes = [16, 8], strides = [1, 1]} : vector<16x96xf32> to vector<16x8xf32>
    %240 = vector.shape_cast %239 : vector<16x8xf32> to vector<2x8x8xf32>
    %241 = vector.extract_strided_slice %213 {offsets = [0, 72], sizes = [16, 8], strides = [1, 1]} : vector<16x96xf32> to vector<16x8xf32>
    %242 = vector.shape_cast %241 : vector<16x8xf32> to vector<2x8x8xf32>
    "tpu.trace_start"() <{level = 10 : i32, message = "bqd,bkd->bqk"}> : () -> ()
    %cst_84 = arith.constant dense<0.000000e+00> : vector<2x8x8xf32>
    %243 = tpu.matmul %238, %240, %cst_84 {dimension_numbers = #tpu.dot_dimension_numbers<[2], [2], [1], [1], [0, 0, 0, 1, 1, 1], [0], [0]>} : vector<2x8x8xf32>, vector<2x8x8xf32>, vector<2x8x8xf32> -> vector<2x8x8xf32>
    "tpu.trace_stop"() : () -> ()
    %cst_85 = arith.constant 0.353553385 : f32
    %244 = vector.broadcast %cst_85 : f32 to vector<2x8x8xf32>
    %245 = arith.mulf %243, %244 : vector<2x8x8xf32>
    %246 = vector.shape_cast %10 : vector<8x8xf32> to vector<1x8x8xf32>
    %247 = vector.broadcast %246 : vector<1x8x8xf32> to vector<2x8x8xf32>
    %248 = arith.addf %245, %247 : vector<2x8x8xf32>
    %cst_86 = arith.constant dense<0xFF800000> : vector<2x8xf32>
    %249 = vector.multi_reduction <maximumf>, %248, %cst_86 [2] : vector<2x8x8xf32> to vector<2x8xf32>
    %250 = vector.shape_cast %249 : vector<2x8xf32> to vector<2x8x1xf32>
    %251 = vector.broadcast %250 : vector<2x8x1xf32> to vector<2x8x8xf32>
    %252 = arith.subf %248, %251 : vector<2x8x8xf32>
    %253 = math.exp %252 : vector<2x8x8xf32>
    %cst_87 = arith.constant dense<0.000000e+00> : vector<2x8xf32>
    %254 = vector.multi_reduction <add>, %253, %cst_87 [2] : vector<2x8x8xf32> to vector<2x8xf32>
    %255 = vector.shape_cast %254 : vector<2x8xf32> to vector<2x8x1xf32>
    %256 = tpu.reciprocal %255 {approx = true} : vector<2x8x1xf32> -> vector<2x8x1xf32>
    %257 = vector.broadcast %256 : vector<2x8x1xf32> to vector<2x8x8xf32>
    %258 = arith.mulf %253, %257 : vector<2x8x8xf32>
    "tpu.trace_start"() <{level = 10 : i32, message = "bqk,bkd->bqd"}> : () -> ()
    %cst_88 = arith.constant dense<0.000000e+00> : vector<2x8x8xf32>
    %259 = tpu.matmul %258, %242, %cst_88 {dimension_numbers = #tpu.dot_dimension_numbers<[2], [1], [1], [2], [0, 0, 0, 1, 1, 2], [0], [0]>} : vector<2x8x8xf32>, vector<2x8x8xf32>, vector<2x8x8xf32> -> vector<2x8x8xf32>
    "tpu.trace_stop"() : () -> ()
    %260 = vector.extract_strided_slice %213 {offsets = [0, 16], sizes = [16, 8], strides = [1, 1]} : vector<16x96xf32> to vector<16x8xf32>
    %261 = vector.shape_cast %260 : vector<16x8xf32> to vector<2x8x8xf32>
    %262 = vector.extract_strided_slice %213 {offsets = [0, 48], sizes = [16, 8], strides = [1, 1]} : vector<16x96xf32> to vector<16x8xf32>
    %263 = vector.shape_cast %262 : vector<16x8xf32> to vector<2x8x8xf32>
    %264 = vector.extract_strided_slice %213 {offsets = [0, 80], sizes = [16, 8], strides = [1, 1]} : vector<16x96xf32> to vector<16x8xf32>
    %265 = vector.shape_cast %264 : vector<16x8xf32> to vector<2x8x8xf32>
    "tpu.trace_start"() <{level = 10 : i32, message = "bqd,bkd->bqk"}> : () -> ()
    %cst_89 = arith.constant dense<0.000000e+00> : vector<2x8x8xf32>
    %266 = tpu.matmul %261, %263, %cst_89 {dimension_numbers = #tpu.dot_dimension_numbers<[2], [2], [1], [1], [0, 0, 0, 1, 1, 1], [0], [0]>} : vector<2x8x8xf32>, vector<2x8x8xf32>, vector<2x8x8xf32> -> vector<2x8x8xf32>
    "tpu.trace_stop"() : () -> ()
    %cst_90 = arith.constant 0.353553385 : f32
    %267 = vector.broadcast %cst_90 : f32 to vector<2x8x8xf32>
    %268 = arith.mulf %266, %267 : vector<2x8x8xf32>
    %269 = vector.shape_cast %10 : vector<8x8xf32> to vector<1x8x8xf32>
    %270 = vector.broadcast %269 : vector<1x8x8xf32> to vector<2x8x8xf32>
    %271 = arith.addf %268, %270 : vector<2x8x8xf32>
    %cst_91 = arith.constant dense<0xFF800000> : vector<2x8xf32>
    %272 = vector.multi_reduction <maximumf>, %271, %cst_91 [2] : vector<2x8x8xf32> to vector<2x8xf32>
    %273 = vector.shape_cast %272 : vector<2x8xf32> to vector<2x8x1xf32>
    %274 = vector.broadcast %273 : vector<2x8x1xf32> to vector<2x8x8xf32>
    %275 = arith.subf %271, %274 : vector<2x8x8xf32>
    %276 = math.exp %275 : vector<2x8x8xf32>
    %cst_92 = arith.constant dense<0.000000e+00> : vector<2x8xf32>
    %277 = vector.multi_reduction <add>, %276, %cst_92 [2] : vector<2x8x8xf32> to vector<2x8xf32>
    %278 = vector.shape_cast %277 : vector<2x8xf32> to vector<2x8x1xf32>
    %279 = tpu.reciprocal %278 {approx = true} : vector<2x8x1xf32> -> vector<2x8x1xf32>
    %280 = vector.broadcast %279 : vector<2x8x1xf32> to vector<2x8x8xf32>
    %281 = arith.mulf %276, %280 : vector<2x8x8xf32>
    "tpu.trace_start"() <{level = 10 : i32, message = "bqk,bkd->bqd"}> : () -> ()
    %cst_93 = arith.constant dense<0.000000e+00> : vector<2x8x8xf32>
    %282 = tpu.matmul %281, %265, %cst_93 {dimension_numbers = #tpu.dot_dimension_numbers<[2], [1], [1], [2], [0, 0, 0, 1, 1, 2], [0], [0]>} : vector<2x8x8xf32>, vector<2x8x8xf32>, vector<2x8x8xf32> -> vector<2x8x8xf32>
    "tpu.trace_stop"() : () -> ()
    %283 = vector.extract_strided_slice %213 {offsets = [0, 24], sizes = [16, 8], strides = [1, 1]} : vector<16x96xf32> to vector<16x8xf32>
    %284 = vector.shape_cast %283 : vector<16x8xf32> to vector<2x8x8xf32>
    %285 = vector.extract_strided_slice %213 {offsets = [0, 56], sizes = [16, 8], strides = [1, 1]} : vector<16x96xf32> to vector<16x8xf32>
    %286 = vector.shape_cast %285 : vector<16x8xf32> to vector<2x8x8xf32>
    %287 = vector.extract_strided_slice %213 {offsets = [0, 88], sizes = [16, 8], strides = [1, 1]} : vector<16x96xf32> to vector<16x8xf32>
    %288 = vector.shape_cast %287 : vector<16x8xf32> to vector<2x8x8xf32>
    "tpu.trace_start"() <{level = 10 : i32, message = "bqd,bkd->bqk"}> : () -> ()
    %cst_94 = arith.constant dense<0.000000e+00> : vector<2x8x8xf32>
    %289 = tpu.matmul %284, %286, %cst_94 {dimension_numbers = #tpu.dot_dimension_numbers<[2], [2], [1], [1], [0, 0, 0, 1, 1, 1], [0], [0]>} : vector<2x8x8xf32>, vector<2x8x8xf32>, vector<2x8x8xf32> -> vector<2x8x8xf32>
    "tpu.trace_stop"() : () -> ()
    %cst_95 = arith.constant 0.353553385 : f32
    %290 = vector.broadcast %cst_95 : f32 to vector<2x8x8xf32>
    %291 = arith.mulf %289, %290 : vector<2x8x8xf32>
    %292 = vector.shape_cast %10 : vector<8x8xf32> to vector<1x8x8xf32>
    %293 = vector.broadcast %292 : vector<1x8x8xf32> to vector<2x8x8xf32>
    %294 = arith.addf %291, %293 : vector<2x8x8xf32>
    %cst_96 = arith.constant dense<0xFF800000> : vector<2x8xf32>
    %295 = vector.multi_reduction <maximumf>, %294, %cst_96 [2] : vector<2x8x8xf32> to vector<2x8xf32>
    %296 = vector.shape_cast %295 : vector<2x8xf32> to vector<2x8x1xf32>
    %297 = vector.broadcast %296 : vector<2x8x1xf32> to vector<2x8x8xf32>
    %298 = arith.subf %294, %297 : vector<2x8x8xf32>
    %299 = math.exp %298 : vector<2x8x8xf32>
    %cst_97 = arith.constant dense<0.000000e+00> : vector<2x8xf32>
    %300 = vector.multi_reduction <add>, %299, %cst_97 [2] : vector<2x8x8xf32> to vector<2x8xf32>
    %301 = vector.shape_cast %300 : vector<2x8xf32> to vector<2x8x1xf32>
    %302 = tpu.reciprocal %301 {approx = true} : vector<2x8x1xf32> -> vector<2x8x1xf32>
    %303 = vector.broadcast %302 : vector<2x8x1xf32> to vector<2x8x8xf32>
    %304 = arith.mulf %299, %303 : vector<2x8x8xf32>
    "tpu.trace_start"() <{level = 10 : i32, message = "bqk,bkd->bqd"}> : () -> ()
    %cst_98 = arith.constant dense<0.000000e+00> : vector<2x8x8xf32>
    %305 = tpu.matmul %304, %288, %cst_98 {dimension_numbers = #tpu.dot_dimension_numbers<[2], [1], [1], [2], [0, 0, 0, 1, 1, 2], [0], [0]>} : vector<2x8x8xf32>, vector<2x8x8xf32>, vector<2x8x8xf32> -> vector<2x8x8xf32>
    "tpu.trace_stop"() : () -> ()
    %306 = tpu.concatenate %236, %259, %282, %305 in 2 : vector<2x8x8xf32>, vector<2x8x8xf32>, vector<2x8x8xf32>, vector<2x8x8xf32> -> vector<2x8x32xf32>
    %307 = vector.shape_cast %306 : vector<2x8x32xf32> to vector<16x32xf32>
    %cst_99 = arith.constant dense<0.000000e+00> : vector<16x32xf32>
    %308 = tpu.matmul %307, %188, %cst_99 {dimension_numbers = #tpu.dot_dimension_numbers<[1], [0], [0], [1], [0, 0, 1, 1], [], []>} : vector<16x32xf32>, vector<32x32xf32>, vector<16x32xf32> -> vector<16x32xf32>
    %309 = arith.addf %178, %308 : vector<16x32xf32>
    %310 = vector.broadcast %182 : vector<1x32xf32> to vector<16x32xf32>
    %311 = arith.addf %309, %310 : vector<16x32xf32>
    %cst_100 = arith.constant dense<0.000000e+00> : vector<16xf32>
    %312 = vector.multi_reduction <add>, %311, %cst_100 [1] : vector<16x32xf32> to vector<16xf32>
    %313 = vector.shape_cast %312 : vector<16xf32> to vector<16x1xf32>
    %cst_101 = arith.constant 3.200000e+01 : f32
    %314 = vector.broadcast %cst_101 : f32 to vector<16x1xf32>
    %315 = arith.divf %313, %314 : vector<16x1xf32>
    %316 = vector.broadcast %315 : vector<16x1xf32> to vector<16x32xf32>
    %317 = arith.subf %311, %316 : vector<16x32xf32>
    %318 = arith.mulf %317, %317 : vector<16x32xf32>
    %cst_102 = arith.constant dense<0.000000e+00> : vector<16xf32>
    %319 = vector.multi_reduction <add>, %318, %cst_102 [1] : vector<16x32xf32> to vector<16xf32>
    %320 = vector.shape_cast %319 : vector<16xf32> to vector<16x1xf32>
    %cst_103 = arith.constant 3.200000e+01 : f32
    %321 = vector.broadcast %cst_103 : f32 to vector<16x1xf32>
    %322 = arith.divf %320, %321 : vector<16x1xf32>
    %cst_104 = arith.constant 9.99999997E-7 : f32
    %323 = vector.broadcast %cst_104 : f32 to vector<16x1xf32>
    %324 = arith.addf %322, %323 : vector<16x1xf32>
    %325 = math.rsqrt %324 : vector<16x1xf32>
    %326 = vector.broadcast %325 : vector<16x1xf32> to vector<16x32xf32>
    %327 = arith.mulf %317, %326 : vector<16x32xf32>
    %328 = vector.broadcast %183 : vector<1x32xf32> to vector<16x32xf32>
    %329 = arith.mulf %327, %328 : vector<16x32xf32>
    %330 = vector.broadcast %184 : vector<1x32xf32> to vector<16x32xf32>
    %331 = arith.addf %329, %330 : vector<16x32xf32>
    %cst_105 = arith.constant dense<0.000000e+00> : vector<16x128xf32>
    %332 = tpu.matmul %331, %189, %cst_105 {dimension_numbers = #tpu.dot_dimension_numbers<[1], [0], [0], [1], [0, 0, 1, 1], [], []>} : vector<16x32xf32>, vector<32x128xf32>, vector<16x128xf32> -> vector<16x128xf32>
    %333 = vector.broadcast %185 : vector<1x128xf32> to vector<16x128xf32>
    %334 = arith.addf %332, %333 : vector<16x128xf32>
    %cst_106 = arith.constant 5.000000e-01 : f32
    %335 = vector.broadcast %cst_106 : f32 to vector<16x128xf32>
    %336 = arith.mulf %335, %334 : vector<16x128xf32>
    %cst_107 = arith.constant 0.707106769 : f32
    %337 = vector.broadcast %cst_107 : f32 to vector<16x128xf32>
    %338 = arith.mulf %334, %337 : vector<16x128xf32>
    %339 = math.erf %338 : vector<16x128xf32>
    %cst_108 = arith.constant 1.000000e+00 : f32
    %340 = vector.broadcast %cst_108 : f32 to vector<16x128xf32>
    %341 = arith.addf %340, %339 : vector<16x128xf32>
    %342 = arith.mulf %336, %341 : vector<16x128xf32>
    %cst_109 = arith.constant dense<0.000000e+00> : vector<16x32xf32>
    %343 = tpu.matmul %342, %190, %cst_109 {dimension_numbers = #tpu.dot_dimension_numbers<[1], [0], [0], [1], [0, 0, 1, 1], [], []>} : vector<16x128xf32>, vector<128x32xf32>, vector<16x32xf32> -> vector<16x32xf32>
    %344 = arith.addf %311, %343 : vector<16x32xf32>
    %345 = vector.broadcast %186 : vector<1x32xf32> to vector<16x32xf32>
    %346 = arith.addf %344, %345 : vector<16x32xf32>
    %347 = tpu.iota {dimensions = array<i32: 0>} : vector<8x16xi32>
    %348 = tpu.iota {dimensions = array<i32: 1>} : vector<8x16xi32>
    %c8_i32 = arith.constant 8 : i32
    %349 = vector.broadcast %c8_i32 : i32 to vector<8x16xi32>
    %350 = arith.muli %347, %349 : vector<8x16xi32>
    %351 = arith.cmpi eq, %348, %350 : vector<8x16xi32>
    %352 = arith.extui %351 : vector<8x16xi1> to vector<8x16xi32>
    %353 = arith.sitofp %352 : vector<8x16xi32> to vector<8x16xf32>
    %cst_110 = arith.constant dense<0.000000e+00> : vector<8x32xf32>
    %354 = tpu.matmul %353, %346, %cst_110 {dimension_numbers = #tpu.dot_dimension_numbers<[1], [0], [0], [1], [0, 0, 1, 1], [], []>} : vector<8x16xf32>, vector<16x32xf32>, vector<8x32xf32> -> vector<8x32xf32>
    %c0_111 = arith.constant 0 : index
    %c0_112 = arith.constant 0 : index
    %355 = vector.load %arg3[%c0_111, %c0_112] : memref<24x128xf32, #tpu.memory_space<vmem>>, vector<1x32xf32>
    %c1 = arith.constant 1 : index
    %c0_113 = arith.constant 0 : index
    %356 = vector.load %arg3[%c1, %c0_113] : memref<24x128xf32, #tpu.memory_space<vmem>>, vector<1x32xf32>
    %cst_114 = arith.constant dense<0.000000e+00> : vector<8xf32>
    %357 = vector.multi_reduction <add>, %354, %cst_114 [1] : vector<8x32xf32> to vector<8xf32>
    %358 = vector.shape_cast %357 : vector<8xf32> to vector<8x1xf32>
    %cst_115 = arith.constant 3.200000e+01 : f32
    %359 = vector.broadcast %cst_115 : f32 to vector<8x1xf32>
    %360 = arith.divf %358, %359 : vector<8x1xf32>
    %361 = vector.broadcast %360 : vector<8x1xf32> to vector<8x32xf32>
    %362 = arith.subf %354, %361 : vector<8x32xf32>
    %363 = arith.mulf %362, %362 : vector<8x32xf32>
    %cst_116 = arith.constant dense<0.000000e+00> : vector<8xf32>
    %364 = vector.multi_reduction <add>, %363, %cst_116 [1] : vector<8x32xf32> to vector<8xf32>
    %365 = vector.shape_cast %364 : vector<8xf32> to vector<8x1xf32>
    %cst_117 = arith.constant 3.200000e+01 : f32
    %366 = vector.broadcast %cst_117 : f32 to vector<8x1xf32>
    %367 = arith.divf %365, %366 : vector<8x1xf32>
    %cst_118 = arith.constant 9.99999997E-7 : f32
    %368 = vector.broadcast %cst_118 : f32 to vector<8x1xf32>
    %369 = arith.addf %367, %368 : vector<8x1xf32>
    %370 = math.rsqrt %369 : vector<8x1xf32>
    %371 = vector.broadcast %370 : vector<8x1xf32> to vector<8x32xf32>
    %372 = arith.mulf %362, %371 : vector<8x32xf32>
    %373 = vector.broadcast %355 : vector<1x32xf32> to vector<8x32xf32>
    %374 = arith.mulf %372, %373 : vector<8x32xf32>
    %375 = vector.broadcast %356 : vector<1x32xf32> to vector<8x32xf32>
    %376 = arith.addf %374, %375 : vector<8x32xf32>
    %c0_119 = arith.constant 0 : index
    %c0_120 = arith.constant 0 : index
    %377 = vector.load %arg6[%c0_119, %c0_120] : memref<32x128xf32, #tpu.memory_space<vmem>>, vector<32x128xf32>
    %cst_121 = arith.constant dense<0.000000e+00> : vector<8x128xf32>
    %378 = tpu.matmul %376, %377, %cst_121 {dimension_numbers = #tpu.dot_dimension_numbers<[1], [0], [0], [1], [0, 0, 1, 1], [], []>} : vector<8x32xf32>, vector<32x128xf32>, vector<8x128xf32> -> vector<8x128xf32>
    %c2 = arith.constant 2 : index
    %c0_122 = arith.constant 0 : index
    %379 = vector.load %arg3[%c2, %c0_122] : memref<24x128xf32, #tpu.memory_space<vmem>>, vector<1x128xf32>
    %380 = vector.broadcast %379 : vector<1x128xf32> to vector<8x128xf32>
    %381 = arith.addf %378, %380 : vector<8x128xf32>
    %c0_123 = arith.constant 0 : index
    %c0_124 = arith.constant 0 : index
    %382 = vector.load %arg7[%c0_123, %c0_124] : memref<8x128xf32, #tpu.memory_space<vmem>>, vector<8x128xf32>
    tpu.vector_store %arg7[%c0_123, %c0_124], %381 {strides = array<i32>} : memref<8x128xf32, #tpu.memory_space<vmem>>, vector<8x128xf32>,
    return
  }
}

</mosaic_0001>

<llo_original>
// kernel: vit_forward.1
$region0: #{vit_forward.1}
  #allocation0 [shape = 'u32[]', space=smem, size = 0x4, offset = 0x4, fixed_abs, tag = 'smem constant byte address 0x4 - core index']
  #allocation1 [shape = 'u32[144,128]{1,0:T(1,128)}', space=vmem, size = 0x12000, scoped, tag = 'internal scratch']
  %s0 = inlined_call_operand.vmem [shape: f32[16,768], index: 0, kind: input, shape index: {}]
  %s1 = inlined_call_operand.vmem [shape: f32[768,32], index: 1, kind: input, shape index: {}]
  %s2 = inlined_call_operand.vmem [shape: f32[16,32], index: 2, kind: input, shape index: {}]
  %s3 = inlined_call_operand.vmem [shape: f32[24,128], index: 3, kind: input, shape index: {}]
  %s4 = inlined_call_operand.vmem [shape: f32[64,256], index: 4, kind: input, shape index: {}]
  %s5 = inlined_call_operand.vmem [shape: f32[256,32], index: 5, kind: input, shape index: {}]
  %s6 = inlined_call_operand.vmem [shape: f32[32,128], index: 6, kind: input, shape index: {}]
  %s7 = inlined_call_operand.vmem [shape: f32[8,128], index: 7, kind: output, shape index: {}]
  %s8 = sld [smem:[#allocation0]]
  $region38: #{vit_forward.1} parent=0
    _
  %s10 = ssub.s32 1, %s8
  %s11 = scalar_select 0, %s10, %s8
  // Predicated region
  $region2: #{vit_forward.1} parent=0 // pred_check
    _
  $region3: #{vit_forward.1} parent=0 // pred_check_branch
    %13 = sbr.rel (0) target = $region5
  $region4: #{vit_forward.1} parent=0 // pred_region
    _
  $region5: #{vit_forward.1} parent=0 // pred_fallthru
    _
  // Predicated region
  $region6: #{vit_forward.1} parent=0 // pred_check
    _
  $region7: #{vit_forward.1} parent=0 // pred_check_branch
    %15 = sbr.rel (0) target = $region9
  $region8: #{vit_forward.1} parent=0 // pred_region
    _
  $region9: #{vit_forward.1} parent=0 // pred_fallthru
    _
  // Predicated region
  $region10: #{vit_forward.1} parent=0 // pred_check
    _
  $region11: #{vit_forward.1} parent=0 // pred_check_branch
    %17 = sbr.rel (0) target = $region13
  $region12: #{vit_forward.1} parent=0 // pred_region
    _
  $region13: #{vit_forward.1} parent=0 // pred_fallthru
    _
  // Predicated region
  $region14: #{vit_forward.1} parent=0 // pred_check
    _
  $region15: #{vit_forward.1} parent=0 // pred_check_branch
    %19 = sbr.rel (0) target = $region17
  $region16: #{vit_forward.1} parent=0 // pred_region
    _
  $region17: #{vit_forward.1} parent=0 // pred_fallthru
    _
  // Predicated region
  $region18: #{vit_forward.1} parent=0 // pred_check
    _
  $region19: #{vit_forward.1} parent=0 // pred_check_branch
    %21 = sbr.rel (0) target = $region21
  $region20: #{vit_forward.1} parent=0 // pred_region
    _
  $region21: #{vit_forward.1} parent=0 // pred_fallthru
    _
  // Predicated region
  $region22: #{vit_forward.1} parent=0 // pred_check
    _
  $region23: #{vit_forward.1} parent=0 // pred_check_branch
    %23 = sbr.rel (0) target = $region25
  $region24: #{vit_forward.1} parent=0 // pred_region
    _
  $region25: #{vit_forward.1} parent=0 // pred_fallthru
    _
  // Predicated region
  $region26: #{vit_forward.1} parent=0 // pred_check
    _
  $region27: #{vit_forward.1} parent=0 // pred_check_branch
    %25 = sbr.rel (0) target = $region29
  $region28: #{vit_forward.1} parent=0 // pred_region
    _
  $region29: #{vit_forward.1} parent=0 // pred_fallthru
    _
  %v26 = vld [vmem:[%s2] sm:$0xff]
  %v27 = vld [vmem:[%s2 + $0x8] sm:$0xff]
  %v28 = vld [vmem:[%s0] sm:$0xff]
  %v29 = vld [vmem:[%s0 + $0x8] sm:$0xff]
  %v30 = vld [vmem:[%s0 + $0x10] sm:$0xff]
  %v31 = vld [vmem:[%s0 + $0x18] sm:$0xff]
  %v32 = vld [vmem:[%s0 + $0x20] sm:$0xff]
  %v33 = vld [vmem:[%s0 + $0x28] sm:$0xff]
  %v34 = vld [vmem:[%s0 + $0x30] sm:$0xff]
  %v35 = vld [vmem:[%s0 + $0x38] sm:$0xff]
  %v36 = vld [vmem:[%s0 + $0x40] sm:$0xff]
  %v37 = vld [vmem:[%s0 + $0x48] sm:$0xff]
  %v38 = vld [vmem:[%s0 + $0x50] sm:$0xff]
  %v39 = vld [vmem:[%s0 + $0x58] sm:$0xff]
  %v40 = vld [vmem:[%s1] sm:$0xff]
  %v41 = vld [vmem:[%s1 + $0x8] sm:$0xff]
  %v42 = vld [vmem:[%s1 + $0x10] sm:$0xff]
  %v43 = vld [vmem:[%s1 + $0x18] sm:$0xff]
  %v44 = vld [vmem:[%s1 + $0x20] sm:$0xff]
  %v45 = vld [vmem:[%s1 + $0x28] sm:$0xff]
  %v46 = vld [vmem:[%s1 + $0x30] sm:$0xff]
  %v47 = vld [vmem:[%s1 + $0x38] sm:$0xff]
  %v48 = vld [vmem:[%s1 + $0x40] sm:$0xff]
  %v49 = vld [vmem:[%s1 + $0x48] sm:$0xff]
  %v50 = vld [vmem:[%s1 + $0x50] sm:$0xff]
  %v51 = vld [vmem:[%s1 + $0x58] sm:$0xff]
  %v52 = vld [vmem:[%s1 + $0x60] sm:$0xff]
  %v53 = vld [vmem:[%s1 + $0x68] sm:$0xff]
  %v54 = vld [vmem:[%s1 + $0x70] sm:$0xff]
  %v55 = vld [vmem:[%s1 + $0x78] sm:$0xff]
  %v56 = vld [vmem:[%s1 + $0x80] sm:$0xff]
  %v57 = vld [vmem:[%s1 + $0x88] sm:$0xff]
  %v58 = vld [vmem:[%s1 + $0x90] sm:$0xff]
  %v59 = vld [vmem:[%s1 + $0x98] sm:$0xff]
  %v60 = vld [vmem:[%s1 + $0xa0] sm:$0xff]
  %v61 = vld [vmem:[%s1 + $0xa8] sm:$0xff]
  %v62 = vld [vmem:[%s1 + $0xb0] sm:$0xff]
  %v63 = vld [vmem:[%s1 + $0xb8] sm:$0xff]
  %v64 = vld [vmem:[%s1 + $0xc0] sm:$0xff]
  %v65 = vld [vmem:[%s1 + $0xc8] sm:$0xff]
  %v66 = vld [vmem:[%s1 + $0xd0] sm:$0xff]
  %v67 = vld [vmem:[%s1 + $0xd8] sm:$0xff]
  %v68 = vld [vmem:[%s1 + $0xe0] sm:$0xff]
  %v69 = vld [vmem:[%s1 + $0xe8] sm:$0xff]
  %v70 = vld [vmem:[%s1 + $0xf0] sm:$0xff]
  %v71 = vld [vmem:[%s1 + $0xf8] sm:$0xff]
  %v72 = vld [vmem:[%s1 + $0x100] sm:$0xff]
  %v73 = vld [vmem:[%s1 + $0x108] sm:$0xff]
  %v74 = vld [vmem:[%s1 + $0x110] sm:$0xff]
  %v75 = vld [vmem:[%s1 + $0x118] sm:$0xff]
  %v76 = vld [vmem:[%s1 + $0x120] sm:$0xff]
  %v77 = vld [vmem:[%s1 + $0x128] sm:$0xff]
  %v78 = vld [vmem:[%s1 + $0x130] sm:$0xff]
  %v79 = vld [vmem:[%s1 + $0x138] sm:$0xff]
  %v80 = vld [vmem:[%s1 + $0x140] sm:$0xff]
  %v81 = vld [vmem:[%s1 + $0x148] sm:$0xff]
  %v82 = vld [vmem:[%s1 + $0x150] sm:$0xff]
  %v83 = vld [vmem:[%s1 + $0x158] sm:$0xff]
  %v84 = vld [vmem:[%s1 + $0x160] sm:$0xff]
  %v85 = vld [vmem:[%s1 + $0x168] sm:$0xff]
  %v86 = vld [vmem:[%s1 + $0x170] sm:$0xff]
  %v87 = vld [vmem:[%s1 + $0x178] sm:$0xff]
  %v88 = vld [vmem:[%s1 + $0x180] sm:$0xff]
  %v89 = vld [vmem:[%s1 + $0x188] sm:$0xff]
  %v90 = vld [vmem:[%s1 + $0x190] sm:$0xff]
  %v91 = vld [vmem:[%s1 + $0x198] sm:$0xff]
  %v92 = vld [vmem:[%s1 + $0x1a0] sm:$0xff]
  %v93 = vld [vmem:[%s1 + $0x1a8] sm:$0xff]
  %v94 = vld [vmem:[%s1 + $0x1b0] sm:$0xff]
  %v95 = vld [vmem:[%s1 + $0x1b8] sm:$0xff]
  %v96 = vld [vmem:[%s1 + $0x1c0] sm:$0xff]
  %v97 = vld [vmem:[%s1 + $0x1c8] sm:$0xff]
  %v98 = vld [vmem:[%s1 + $0x1d0] sm:$0xff]
  %v99 = vld [vmem:[%s1 + $0x1d8] sm:$0xff]
  %v100 = vld [vmem:[%s1 + $0x1e0] sm:$0xff]
  %v101 = vld [vmem:[%s1 + $0x1e8] sm:$0xff]
  %v102 = vld [vmem:[%s1 + $0x1f0] sm:$0xff]
  %v103 = vld [vmem:[%s1 + $0x1f8] sm:$0xff]
  %v104 = vld [vmem:[%s1 + $0x200] sm:$0xff]
  %v105 = vld [vmem:[%s1 + $0x208] sm:$0xff]
  %v106 = vld [vmem:[%s1 + $0x210] sm:$0xff]
  %v107 = vld [vmem:[%s1 + $0x218] sm:$0xff]
  %v108 = vld [vmem:[%s1 + $0x220] sm:$0xff]
  %v109 = vld [vmem:[%s1 + $0x228] sm:$0xff]
  %v110 = vld [vmem:[%s1 + $0x230] sm:$0xff]
  %v111 = vld [vmem:[%s1 + $0x238] sm:$0xff]
  %v112 = vld [vmem:[%s1 + $0x240] sm:$0xff]
  %v113 = vld [vmem:[%s1 + $0x248] sm:$0xff]
  %v114 = vld [vmem:[%s1 + $0x250] sm:$0xff]
  %v115 = vld [vmem:[%s1 + $0x258] sm:$0xff]
  %v116 = vld [vmem:[%s1 + $0x260] sm:$0xff]
  %v117 = vld [vmem:[%s1 + $0x268] sm:$0xff]
  %v118 = vld [vmem:[%s1 + $0x270] sm:$0xff]
  %v119 = vld [vmem:[%s1 + $0x278] sm:$0xff]
  %v120 = vld [vmem:[%s1 + $0x280] sm:$0xff]
  %v121 = vld [vmem:[%s1 + $0x288] sm:$0xff]
  %v122 = vld [vmem:[%s1 + $0x290] sm:$0xff]
  %v123 = vld [vmem:[%s1 + $0x298] sm:$0xff]
  %v124 = vld [vmem:[%s1 + $0x2a0] sm:$0xff]
  %v125 = vld [vmem:[%s1 + $0x2a8] sm:$0xff]
  %v126 = vld [vmem:[%s1 + $0x2b0] sm:$0xff]
  %v127 = vld [vmem:[%s1 + $0x2b8] sm:$0xff]
  %v128 = vld [vmem:[%s1 + $0x2c0] sm:$0xff]
  %v129 = vld [vmem:[%s1 + $0x2c8] sm:$0xff]
  %v130 = vld [vmem:[%s1 + $0x2d0] sm:$0xff]
  %v131 = vld [vmem:[%s1 + $0x2d8] sm:$0xff]
  %v132 = vld [vmem:[%s1 + $0x2e0] sm:$0xff]
  %v133 = vld [vmem:[%s1 + $0x2e8] sm:$0xff]
  %v134 = vld [vmem:[%s1 + $0x2f0] sm:$0xff]
  %v135 = vld [vmem:[%s1 + $0x2f8] sm:$0xff]
  %136 = vmatprep.subr.mxu0 0.0
  %137 = vmatpush1.msra.mxu0 %v55
  %138 = vmatprep.subr.mxu0 0.0
  %139 = vmatpush1.msra.mxu0 %v54
  %140 = vmatprep.subr.mxu0 0.0
  %141 = vmatpush1.msra.mxu0 %v53
  %142 = vmatprep.subr.mxu0 0.0
  %143 = vmatpush1.msra.mxu0 %v52
  %144 = vmatprep.subr.mxu0 0.0
  %145 = vmatpush1.msra.mxu0 %v51
  %146 = vmatprep.subr.mxu0 0.0
  %147 = vmatpush1.msra.mxu0 %v50
  %148 = vmatprep.subr.mxu0 0.0
  %149 = vmatpush1.msra.mxu0 %v49
  %150 = vmatprep.subr.mxu0 0.0
  %151 = vmatpush1.msra.mxu0 %v48
  %152 = vmatprep.subr.mxu0 0.0
  %153 = vmatpush1.msra.mxu0 %v47
  %154 = vmatprep.subr.mxu0 0.0
  %155 = vmatpush1.msra.mxu0 %v46
  %156 = vmatprep.subr.mxu0 0.0
  %157 = vmatpush1.msra.mxu0 %v45
  %158 = vmatprep.subr.mxu0 0.0
  %159 = vmatpush1.msra.mxu0 %v44
  %160 = vmatprep.subr.mxu0 0.0
  %161 = vmatpush1.msra.mxu0 %v43
  %162 = vmatprep.subr.mxu0 0.0
  %163 = vmatpush1.msra.mxu0 %v42
  %164 = vmatprep.subr.mxu0 0.0
  %165 = vmatpush1.msra.mxu0 %v41
  %166 = vmatprep.subr.mxu0 0.0
  %167 = vmatpush1.msra.mxu0 %v40
  %168 = vmatprep.subr.mxu0 0.0
  %169 = vmatpush2.msra.mxu0 %v71
  %170 = vmatprep.subr.mxu0 0.0
  %171 = vmatpush2.msra.mxu0 %v70
  %172 = vmatprep.subr.mxu0 0.0
  %173 = vmatpush2.msra.mxu0 %v69
  %174 = vmatprep.subr.mxu0 0.0
  %175 = vmatpush2.msra.mxu0 %v68
  %176 = vmatprep.subr.mxu0 0.0
  %177 = vmatpush2.msra.mxu0 %v67
  %178 = vmatprep.subr.mxu0 0.0
  %179 = vmatpush2.msra.mxu0 %v66
  %180 = vmatprep.subr.mxu0 0.0
  %181 = vmatpush2.msra.mxu0 %v65
  %182 = vmatprep.subr.mxu0 0.0
  %183 = vmatpush2.msra.mxu0 %v64
  %184 = vmatprep.subr.mxu0 0.0
  %185 = vmatpush2.msra.mxu0 %v63
  %186 = vmatprep.subr.mxu0 0.0
  %187 = vmatpush2.msra.mxu0 %v62
  %188 = vmatprep.subr.mxu0 0.0
  %189 = vmatpush2.msra.mxu0 %v61
  %190 = vmatprep.subr.mxu0 0.0
  %191 = vmatpush2.msra.mxu0 %v60
  %192 = vmatprep.subr.mxu0 0.0
  %193 = vmatpush2.msra.mxu0 %v59
  %194 = vmatprep.subr.mxu0 0.0
  %195 = vmatpush2.msra.mxu0 %v58
  %196 = vmatprep.subr.mxu0 0.0
  %197 = vmatpush2.msra.mxu0 %v57
  %198 = vmatprep.subr.mxu0 0.0
  %199 = vmatpush2.msra.mxu0 %v56
  %200 = vmatprep.mubr.f32.mxu0 %v29
  %201 = vmatmul.mubr.f32.gmra.mxu0 %v28
  %v202 = vpop.f32.mrf.mxu0
  %v203 = vadd.f32 0.0, %v202
  %v204 = vpop.f32.mrf.mxu0
  %205 = vmatprep.mubr.f32.mxu0 %v35
  %206 = vmatmul.mubr.f32.gmra.mxu0 %v34
  %v207 = vpop.f32.mrf.mxu0
  %v208 = vadd.f32 0.0, %v207
  %v209 = vpop.f32.mrf.mxu0
  %210 = vdwg.mxu0
  %211 = vmatprep.subr.mxu0 0.0
  %212 = vmatpush1.msra.mxu0 %v87
  %213 = vmatprep.subr.mxu0 0.0
  %214 = vmatpush1.msra.mxu0 %v86
  %215 = vmatprep.subr.mxu0 0.0
  %216 = vmatpush1.msra.mxu0 %v85
  %217 = vmatprep.subr.mxu0 0.0
  %218 = vmatpush1.msra.mxu0 %v84
  %219 = vmatprep.subr.mxu0 0.0
  %220 = vmatpush1.msra.mxu0 %v83
  %221 = vmatprep.subr.mxu0 0.0
  %222 = vmatpush1.msra.mxu0 %v82
  %223 = vmatprep.subr.mxu0 0.0
  %224 = vmatpush1.msra.mxu0 %v81
  %225 = vmatprep.subr.mxu0 0.0
  %226 = vmatpush1.msra.mxu0 %v80
  %227 = vmatprep.subr.mxu0 0.0
  %228 = vmatpush1.msra.mxu0 %v79
  %229 = vmatprep.subr.mxu0 0.0
  %230 = vmatpush1.msra.mxu0 %v78
  %231 = vmatprep.subr.mxu0 0.0
  %232 = vmatpush1.msra.mxu0 %v77
  %233 = vmatprep.subr.mxu0 0.0
  %234 = vmatpush1.msra.mxu0 %v76
  %235 = vmatprep.subr.mxu0 0.0
  %236 = vmatpush1.msra.mxu0 %v75
  %237 = vmatprep.subr.mxu0 0.0
  %238 = vmatpush1.msra.mxu0 %v74
  %239 = vmatprep.subr.mxu0 0.0
  %240 = vmatpush1.msra.mxu0 %v73
  %241 = vmatprep.subr.mxu0 0.0
  %242 = vmatpush1.msra.mxu0 %v72
  %243 = vmatprep.subr.mxu0 0.0
  %244 = vmatpush2.msra.mxu0 %v103
  %245 = vmatprep.subr.mxu0 0.0
  %246 = vmatpush2.msra.mxu0 %v102
  %247 = vmatprep.subr.mxu0 0.0
  %248 = vmatpush2.msra.mxu0 %v101
  %249 = vmatprep.subr.mxu0 0.0
  %250 = vmatpush2.msra.mxu0 %v100
  %251 = vmatprep.subr.mxu0 0.0
  %252 = vmatpush2.msra.mxu0 %v99
  %253 = vmatprep.subr.mxu0 0.0
  %254 = vmatpush2.msra.mxu0 %v98
  %255 = vmatprep.subr.mxu0 0.0
  %256 = vmatpush2.msra.mxu0 %v97
  %257 = vmatprep.subr.mxu0 0.0
  %258 = vmatpush2.msra.mxu0 %v96
  %259 = vmatprep.subr.mxu0 0.0
  %260 = vmatpush2.msra.mxu0 %v95
  %261 = vmatprep.subr.mxu0 0.0
  %262 = vmatpush2.msra.mxu0 %v94
  %263 = vmatprep.subr.mxu0 0.0
  %264 = vmatpush2.msra.mxu0 %v93
  %265 = vmatprep.subr.mxu0 0.0
  %266 = vmatpush2.msra.mxu0 %v92
  %267 = vmatprep.subr.mxu0 0.0
  %268 = vmatpush2.msra.mxu0 %v91
  %269 = vmatprep.subr.mxu0 0.0
  %270 = vmatpush2.msra.mxu0 %v90
  %271 = vmatprep.subr.mxu0 0.0
  %272 = vmatpush2.msra.mxu0 %v89
  %273 = vmatprep.subr.mxu0 0.0
  %274 = vmatpush2.msra.mxu0 %v88
  %275 = vmatprep.mubr.f32.mxu0 %v31
  %276 = vmatmul.mubr.f32.gmra.mxu0 %v30
  %v277 = vpop.f32.mrf.mxu0
  %v278 = vadd.f32 %v203, %v277
  %v279 = vpop.f32.mrf.mxu0
  %280 = vmatprep.mubr.f32.mxu0 %v37
  %281 = vmatmul.mubr.f32.gmra.mxu0 %v36
  %v282 = vpop.f32.mrf.mxu0
  %v283 = vadd.f32 %v208, %v282
  %v284 = vpop.f32.mrf.mxu0
  %285 = vdwg.mxu0
  %286 = vmatprep.subr.mxu0 0.0
  %287 = vmatpush1.msra.mxu0 %v119
  %288 = vmatprep.subr.mxu0 0.0
  %289 = vmatpush1.msra.mxu0 %v118
  %290 = vmatprep.subr.mxu0 0.0
  %291 = vmatpush1.msra.mxu0 %v117
  %292 = vmatprep.subr.mxu0 0.0
  %293 = vmatpush1.msra.mxu0 %v116
  %294 = vmatprep.subr.mxu0 0.0
  %295 = vmatpush1.msra.mxu0 %v115
  %296 = vmatprep.subr.mxu0 0.0
  %297 = vmatpush1.msra.mxu0 %v114
  %298 = vmatprep.subr.mxu0 0.0
  %299 = vmatpush1.msra.mxu0 %v113
  %300 = vmatprep.subr.mxu0 0.0
  %301 = vmatpush1.msra.mxu0 %v112
  %302 = vmatprep.subr.mxu0 0.0
  %303 = vmatpush1.msra.mxu0 %v111
  %304 = vmatprep.subr.mxu0 0.0
  %305 = vmatpush1.msra.mxu0 %v110
  %306 = vmatprep.subr.mxu0 0.0
  %307 = vmatpush1.msra.mxu0 %v109
  %308 = vmatprep.subr.mxu0 0.0
  %309 = vmatpush1.msra.mxu0 %v108
  %310 = vmatprep.subr.mxu0 0.0
  %311 = vmatpush1.msra.mxu0 %v107
  %312 = vmatprep.subr.mxu0 0.0
  %313 = vmatpush1.msra.mxu0 %v106
  %314 = vmatprep.subr.mxu0 0.0
  %315 = vmatpush1.msra.mxu0 %v105
  %316 = vmatprep.subr.mxu0 0.0
  %317 = vmatpush1.msra.mxu0 %v104
  %318 = vmatprep.subr.mxu0 0.0
  %319 = vmatpush2.msra.mxu0 %v135
  %320 = vmatprep.subr.mxu0 0.0
  %321 = vmatpush2.msra.mxu0 %v134
  %322 = vmatprep.subr.mxu0 0.0
  %323 = vmatpush2.msra.mxu0 %v133
  %324 = vmatprep.subr.mxu0 0.0
  %325 = vmatpush2.msra.mxu0 %v132
  %326 = vmatprep.subr.mxu0 0.0
  %327 = vmatpush2.msra.mxu0 %v131
  %328 = vmatprep.subr.mxu0 0.0
  %329 = vmatpush2.msra.mxu0 %v130
  %330 = vmatprep.subr.mxu0 0.0
  %331 = vmatpush2.msra.mxu0 %v129
  %332 = vmatprep.subr.mxu0 0.0
  %333 = vmatpush2.msra.mxu0 %v128
  %334 = vmatprep.subr.mxu0 0.0
  %335 = vmatpush2.msra.mxu0 %v127
  %336 = vmatprep.subr.mxu0 0.0
  %337 = vmatpush2.msra.mxu0 %v126
  %338 = vmatprep.subr.mxu0 0.0
  %339 = vmatpush2.msra.mxu0 %v125
  %340 = vmatprep.subr.mxu0 0.0
  %341 = vmatpush2.msra.mxu0 %v124
  %342 = vmatprep.subr.mxu0 0.0
  %343 = vmatpush2.msra.mxu0 %v123
  %344 = vmatprep.subr.mxu0 0.0
  %345 = vmatpush2.msra.mxu0 %v122
  %346 = vmatprep.subr.mxu0 0.0
  %347 = vmatpush2.msra.mxu0 %v121
  %348 = vmatprep.subr.mxu0 0.0
  %349 = vmatpush2.msra.mxu0 %v120
  %350 = vmatprep.mubr.f32.mxu0 %v33
  %351 = vmatmul.mubr.f32.gmra.mxu0 %v32
  %v352 = vpop.f32.mrf.mxu0
  %v353 = vadd.f32 %v278, %v352
  %v354 = vpop.f32.mrf.mxu0
  %355 = vmatprep.mubr.f32.mxu0 %v39
  %356 = vmatmul.mubr.f32.gmra.mxu0 %v38
  %v357 = vpop.f32.mrf.mxu0
  %v358 = vadd.f32 %v283, %v357
  %v359 = vpop.f32.mrf.mxu0
  %360 = vdwg.mxu0
  %v361 = vadd.f32 %v26, %v353
  %v362 = vadd.f32 %v27, %v358
  %v363 = vlaneseq
  %v364 = vand.u32 %v363, 127
  %vm365 = vcmp.lt.s32.totalorder %v364, 5
  %v366 = vsel %vm365, 0.0, -1e+30
  %v367 = vld [vmem:[%s3 + $0x3] sm:$0x1]
  %v368 = vld [vmem:[%s3 + $0x4] sm:$0x1]
  %v369 = vld [vmem:[%s3 + $0x5] sm:$0x1]
  %v370 = vld [vmem:[%s3 + $0x6] sm:$0x1]
  %v371 = vld [vmem:[%s3 + $0x7] sm:$0x1]
  %v372 = vld [vmem:[%s3 + $0x8] sm:$0x1]
  %v373 = vld [vmem:[%s3 + $0x9] sm:$0x1]
  %v374 = vld [vmem:[%s3 + $0xa] sm:$0x1]
  %v375 = vld [vmem:[%s4] sm:$0xff]
  %v376 = vld [vmem:[%s4 + $0x10] sm:$0xff]
  %v377 = vld [vmem:[%s4 + $0x20] sm:$0xff]
  %v378 = vld [vmem:[%s4 + $0x30] sm:$0xff]
  %v379 = vld [vmem:[%s4 + $0x8] sm:$0xff]
  %v380 = vld [vmem:[%s4 + $0x18] sm:$0xff]
  %v381 = vld [vmem:[%s4 + $0x28] sm:$0xff]
  %v382 = vld [vmem:[%s4 + $0x38] sm:$0xff]
  %v383 = vld [vmem:[%s5] sm:$0xff]
  %v384 = vld [vmem:[%s5 + $0x8] sm:$0xff]
  %v385 = vld [vmem:[%s5 + $0x10] sm:$0xff]
  %v386 = vld [vmem:[%s5 + $0x18] sm:$0xff]
  %v387 = vld [vmem:[%s5 + $0x20] sm:$0xff]
  %v388 = vld [vmem:[%s5 + $0x28] sm:$0xff]
  %v389 = vld [vmem:[%s5 + $0x30] sm:$0xff]
  %v390 = vld [vmem:[%s5 + $0x38] sm:$0xff]
  %v391 = vld [vmem:[%s5 + $0x40] sm:$0xff]
  %v392 = vld [vmem:[%s5 + $0x48] sm:$0xff]
  %v393 = vld [vmem:[%s5 + $0x50] sm:$0xff]
  %v394 = vld [vmem:[%s5 + $0x58] sm:$0xff]
  %v395 = vld [vmem:[%s5 + $0x60] sm:$0xff]
  %v396 = vld [vmem:[%s5 + $0x68] sm:$0xff]
  %v397 = vld [vmem:[%s5 + $0x70] sm:$0xff]
  %v398 = vld [vmem:[%s5 + $0x78] sm:$0xff]
  %vm399 = vcmask 261120
  %v400 = vsel %vm399, %v361, 0.0
  %401 = vadd.xlane.f32.xlu0 %v400
  %v402 = vpop.xlane.xlu0 %401
  %v403 = vsel %vm399, %v362, 0.0
  %404 = vadd.xlane.f32.xlu0 %v403
  %v405 = vpop.xlane.xlu0 %404
  %v406 = vrcp.pop 32.0
  %v407 = vmul.f32 %v402, %v406
  %v408 = vmul.f32 %v405, %v406
  %v409 = vsub.f32 %v361, %v407
  %v410 = vsub.f32 %v362, %v408
  %v411 = vmul.f32 %v409, %v409
  %v412 = vmul.f32 %v410, %v410
  %v413 = vsel %vm399, %v411, 0.0
  %414 = vadd.xlane.f32.xlu0 %v413
  %v415 = vpop.xlane.xlu0 %414
  %v416 = vsel %vm399, %v412, 0.0
  %417 = vadd.xlane.f32.xlu0 %v416
  %v418 = vpop.xlane.xlu0 %417
  %v419 = vmul.f32 %v415, %v406
  %v420 = vmul.f32 %v418, %v406
  %v421 = vadd.f32 %v419, 1e-06
  %v422 = vadd.f32 %v420, 1e-06
  %v423 = vrsqrt.pop %v421
  %v424 = vrsqrt.pop %v422
  %v425 = vmul.f32 %v409, %v423
  %v426 = vmul.f32 %v410, %v424
  %v427 = vlaneseq
  %v428 = vshrl.u32 %v427, 7
  %v429 = vsub.s32 0, %v428
  %v430 = vrot.slane %v367, %v429
  %v431 = vmul.f32 %v425, %v430
  %v432 = vmul.f32 %v426, %v430
  %v433 = vlaneseq
  %v434 = vshrl.u32 %v433, 7
  %v435 = vsub.s32 0, %v434
  %v436 = vrot.slane %v368, %v435
  %v437 = vadd.f32 %v431, %v436
  %v438 = vadd.f32 %v432, %v436
  %v439 = vlaneseq
  %v440 = vshrl.u32 %v439, 7
  %v441 = vsub.s32 0, %v440
  %v442 = vrot.slane %v369, %v441
  %v444 = vsel %vm399, %v437, 0
  %v447 = vsel %vm399, %v438, 0
  %449 = vmatprep.subr.mxu0 0.0
  %450 = vmatpush1.msra.mxu0 0.0
  %451 = vmatprep.subr.mxu0 0.0
  %452 = vmatpush1.msra.mxu0 0.0
  %453 = vmatprep.subr.mxu0 0.0
  %454 = vmatpush1.msra.mxu0 0.0
  %455 = vmatprep.subr.mxu0 0.0
  %456 = vmatpush1.msra.mxu0 0.0
  %457 = vmatprep.subr.mxu0 0.0
  %458 = vmatpush1.msra.mxu0 0.0
  %459 = vmatprep.subr.mxu0 0.0
  %460 = vmatpush1.msra.mxu0 0.0
  %461 = vmatprep.subr.mxu0 0.0
  %462 = vmatpush1.msra.mxu0 0.0
  %463 = vmatprep.subr.mxu0 0.0
  %464 = vmatpush1.msra.mxu0 0.0
  %465 = vmatprep.subr.mxu0 0.0
  %466 = vmatpush1.msra.mxu0 0.0
  %467 = vmatprep.subr.mxu0 0.0
  %468 = vmatpush1.msra.mxu0 0.0
  %469 = vmatprep.subr.mxu0 0.0
  %470 = vmatpush1.msra.mxu0 0.0
  %471 = vmatprep.subr.mxu0 0.0
  %472 = vmatpush1.msra.mxu0 0.0
  %473 = vmatprep.subr.mxu0 0.0
  %474 = vmatpush1.msra.mxu0 %v378
  %475 = vmatprep.subr.mxu0 0.0
  %476 = vmatpush1.msra.mxu0 %v377
  %477 = vmatprep.subr.mxu0 0.0
  %478 = vmatpush1.msra.mxu0 %v376
  %479 = vmatprep.subr.mxu0 0.0
  %480 = vmatpush1.msra.mxu0 %v375
  %481 = vmatprep.subr.mxu0 0.0
  %482 = vmatpush2.msra.mxu0 0.0
  %483 = vmatprep.subr.mxu0 0.0
  %484 = vmatpush2.msra.mxu0 0.0
  %485 = vmatprep.subr.mxu0 0.0
  %486 = vmatpush2.msra.mxu0 0.0
  %487 = vmatprep.subr.mxu0 0.0
  %488 = vmatpush2.msra.mxu0 0.0
  %489 = vmatprep.subr.mxu0 0.0
  %490 = vmatpush2.msra.mxu0 0.0
  %491 = vmatprep.subr.mxu0 0.0
  %492 = vmatpush2.msra.mxu0 0.0
  %493 = vmatprep.subr.mxu0 0.0
  %494 = vmatpush2.msra.mxu0 0.0
  %495 = vmatprep.subr.mxu0 0.0
  %496 = vmatpush2.msra.mxu0 0.0
  %497 = vmatprep.subr.mxu0 0.0
  %498 = vmatpush2.msra.mxu0 0.0
  %499 = vmatprep.subr.mxu0 0.0
  %500 = vmatpush2.msra.mxu0 0.0
  %501 = vmatprep.subr.mxu0 0.0
  %502 = vmatpush2.msra.mxu0 0.0
  %503 = vmatprep.subr.mxu0 0.0
  %504 = vmatpush2.msra.mxu0 0.0
  %505 = vmatprep.subr.mxu0 0.0
  %506 = vmatpush2.msra.mxu0 0.0
  %507 = vmatprep.subr.mxu0 0.0
  %508 = vmatpush2.msra.mxu0 0.0
  %509 = vmatprep.subr.mxu0 0.0
  %510 = vmatpush2.msra.mxu0 0.0
  %511 = vmatprep.subr.mxu0 0.0
  %512 = vmatpush2.msra.mxu0 0.0
  %513 = vmatprep.mubr.f32.mxu0 0.0
  %514 = vmatmul.mubr.f32.gmra.mxu0 %v444
  %v515 = vpop.f32.mrf.mxu0
  %v516 = vadd.f32 %v442, %v515
  %v517 = vpop.f32.mrf.mxu0
  %518 = vmatprep.mubr.f32.mxu0 0.0
  %519 = vmatmul.mubr.f32.gmra.mxu0 %v447
  %v520 = vpop.f32.mrf.mxu0
  %v521 = vadd.f32 %v442, %v520
  %v522 = vpop.f32.mrf.mxu0
  %523 = vdwg.mxu0
  %525 = vrot.lane.b32.xlu0 %v516, 96
  %v526 = vpop.permute.xlu0 %525
  %vm527 = vcmask 64512
  %v528 = vsel %vm527, %v516, 0
  %v530 = vsel %vm527, %v526, 0
  %532 = vmatprep.subr.mxu0 0.0
  %533 = vmatpush1.xpose.msra.mxu0 0.0
  %534 = vmatprep.subr.mxu0 0.0
  %535 = vmatpush1.xpose.msra.mxu0 0.0
  %536 = vmatprep.subr.mxu0 0.0
  %537 = vmatpush1.xpose.msra.mxu0 0.0
  %538 = vmatprep.subr.mxu0 0.0
  %539 = vmatpush1.xpose.msra.mxu0 0.0
  %540 = vmatprep.subr.mxu0 0.0
  %541 = vmatpush1.xpose.msra.mxu0 0.0
  %542 = vmatprep.subr.mxu0 0.0
  %543 = vmatpush1.xpose.msra.mxu0 0.0
  %544 = vmatprep.subr.mxu0 0.0
  %545 = vmatpush1.xpose.msra.mxu0 0.0
  %546 = vmatprep.subr.mxu0 0.0
  %547 = vmatpush1.xpose.msra.mxu0 0.0
  %548 = vmatprep.subr.mxu0 0.0
  %549 = vmatpush1.xpose.msra.mxu0 0.0
  %550 = vmatprep.subr.mxu0 0.0
  %551 = vmatpush1.xpose.msra.mxu0 0.0
  %552 = vmatprep.subr.mxu0 0.0
  %553 = vmatpush1.xpose.msra.mxu0 0.0
  %554 = vmatprep.subr.mxu0 0.0
  %555 = vmatpush1.xpose.msra.mxu0 0.0
  %556 = vmatprep.subr.mxu0 0.0
  %557 = vmatpush1.xpose.msra.mxu0 0.0
  %558 = vmatprep.subr.mxu0 0.0
  %559 = vmatpush1.xpose.msra.mxu0 0.0
  %560 = vmatprep.subr.mxu0 0.0
  %561 = vmatpush1.xpose.msra.mxu0 0.0
  %562 = vmatprep.subr.mxu0 0.0
  %563 = vmatpush1.xpose.msra.mxu0 %v530
  %564 = vmatprep.subr.mxu0 0.0
  %565 = vmatpush2.xpose.msra.mxu0 0.0
  %566 = vmatprep.subr.mxu0 0.0
  %567 = vmatpush2.xpose.msra.mxu0 0.0
  %568 = vmatprep.subr.mxu0 0.0
  %569 = vmatpush2.xpose.msra.mxu0 0.0
  %570 = vmatprep.subr.mxu0 0.0
  %571 = vmatpush2.xpose.msra.mxu0 0.0
  %572 = vmatprep.subr.mxu0 0.0
  %573 = vmatpush2.xpose.msra.mxu0 0.0
  %574 = vmatprep.subr.mxu0 0.0
  %575 = vmatpush2.xpose.msra.mxu0 0.0
  %576 = vmatprep.subr.mxu0 0.0
  %577 = vmatpush2.xpose.msra.mxu0 0.0
  %578 = vmatprep.subr.mxu0 0.0
  %579 = vmatpush2.xpose.msra.mxu0 0.0
  %580 = vmatprep.subr.mxu0 0.0
  %581 = vmatpush2.xpose.msra.mxu0 0.0
  %582 = vmatprep.subr.mxu0 0.0
  %583 = vmatpush2.xpose.msra.mxu0 0.0
  %584 = vmatprep.subr.mxu0 0.0
  %585 = vmatpush2.xpose.msra.mxu0 0.0
  %586 = vmatprep.subr.mxu0 0.0
  %587 = vmatpush2.xpose.msra.mxu0 0.0
  %588 = vmatprep.subr.mxu0 0.0
  %589 = vmatpush2.xpose.msra.mxu0 0.0
  %590 = vmatprep.subr.mxu0 0.0
  %591 = vmatpush2.xpose.msra.mxu0 0.0
  %592 = vmatprep.subr.mxu0 0.0
  %593 = vmatpush2.xpose.msra.mxu0 0.0
  %594 = vmatprep.subr.mxu0 0.0
  %595 = vmatpush2.xpose.msra.mxu0 0.0
  %596 = vmatprep.mubr.f32.mxu0 0.0
  %597 = vmatmul.mubr.f32.gmra.mxu0 %v528
  %v598 = vpop.f32.mrf.mxu0
  %v599 = vadd.f32 0.0, %v598
  %v600 = vpop.f32.mrf.mxu0
  %601 = vdwg.mxu0
  %603 = vrot.lane.b32.xlu0 %v521, 96
  %v604 = vpop.permute.xlu0 %603
  %v605 = vsel %vm527, %v521, 0
  %v607 = vsel %vm527, %v604, 0
  %609 = vmatprep.subr.mxu0 0.0
  %610 = vmatpush1.xpose.msra.mxu0 0.0
  %611 = vmatprep.subr.mxu0 0.0
  %612 = vmatpush1.xpose.msra.mxu0 0.0
  %613 = vmatprep.subr.mxu0 0.0
  %614 = vmatpush1.xpose.msra.mxu0 0.0
  %615 = vmatprep.subr.mxu0 0.0
  %616 = vmatpush1.xpose.msra.mxu0 0.0
  %617 = vmatprep.subr.mxu0 0.0
  %618 = vmatpush1.xpose.msra.mxu0 0.0
  %619 = vmatprep.subr.mxu0 0.0
  %620 = vmatpush1.xpose.msra.mxu0 0.0
  %621 = vmatprep.subr.mxu0 0.0
  %622 = vmatpush1.xpose.msra.mxu0 0.0
  %623 = vmatprep.subr.mxu0 0.0
  %624 = vmatpush1.xpose.msra.mxu0 0.0
  %625 = vmatprep.subr.mxu0 0.0
  %626 = vmatpush1.xpose.msra.mxu0 0.0
  %627 = vmatprep.subr.mxu0 0.0
  %628 = vmatpush1.xpose.msra.mxu0 0.0
  %629 = vmatprep.subr.mxu0 0.0
  %630 = vmatpush1.xpose.msra.mxu0 0.0
  %631 = vmatprep.subr.mxu0 0.0
  %632 = vmatpush1.xpose.msra.mxu0 0.0
  %633 = vmatprep.subr.mxu0 0.0
  %634 = vmatpush1.xpose.msra.mxu0 0.0
  %635 = vmatprep.subr.mxu0 0.0
  %636 = vmatpush1.xpose.msra.mxu0 0.0
  %637 = vmatprep.subr.mxu0 0.0
  %638 = vmatpush1.xpose.msra.mxu0 0.0
  %639 = vmatprep.subr.mxu0 0.0
  %640 = vmatpush1.xpose.msra.mxu0 %v607
  %641 = vmatprep.subr.mxu0 0.0
  %642 = vmatpush2.xpose.msra.mxu0 0.0
  %643 = vmatprep.subr.mxu0 0.0
  %644 = vmatpush2.xpose.msra.mxu0 0.0
  %645 = vmatprep.subr.mxu0 0.0
  %646 = vmatpush2.xpose.msra.mxu0 0.0
  %647 = vmatprep.subr.mxu0 0.0
  %648 = vmatpush2.xpose.msra.mxu0 0.0
  %649 = vmatprep.subr.mxu0 0.0
  %650 = vmatpush2.xpose.msra.mxu0 0.0
  %651 = vmatprep.subr.mxu0 0.0
  %652 = vmatpush2.xpose.msra.mxu0 0.0
  %653 = vmatprep.subr.mxu0 0.0
  %654 = vmatpush2.xpose.msra.mxu0 0.0
  %655 = vmatprep.subr.mxu0 0.0
  %656 = vmatpush2.xpose.msra.mxu0 0.0
  %657 = vmatprep.subr.mxu0 0.0
  %658 = vmatpush2.xpose.msra.mxu0 0.0
  %659 = vmatprep.subr.mxu0 0.0
  %660 = vmatpush2.xpose.msra.mxu0 0.0
  %661 = vmatprep.subr.mxu0 0.0
  %662 = vmatpush2.xpose.msra.mxu0 0.0
  %663 = vmatprep.subr.mxu0 0.0
  %664 = vmatpush2.xpose.msra.mxu0 0.0
  %665 = vmatprep.subr.mxu0 0.0
  %666 = vmatpush2.xpose.msra.mxu0 0.0
  %667 = vmatprep.subr.mxu0 0.0
  %668 = vmatpush2.xpose.msra.mxu0 0.0
  %669 = vmatprep.subr.mxu0 0.0
  %670 = vmatpush2.xpose.msra.mxu0 0.0
  %671 = vmatprep.subr.mxu0 0.0
  %672 = vmatpush2.xpose.msra.mxu0 0.0
  %673 = vmatprep.mubr.f32.mxu0 0.0
  %674 = vmatmul.mubr.f32.gmra.mxu0 %v605
  %v675 = vpop.f32.mrf.mxu0
  %v676 = vadd.f32 0.0, %v675
  %v677 = vpop.f32.mrf.mxu0
  %678 = vdwg.mxu0
  %v679 = vmul.f32 %v599, 0.35355338
  %v680 = vmul.f32 %v676, 0.35355338
  %v681 = vadd.f32 %v679, %v366
  %v682 = vadd.f32 %v680, %v366
  %v683 = vsel %vm527, %v681, -inf
  %684 = vmax.xlane.f32.xlu0 %v683
  %v685 = vpop.xlane.xlu0 %684
  %v686 = vsel %vm527, %v682, -inf
  %687 = vmax.xlane.f32.xlu0 %v686
  %v688 = vpop.xlane.xlu0 %687
  %v689 = vsub.f32 %v681, %v685
  %v690 = vsub.f32 %v682, %v688
  %v691 = vmul.f32 %v689, 1.442695
  %v692 = vpow.pop %v691
  %v693 = vmul.f32 %v690, 1.442695
  %v694 = vpow.pop %v693
  %v695 = vsel %vm527, %v692, 0.0
  %696 = vadd.xlane.f32.xlu0 %v695
  %v697 = vpop.xlane.xlu0 %696
  %v698 = vsel %vm527, %v694, 0.0
  %699 = vadd.xlane.f32.xlu0 %v698
  %v700 = vpop.xlane.xlu0 %699
  %v701 = vrcp.pop %v697
  %v702 = vrcp.pop %v700
  %v703 = vmul.f32 %v692, %v701
  %v704 = vmul.f32 %v694, %v702
  %705 = vrot.lane.b32.xlu0 %v516, 64
  %v706 = vpop.permute.xlu0 %705
  %v709 = vsel %vm527, %v703, 0
  %711 = vmatprep.subr.mxu0 0.0
  %712 = vmatpush1.msra.mxu0 0.0
  %713 = vmatprep.subr.mxu0 0.0
  %714 = vmatpush1.msra.mxu0 0.0
  %715 = vmatprep.subr.mxu0 0.0
  %716 = vmatpush1.msra.mxu0 0.0
  %717 = vmatprep.subr.mxu0 0.0
  %718 = vmatpush1.msra.mxu0 0.0
  %719 = vmatprep.subr.mxu0 0.0
  %720 = vmatpush1.msra.mxu0 0.0
  %721 = vmatprep.subr.mxu0 0.0
  %722 = vmatpush1.msra.mxu0 0.0
  %723 = vmatprep.subr.mxu0 0.0
  %724 = vmatpush1.msra.mxu0 0.0
  %725 = vmatprep.subr.mxu0 0.0
  %726 = vmatpush1.msra.mxu0 0.0
  %727 = vmatprep.subr.mxu0 0.0
  %728 = vmatpush1.msra.mxu0 0.0
  %729 = vmatprep.subr.mxu0 0.0
  %730 = vmatpush1.msra.mxu0 0.0
  %731 = vmatprep.subr.mxu0 0.0
  %732 = vmatpush1.msra.mxu0 0.0
  %733 = vmatprep.subr.mxu0 0.0
  %734 = vmatpush1.msra.mxu0 0.0
  %735 = vmatprep.subr.mxu0 0.0
  %736 = vmatpush1.msra.mxu0 0.0
  %737 = vmatprep.subr.mxu0 0.0
  %738 = vmatpush1.msra.mxu0 0.0
  %739 = vmatprep.subr.mxu0 0.0
  %740 = vmatpush1.msra.mxu0 0.0
  %741 = vmatprep.subr.mxu0 0.0
  %742 = vmatpush1.msra.mxu0 %v706
  %743 = vmatprep.subr.mxu0 0.0
  %744 = vmatpush2.msra.mxu0 0.0
  %745 = vmatprep.subr.mxu0 0.0
  %746 = vmatpush2.msra.mxu0 0.0
  %747 = vmatprep.subr.mxu0 0.0
  %748 = vmatpush2.msra.mxu0 0.0
  %749 = vmatprep.subr.mxu0 0.0
  %750 = vmatpush2.msra.mxu0 0.0
  %751 = vmatprep.subr.mxu0 0.0
  %752 = vmatpush2.msra.mxu0 0.0
  %753 = vmatprep.subr.mxu0 0.0
  %754 = vmatpush2.msra.mxu0 0.0
  %755 = vmatprep.subr.mxu0 0.0
  %756 = vmatpush2.msra.mxu0 0.0
  %757 = vmatprep.subr.mxu0 0.0
  %758 = vmatpush2.msra.mxu0 0.0
  %759 = vmatprep.subr.mxu0 0.0
  %760 = vmatpush2.msra.mxu0 0.0
  %761 = vmatprep.subr.mxu0 0.0
  %762 = vmatpush2.msra.mxu0 0.0
  %763 = vmatprep.subr.mxu0 0.0
  %764 = vmatpush2.msra.mxu0 0.0
  %765 = vmatprep.subr.mxu0 0.0
  %766 = vmatpush2.msra.mxu0 0.0
  %767 = vmatprep.subr.mxu0 0.0
  %768 = vmatpush2.msra.mxu0 0.0
  %769 = vmatprep.subr.mxu0 0.0
  %770 = vmatpush2.msra.mxu0 0.0
  %771 = vmatprep.subr.mxu0 0.0
  %772 = vmatpush2.msra.mxu0 0.0
  %773 = vmatprep.subr.mxu0 0.0
  %774 = vmatpush2.msra.mxu0 0.0
  %775 = vmatprep.mubr.f32.mxu0 0.0
  %776 = vmatmul.mubr.f32.gmra.mxu0 %v709
  %v777 = vpop.f32.mrf.mxu0
  %v778 = vadd.f32 0.0, %v777
  %v779 = vpop.f32.mrf.mxu0
  %780 = vdwg.mxu0
  %781 = vrot.lane.b32.xlu0 %v521, 64
  %v782 = vpop.permute.xlu0 %781
  %v785 = vsel %vm527, %v704, 0
  %787 = vmatprep.subr.mxu0 0.0
  %788 = vmatpush1.msra.mxu0 0.0
  %789 = vmatprep.subr.mxu0 0.0
  %790 = vmatpush1.msra.mxu0 0.0
  %791 = vmatprep.subr.mxu0 0.0
  %792 = vmatpush1.msra.mxu0 0.0
  %793 = vmatprep.subr.mxu0 0.0
  %794 = vmatpush1.msra.mxu0 0.0
  %795 = vmatprep.subr.mxu0 0.0
  %796 = vmatpush1.msra.mxu0 0.0
  %797 = vmatprep.subr.mxu0 0.0
  %798 = vmatpush1.msra.mxu0 0.0
  %799 = vmatprep.subr.mxu0 0.0
  %800 = vmatpush1.msra.mxu0 0.0
  %801 = vmatprep.subr.mxu0 0.0
  %802 = vmatpush1.msra.mxu0 0.0
  %803 = vmatprep.subr.mxu0 0.0
  %804 = vmatpush1.msra.mxu0 0.0
  %805 = vmatprep.subr.mxu0 0.0
  %806 = vmatpush1.msra.mxu0 0.0
  %807 = vmatprep.subr.mxu0 0.0
  %808 = vmatpush1.msra.mxu0 0.0
  %809 = vmatprep.subr.mxu0 0.0
  %810 = vmatpush1.msra.mxu0 0.0
  %811 = vmatprep.subr.mxu0 0.0
  %812 = vmatpush1.msra.mxu0 0.0
  %813 = vmatprep.subr.mxu0 0.0
  %814 = vmatpush1.msra.mxu0 0.0
  %815 = vmatprep.subr.mxu0 0.0
  %816 = vmatpush1.msra.mxu0 0.0
  %817 = vmatprep.subr.mxu0 0.0
  %818 = vmatpush1.msra.mxu0 %v782
  %819 = vmatprep.subr.mxu0 0.0
  %820 = vmatpush2.msra.mxu0 0.0
  %821 = vmatprep.subr.mxu0 0.0
  %822 = vmatpush2.msra.mxu0 0.0
  %823 = vmatprep.subr.mxu0 0.0
  %824 = vmatpush2.msra.mxu0 0.0
  %825 = vmatprep.subr.mxu0 0.0
  %826 = vmatpush2.msra.mxu0 0.0
  %827 = vmatprep.subr.mxu0 0.0
  %828 = vmatpush2.msra.mxu0 0.0
  %829 = vmatprep.subr.mxu0 0.0
  %830 = vmatpush2.msra.mxu0 0.0
  %831 = vmatprep.subr.mxu0 0.0
  %832 = vmatpush2.msra.mxu0 0.0
  %833 = vmatprep.subr.mxu0 0.0
  %834 = vmatpush2.msra.mxu0 0.0
  %835 = vmatprep.subr.mxu0 0.0
  %836 = vmatpush2.msra.mxu0 0.0
  %837 = vmatprep.subr.mxu0 0.0
  %838 = vmatpush2.msra.mxu0 0.0
  %839 = vmatprep.subr.mxu0 0.0
  %840 = vmatpush2.msra.mxu0 0.0
  %841 = vmatprep.subr.mxu0 0.0
  %842 = vmatpush2.msra.mxu0 0.0
  %843 = vmatprep.subr.mxu0 0.0
  %844 = vmatpush2.msra.mxu0 0.0
  %845 = vmatprep.subr.mxu0 0.0
  %846 = vmatpush2.msra.mxu0 0.0
  %847 = vmatprep.subr.mxu0 0.0
  %848 = vmatpush2.msra.mxu0 0.0
  %849 = vmatprep.subr.mxu0 0.0
  %850 = vmatpush2.msra.mxu0 0.0
  %851 = vmatprep.mubr.f32.mxu0 0.0
  %852 = vmatmul.mubr.f32.gmra.mxu0 %v785
  %v853 = vpop.f32.mrf.mxu0
  %v854 = vadd.f32 0.0, %v853
  %v855 = vpop.f32.mrf.mxu0
  %856 = vdwg.mxu0
  %857 = vrot.lane.b32.xlu0 %v516, 120
  %v858 = vpop.permute.xlu0 %857
  %859 = vrot.lane.b32.xlu0 %v516, 88
  %v860 = vpop.permute.xlu0 %859
  %v861 = vsel %vm527, %v858, 0
  %v863 = vsel %vm527, %v860, 0
  %865 = vmatprep.subr.mxu0 0.0
  %866 = vmatpush1.xpose.msra.mxu0 0.0
  %867 = vmatprep.subr.mxu0 0.0
  %868 = vmatpush1.xpose.msra.mxu0 0.0
  %869 = vmatprep.subr.mxu0 0.0
  %870 = vmatpush1.xpose.msra.mxu0 0.0
  %871 = vmatprep.subr.mxu0 0.0
  %872 = vmatpush1.xpose.msra.mxu0 0.0
  %873 = vmatprep.subr.mxu0 0.0
  %874 = vmatpush1.xpose.msra.mxu0 0.0
  %875 = vmatprep.subr.mxu0 0.0
  %876 = vmatpush1.xpose.msra.mxu0 0.0
  %877 = vmatprep.subr.mxu0 0.0
  %878 = vmatpush1.xpose.msra.mxu0 0.0
  %879 = vmatprep.subr.mxu0 0.0
  %880 = vmatpush1.xpose.msra.mxu0 0.0
  %881 = vmatprep.subr.mxu0 0.0
  %882 = vmatpush1.xpose.msra.mxu0 0.0
  %883 = vmatprep.subr.mxu0 0.0
  %884 = vmatpush1.xpose.msra.mxu0 0.0
  %885 = vmatprep.subr.mxu0 0.0
  %886 = vmatpush1.xpose.msra.mxu0 0.0
  %887 = vmatprep.subr.mxu0 0.0
  %888 = vmatpush1.xpose.msra.mxu0 0.0
  %889 = vmatprep.subr.mxu0 0.0
  %890 = vmatpush1.xpose.msra.mxu0 0.0
  %891 = vmatprep.subr.mxu0 0.0
  %892 = vmatpush1.xpose.msra.mxu0 0.0
  %893 = vmatprep.subr.mxu0 0.0
  %894 = vmatpush1.xpose.msra.mxu0 0.0
  %895 = vmatprep.subr.mxu0 0.0
  %896 = vmatpush1.xpose.msra.mxu0 %v863
  %897 = vmatprep.subr.mxu0 0.0
  %898 = vmatpush2.xpose.msra.mxu0 0.0
  %899 = vmatprep.subr.mxu0 0.0
  %900 = vmatpush2.xpose.msra.mxu0 0.0
  %901 = vmatprep.subr.mxu0 0.0
  %902 = vmatpush2.xpose.msra.mxu0 0.0
  %903 = vmatprep.subr.mxu0 0.0
  %904 = vmatpush2.xpose.msra.mxu0 0.0
  %905 = vmatprep.subr.mxu0 0.0
  %906 = vmatpush2.xpose.msra.mxu0 0.0
  %907 = vmatprep.subr.mxu0 0.0
  %908 = vmatpush2.xpose.msra.mxu0 0.0
  %909 = vmatprep.subr.mxu0 0.0
  %910 = vmatpush2.xpose.msra.mxu0 0.0
  %911 = vmatprep.subr.mxu0 0.0
  %912 = vmatpush2.xpose.msra.mxu0 0.0
  %913 = vmatprep.subr.mxu0 0.0
  %914 = vmatpush2.xpose.msra.mxu0 0.0
  %915 = vmatprep.subr.mxu0 0.0
  %916 = vmatpush2.xpose.msra.mxu0 0.0
  %917 = vmatprep.subr.mxu0 0.0
  %918 = vmatpush2.xpose.msra.mxu0 0.0
  %919 = vmatprep.subr.mxu0 0.0
  %920 = vmatpush2.xpose.msra.mxu0 0.0
  %921 = vmatprep.subr.mxu0 0.0
  %922 = vmatpush2.xpose.msra.mxu0 0.0
  %923 = vmatprep.subr.mxu0 0.0
  %924 = vmatpush2.xpose.msra.mxu0 0.0
  %925 = vmatprep.subr.mxu0 0.0
  %926 = vmatpush2.xpose.msra.mxu0 0.0
  %927 = vmatprep.subr.mxu0 0.0
  %928 = vmatpush2.xpose.msra.mxu0 0.0
  %929 = vmatprep.mubr.f32.mxu0 0.0
  %930 = vmatmul.mubr.f32.gmra.mxu0 %v861
  %v931 = vpop.f32.mrf.mxu0
  %v932 = vadd.f32 0.0, %v931
  %v933 = vpop.f32.mrf.mxu0
  %934 = vdwg.mxu0
  %935 = vrot.lane.b32.xlu0 %v521, 120
  %v936 = vpop.permute.xlu0 %935
  %937 = vrot.lane.b32.xlu0 %v521, 88
  %v938 = vpop.permute.xlu0 %937
  %v939 = vsel %vm527, %v936, 0
  %v941 = vsel %vm527, %v938, 0
  %943 = vmatprep.subr.mxu0 0.0
  %944 = vmatpush1.xpose.msra.mxu0 0.0
  %945 = vmatprep.subr.mxu0 0.0
  %946 = vmatpush1.xpose.msra.mxu0 0.0
  %947 = vmatprep.subr.mxu0 0.0
  %948 = vmatpush1.xpose.msra.mxu0 0.0
  %949 = vmatprep.subr.mxu0 0.0
  %950 = vmatpush1.xpose.msra.mxu0 0.0
  %951 = vmatprep.subr.mxu0 0.0
  %952 = vmatpush1.xpose.msra.mxu0 0.0
  %953 = vmatprep.subr.mxu0 0.0
  %954 = vmatpush1.xpose.msra.mxu0 0.0
  %955 = vmatprep.subr.mxu0 0.0
  %956 = vmatpush1.xpose.msra.mxu0 0.0
  %957 = vmatprep.subr.mxu0 0.0
  %958 = vmatpush1.xpose.msra.mxu0 0.0
  %959 = vmatprep.subr.mxu0 0.0
  %960 = vmatpush1.xpose.msra.mxu0 0.0
  %961 = vmatprep.subr.mxu0 0.0
  %962 = vmatpush1.xpose.msra.mxu0 0.0
  %963 = vmatprep.subr.mxu0 0.0
  %964 = vmatpush1.xpose.msra.mxu0 0.0
  %965 = vmatprep.subr.mxu0 0.0
  %966 = vmatpush1.xpose.msra.mxu0 0.0
  %967 = vmatprep.subr.mxu0 0.0
  %968 = vmatpush1.xpose.msra.mxu0 0.0
  %969 = vmatprep.subr.mxu0 0.0
  %970 = vmatpush1.xpose.msra.mxu0 0.0
  %971 = vmatprep.subr.mxu0 0.0
  %972 = vmatpush1.xpose.msra.mxu0 0.0
  %973 = vmatprep.subr.mxu0 0.0
  %974 = vmatpush1.xpose.msra.mxu0 %v941
  %975 = vmatprep.subr.mxu0 0.0
  %976 = vmatpush2.xpose.msra.mxu0 0.0
  %977 = vmatprep.subr.mxu0 0.0
  %978 = vmatpush2.xpose.msra.mxu0 0.0
  %979 = vmatprep.subr.mxu0 0.0
  %980 = vmatpush2.xpose.msra.mxu0 0.0
  %981 = vmatprep.subr.mxu0 0.0
  %982 = vmatpush2.xpose.msra.mxu0 0.0
  %983 = vmatprep.subr.mxu0 0.0
  %984 = vmatpush2.xpose.msra.mxu0 0.0
  %985 = vmatprep.subr.mxu0 0.0
  %986 = vmatpush2.xpose.msra.mxu0 0.0
  %987 = vmatprep.subr.mxu0 0.0
  %988 = vmatpush2.xpose.msra.mxu0 0.0
  %989 = vmatprep.subr.mxu0 0.0
  %990 = vmatpush2.xpose.msra.mxu0 0.0
  %991 = vmatprep.subr.mxu0 0.0
  %992 = vmatpush2.xpose.msra.mxu0 0.0
  %993 = vmatprep.subr.mxu0 0.0
  %994 = vmatpush2.xpose.msra.mxu0 0.0
  %995 = vmatprep.subr.mxu0 0.0
  %996 = vmatpush2.xpose.msra.mxu0 0.0
  %997 = vmatprep.subr.mxu0 0.0
  %998 = vmatpush2.xpose.msra.mxu0 0.0
  %999 = vmatprep.subr.mxu0 0.0
  %1000 = vmatpush2.xpose.msra.mxu0 0.0
  %1001 = vmatprep.subr.mxu0 0.0
  %1002 = vmatpush2.xpose.msra.mxu0 0.0
  %1003 = vmatprep.subr.mxu0 0.0
  %1004 = vmatpush2.xpose.msra.mxu0 0.0
  %1005 = vmatprep.subr.mxu0 0.0
  %1006 = vmatpush2.xpose.msra.mxu0 0.0
  %1007 = vmatprep.mubr.f32.mxu0 0.0
  %1008 = vmatmul.mubr.f32.gmra.mxu0 %v939
  %v1009 = vpop.f32.mrf.mxu0
  %v1010 = vadd.f32 0.0, %v1009
  %v1011 = vpop.f32.mrf.mxu0
  %1012 = vdwg.mxu0
  %v1013 = vmul.f32 %v932, 0.35355338
  %v1014 = vmul.f32 %v1010, 0.35355338
  %v1015 = vadd.f32 %v1013, %v366
  %v1016 = vadd.f32 %v1014, %v366
  %v1017 = vsel %vm527, %v1015, -inf
  %1018 = vmax.xlane.f32.xlu0 %v1017
  %v1019 = vpop.xlane.xlu0 %1018
  %v1020 = vsel %vm527, %v1016, -inf
  %1021 = vmax.xlane.f32.xlu0 %v1020
  %v1022 = vpop.xlane.xlu0 %1021
  %v1023 = vsub.f32 %v1015, %v1019
  %v1024 = vsub.f32 %v1016, %v1022
  %v1025 = vmul.f32 %v1023, 1.442695
  %v1026 = vpow.pop %v1025
  %v1027 = vmul.f32 %v1024, 1.442695
  %v1028 = vpow.pop %v1027
  %v1029 = vsel %vm527, %v1026, 0.0
  %1030 = vadd.xlane.f32.xlu0 %v1029
  %v1031 = vpop.xlane.xlu0 %1030
  %v1032 = vsel %vm527, %v1028, 0.0
  %1033 = vadd.xlane.f32.xlu0 %v1032
  %v1034 = vpop.xlane.xlu0 %1033
  %v1035 = vrcp.pop %v1031
  %v1036 = vrcp.pop %v1034
  %v1037 = vmul.f32 %v1026, %v1035
  %v1038 = vmul.f32 %v1028, %v1036
  %1039 = vrot.lane.b32.xlu0 %v516, 56
  %v1040 = vpop.permute.xlu0 %1039
  %v1043 = vsel %vm527, %v1037, 0
  %1045 = vmatprep.subr.mxu0 0.0
  %1046 = vmatpush1.msra.mxu0 0.0
  %1047 = vmatprep.subr.mxu0 0.0
  %1048 = vmatpush1.msra.mxu0 0.0
  %1049 = vmatprep.subr.mxu0 0.0
  %1050 = vmatpush1.msra.mxu0 0.0
  %1051 = vmatprep.subr.mxu0 0.0
  %1052 = vmatpush1.msra.mxu0 0.0
  %1053 = vmatprep.subr.mxu0 0.0
  %1054 = vmatpush1.msra.mxu0 0.0
  %1055 = vmatprep.subr.mxu0 0.0
  %1056 = vmatpush1.msra.mxu0 0.0
  %1057 = vmatprep.subr.mxu0 0.0
  %1058 = vmatpush1.msra.mxu0 0.0
  %1059 = vmatprep.subr.mxu0 0.0
  %1060 = vmatpush1.msra.mxu0 0.0
  %1061 = vmatprep.subr.mxu0 0.0
  %1062 = vmatpush1.msra.mxu0 0.0
  %1063 = vmatprep.subr.mxu0 0.0
  %1064 = vmatpush1.msra.mxu0 0.0
  %1065 = vmatprep.subr.mxu0 0.0
  %1066 = vmatpush1.msra.mxu0 0.0
  %1067 = vmatprep.subr.mxu0 0.0
  %1068 = vmatpush1.msra.mxu0 0.0
  %1069 = vmatprep.subr.mxu0 0.0
  %1070 = vmatpush1.msra.mxu0 0.0
  %1071 = vmatprep.subr.mxu0 0.0
  %1072 = vmatpush1.msra.mxu0 0.0
  %1073 = vmatprep.subr.mxu0 0.0
  %1074 = vmatpush1.msra.mxu0 0.0
  %1075 = vmatprep.subr.mxu0 0.0
  %1076 = vmatpush1.msra.mxu0 %v1040
  %1077 = vmatprep.subr.mxu0 0.0
  %1078 = vmatpush2.msra.mxu0 0.0
  %1079 = vmatprep.subr.mxu0 0.0
  %1080 = vmatpush2.msra.mxu0 0.0
  %1081 = vmatprep.subr.mxu0 0.0
  %1082 = vmatpush2.msra.mxu0 0.0
  %1083 = vmatprep.subr.mxu0 0.0
  %1084 = vmatpush2.msra.mxu0 0.0
  %1085 = vmatprep.subr.mxu0 0.0
  %1086 = vmatpush2.msra.mxu0 0.0
  %1087 = vmatprep.subr.mxu0 0.0
  %1088 = vmatpush2.msra.mxu0 0.0
  %1089 = vmatprep.subr.mxu0 0.0
  %1090 = vmatpush2.msra.mxu0 0.0
  %1091 = vmatprep.subr.mxu0 0.0
  %1092 = vmatpush2.msra.mxu0 0.0
  %1093 = vmatprep.subr.mxu0 0.0
  %1094 = vmatpush2.msra.mxu0 0.0
  %1095 = vmatprep.subr.mxu0 0.0
  %1096 = vmatpush2.msra.mxu0 0.0
  %1097 = vmatprep.subr.mxu0 0.0
  %1098 = vmatpush2.msra.mxu0 0.0
  %1099 = vmatprep.subr.mxu0 0.0
  %1100 = vmatpush2.msra.mxu0 0.0
  %1101 = vmatprep.subr.mxu0 0.0
  %1102 = vmatpush2.msra.mxu0 0.0
  %1103 = vmatprep.subr.mxu0 0.0
  %1104 = vmatpush2.msra.mxu0 0.0
  %1105 = vmatprep.subr.mxu0 0.0
  %1106 = vmatpush2.msra.mxu0 0.0
  %1107 = vmatprep.subr.mxu0 0.0
  %1108 = vmatpush2.msra.mxu0 0.0
  %1109 = vmatprep.mubr.f32.mxu0 0.0
  %1110 = vmatmul.mubr.f32.gmra.mxu0 %v1043
  %v1111 = vpop.f32.mrf.mxu0
  %v1112 = vadd.f32 0.0, %v1111
  %v1113 = vpop.f32.mrf.mxu0
  %1114 = vdwg.mxu0
  %1115 = vrot.lane.b32.xlu0 %v521, 56
  %v1116 = vpop.permute.xlu0 %1115
  %v1119 = vsel %vm527, %v1038, 0
  %1121 = vmatprep.subr.mxu0 0.0
  %1122 = vmatpush1.msra.mxu0 0.0
  %1123 = vmatprep.subr.mxu0 0.0
  %1124 = vmatpush1.msra.mxu0 0.0
  %1125 = vmatprep.subr.mxu0 0.0
  %1126 = vmatpush1.msra.mxu0 0.0
  %1127 = vmatprep.subr.mxu0 0.0
  %1128 = vmatpush1.msra.mxu0 0.0
  %1129 = vmatprep.subr.mxu0 0.0
  %1130 = vmatpush1.msra.mxu0 0.0
  %1131 = vmatprep.subr.mxu0 0.0
  %1132 = vmatpush1.msra.mxu0 0.0
  %1133 = vmatprep.subr.mxu0 0.0
  %1134 = vmatpush1.msra.mxu0 0.0
  %1135 = vmatprep.subr.mxu0 0.0
  %1136 = vmatpush1.msra.mxu0 0.0
  %1137 = vmatprep.subr.mxu0 0.0
  %1138 = vmatpush1.msra.mxu0 0.0
  %1139 = vmatprep.subr.mxu0 0.0
  %1140 = vmatpush1.msra.mxu0 0.0
  %1141 = vmatprep.subr.mxu0 0.0
  %1142 = vmatpush1.msra.mxu0 0.0
  %1143 = vmatprep.subr.mxu0 0.0
  %1144 = vmatpush1.msra.mxu0 0.0
  %1145 = vmatprep.subr.mxu0 0.0
  %1146 = vmatpush1.msra.mxu0 0.0
  %1147 = vmatprep.subr.mxu0 0.0
  %1148 = vmatpush1.msra.mxu0 0.0
  %1149 = vmatprep.subr.mxu0 0.0
  %1150 = vmatpush1.msra.mxu0 0.0
  %1151 = vmatprep.subr.mxu0 0.0
  %1152 = vmatpush1.msra.mxu0 %v1116
  %1153 = vmatprep.subr.mxu0 0.0
  %1154 = vmatpush2.msra.mxu0 0.0
  %1155 = vmatprep.subr.mxu0 0.0
  %1156 = vmatpush2.msra.mxu0 0.0
  %1157 = vmatprep.subr.mxu0 0.0
  %1158 = vmatpush2.msra.mxu0 0.0
  %1159 = vmatprep.subr.mxu0 0.0
  %1160 = vmatpush2.msra.mxu0 0.0
  %1161 = vmatprep.subr.mxu0 0.0
  %1162 = vmatpush2.msra.mxu0 0.0
  %1163 = vmatprep.subr.mxu0 0.0
  %1164 = vmatpush2.msra.mxu0 0.0
  %1165 = vmatprep.subr.mxu0 0.0
  %1166 = vmatpush2.msra.mxu0 0.0
  %1167 = vmatprep.subr.mxu0 0.0
  %1168 = vmatpush2.msra.mxu0 0.0
  %1169 = vmatprep.subr.mxu0 0.0
  %1170 = vmatpush2.msra.mxu0 0.0
  %1171 = vmatprep.subr.mxu0 0.0
  %1172 = vmatpush2.msra.mxu0 0.0
  %1173 = vmatprep.subr.mxu0 0.0
  %1174 = vmatpush2.msra.mxu0 0.0
  %1175 = vmatprep.subr.mxu0 0.0
  %1176 = vmatpush2.msra.mxu0 0.0
  %1177 = vmatprep.subr.mxu0 0.0
  %1178 = vmatpush2.msra.mxu0 0.0
  %1179 = vmatprep.subr.mxu0 0.0
  %1180 = vmatpush2.msra.mxu0 0.0
  %1181 = vmatprep.subr.mxu0 0.0
  %1182 = vmatpush2.msra.mxu0 0.0
  %1183 = vmatprep.subr.mxu0 0.0
  %1184 = vmatpush2.msra.mxu0 0.0
  %1185 = vmatprep.mubr.f32.mxu0 0.0
  %1186 = vmatmul.mubr.f32.gmra.mxu0 %v1119
  %v1187 = vpop.f32.mrf.mxu0
  %v1188 = vadd.f32 0.0, %v1187
  %v1189 = vpop.f32.mrf.mxu0
  %1190 = vdwg.mxu0
  %1191 = vrot.lane.b32.xlu0 %v516, 112
  %v1192 = vpop.permute.xlu0 %1191
  %1193 = vrot.lane.b32.xlu0 %v516, 80
  %v1194 = vpop.permute.xlu0 %1193
  %v1195 = vsel %vm527, %v1192, 0
  %v1197 = vsel %vm527, %v1194, 0
  %1199 = vmatprep.subr.mxu0 0.0
  %1200 = vmatpush1.xpose.msra.mxu0 0.0
  %1201 = vmatprep.subr.mxu0 0.0
  %1202 = vmatpush1.xpose.msra.mxu0 0.0
  %1203 = vmatprep.subr.mxu0 0.0
  %1204 = vmatpush1.xpose.msra.mxu0 0.0
  %1205 = vmatprep.subr.mxu0 0.0
  %1206 = vmatpush1.xpose.msra.mxu0 0.0
  %1207 = vmatprep.subr.mxu0 0.0
  %1208 = vmatpush1.xpose.msra.mxu0 0.0
  %1209 = vmatprep.subr.mxu0 0.0
  %1210 = vmatpush1.xpose.msra.mxu0 0.0
  %1211 = vmatprep.subr.mxu0 0.0
  %1212 = vmatpush1.xpose.msra.mxu0 0.0
  %1213 = vmatprep.subr.mxu0 0.0
  %1214 = vmatpush1.xpose.msra.mxu0 0.0
  %1215 = vmatprep.subr.mxu0 0.0
  %1216 = vmatpush1.xpose.msra.mxu0 0.0
  %1217 = vmatprep.subr.mxu0 0.0
  %1218 = vmatpush1.xpose.msra.mxu0 0.0
  %1219 = vmatprep.subr.mxu0 0.0
  %1220 = vmatpush1.xpose.msra.mxu0 0.0
  %1221 = vmatprep.subr.mxu0 0.0
  %1222 = vmatpush1.xpose.msra.mxu0 0.0
  %1223 = vmatprep.subr.mxu0 0.0
  %1224 = vmatpush1.xpose.msra.mxu0 0.0
  %1225 = vmatprep.subr.mxu0 0.0
  %1226 = vmatpush1.xpose.msra.mxu0 0.0
  %1227 = vmatprep.subr.mxu0 0.0
  %1228 = vmatpush1.xpose.msra.mxu0 0.0
  %1229 = vmatprep.subr.mxu0 0.0
  %1230 = vmatpush1.xpose.msra.mxu0 %v1197
  %1231 = vmatprep.subr.mxu0 0.0
  %1232 = vmatpush2.xpose.msra.mxu0 0.0
  %1233 = vmatprep.subr.mxu0 0.0
  %1234 = vmatpush2.xpose.msra.mxu0 0.0
  %1235 = vmatprep.subr.mxu0 0.0
  %1236 = vmatpush2.xpose.msra.mxu0 0.0
  %1237 = vmatprep.subr.mxu0 0.0
  %1238 = vmatpush2.xpose.msra.mxu0 0.0
  %1239 = vmatprep.subr.mxu0 0.0
  %1240 = vmatpush2.xpose.msra.mxu0 0.0
  %1241 = vmatprep.subr.mxu0 0.0
  %1242 = vmatpush2.xpose.msra.mxu0 0.0
  %1243 = vmatprep.subr.mxu0 0.0
  %1244 = vmatpush2.xpose.msra.mxu0 0.0
  %1245 = vmatprep.subr.mxu0 0.0
  %1246 = vmatpush2.xpose.msra.mxu0 0.0
  %1247 = vmatprep.subr.mxu0 0.0
  %1248 = vmatpush2.xpose.msra.mxu0 0.0
  %1249 = vmatprep.subr.mxu0 0.0
  %1250 = vmatpush2.xpose.msra.mxu0 0.0
  %1251 = vmatprep.subr.mxu0 0.0
  %1252 = vmatpush2.xpose.msra.mxu0 0.0
  %1253 = vmatprep.subr.mxu0 0.0
  %1254 = vmatpush2.xpose.msra.mxu0 0.0
  %1255 = vmatprep.subr.mxu0 0.0
  %1256 = vmatpush2.xpose.msra.mxu0 0.0
  %1257 = vmatprep.subr.mxu0 0.0
  %1258 = vmatpush2.xpose.msra.mxu0 0.0
  %1259 = vmatprep.subr.mxu0 0.0
  %1260 = vmatpush2.xpose.msra.mxu0 0.0
  %1261 = vmatprep.subr.mxu0 0.0
  %1262 = vmatpush2.xpose.msra.mxu0 0.0
  %1263 = vmatprep.mubr.f32.mxu0 0.0
  %1264 = vmatmul.mubr.f32.gmra.mxu0 %v1195
  %v1265 = vpop.f32.mrf.mxu0
  %v1266 = vadd.f32 0.0, %v1265
  %v1267 = vpop.f32.mrf.mxu0
  %1268 = vdwg.mxu0
  %1269 = vrot.lane.b32.xlu0 %v521, 112
  %v1270 = vpop.permute.xlu0 %1269
  %1271 = vrot.lane.b32.xlu0 %v521, 80
  %v1272 = vpop.permute.xlu0 %1271
  %v1273 = vsel %vm527, %v1270, 0
  %v1275 = vsel %vm527, %v1272, 0
  %1277 = vmatprep.subr.mxu0 0.0
  %1278 = vmatpush1.xpose.msra.mxu0 0.0
  %1279 = vmatprep.subr.mxu0 0.0
  %1280 = vmatpush1.xpose.msra.mxu0 0.0
  %1281 = vmatprep.subr.mxu0 0.0
  %1282 = vmatpush1.xpose.msra.mxu0 0.0
  %1283 = vmatprep.subr.mxu0 0.0
  %1284 = vmatpush1.xpose.msra.mxu0 0.0
  %1285 = vmatprep.subr.mxu0 0.0
  %1286 = vmatpush1.xpose.msra.mxu0 0.0
  %1287 = vmatprep.subr.mxu0 0.0
  %1288 = vmatpush1.xpose.msra.mxu0 0.0
  %1289 = vmatprep.subr.mxu0 0.0
  %1290 = vmatpush1.xpose.msra.mxu0 0.0
  %1291 = vmatprep.subr.mxu0 0.0
  %1292 = vmatpush1.xpose.msra.mxu0 0.0
  %1293 = vmatprep.subr.mxu0 0.0
  %1294 = vmatpush1.xpose.msra.mxu0 0.0
  %1295 = vmatprep.subr.mxu0 0.0
  %1296 = vmatpush1.xpose.msra.mxu0 0.0
  %1297 = vmatprep.subr.mxu0 0.0
  %1298 = vmatpush1.xpose.msra.mxu0 0.0
  %1299 = vmatprep.subr.mxu0 0.0
  %1300 = vmatpush1.xpose.msra.mxu0 0.0
  %1301 = vmatprep.subr.mxu0 0.0
  %1302 = vmatpush1.xpose.msra.mxu0 0.0
  %1303 = vmatprep.subr.mxu0 0.0
  %1304 = vmatpush1.xpose.msra.mxu0 0.0
  %1305 = vmatprep.subr.mxu0 0.0
  %1306 = vmatpush1.xpose.msra.mxu0 0.0
  %1307 = vmatprep.subr.mxu0 0.0
  %1308 = vmatpush1.xpose.msra.mxu0 %v1275
  %1309 = vmatprep.subr.mxu0 0.0
  %1310 = vmatpush2.xpose.msra.mxu0 0.0
  %1311 = vmatprep.subr.mxu0 0.0
  %1312 = vmatpush2.xpose.msra.mxu0 0.0
  %1313 = vmatprep.subr.mxu0 0.0
  %1314 = vmatpush2.xpose.msra.mxu0 0.0
  %1315 = vmatprep.subr.mxu0 0.0
  %1316 = vmatpush2.xpose.msra.mxu0 0.0
  %1317 = vmatprep.subr.mxu0 0.0
  %1318 = vmatpush2.xpose.msra.mxu0 0.0
  %1319 = vmatprep.subr.mxu0 0.0
  %1320 = vmatpush2.xpose.msra.mxu0 0.0
  %1321 = vmatprep.subr.mxu0 0.0
  %1322 = vmatpush2.xpose.msra.mxu0 0.0
  %1323 = vmatprep.subr.mxu0 0.0
  %1324 = vmatpush2.xpose.msra.mxu0 0.0
  %1325 = vmatprep.subr.mxu0 0.0
  %1326 = vmatpush2.xpose.msra.mxu0 0.0
  %1327 = vmatprep.subr.mxu0 0.0
  %1328 = vmatpush2.xpose.msra.mxu0 0.0
  %1329 = vmatprep.subr.mxu0 0.0
  %1330 = vmatpush2.xpose.msra.mxu0 0.0
  %1331 = vmatprep.subr.mxu0 0.0
  %1332 = vmatpush2.xpose.msra.mxu0 0.0
  %1333 = vmatprep.subr.mxu0 0.0
  %1334 = vmatpush2.xpose.msra.mxu0 0.0
  %1335 = vmatprep.subr.mxu0 0.0
  %1336 = vmatpush2.xpose.msra.mxu0 0.0
  %1337 = vmatprep.subr.mxu0 0.0
  %1338 = vmatpush2.xpose.msra.mxu0 0.0
  %1339 = vmatprep.subr.mxu0 0.0
  %1340 = vmatpush2.xpose.msra.mxu0 0.0
  %1341 = vmatprep.mubr.f32.mxu0 0.0
  %1342 = vmatmul.mubr.f32.gmra.mxu0 %v1273
  %v1343 = vpop.f32.mrf.mxu0
  %v1344 = vadd.f32 0.0, %v1343
  %v1345 = vpop.f32.mrf.mxu0
  %1346 = vdwg.mxu0
  %v1347 = vmul.f32 %v1266, 0.35355338
  %v1348 = vmul.f32 %v1344, 0.35355338
  %v1349 = vadd.f32 %v1347, %v366
  %v1350 = vadd.f32 %v1348, %v366
  %v1351 = vsel %vm527, %v1349, -inf
  %1352 = vmax.xlane.f32.xlu0 %v1351
  %v1353 = vpop.xlane.xlu0 %1352
  %v1354 = vsel %vm527, %v1350, -inf
  %1355 = vmax.xlane.f32.xlu0 %v1354
  %v1356 = vpop.xlane.xlu0 %1355
  %v1357 = vsub.f32 %v1349, %v1353
  %v1358 = vsub.f32 %v1350, %v1356
  %v1359 = vmul.f32 %v1357, 1.442695
  %v1360 = vpow.pop %v1359
  %v1361 = vmul.f32 %v1358, 1.442695
  %v1362 = vpow.pop %v1361
  %v1363 = vsel %vm527, %v1360, 0.0
  %1364 = vadd.xlane.f32.xlu0 %v1363
  %v1365 = vpop.xlane.xlu0 %1364
  %v1366 = vsel %vm527, %v1362, 0.0
  %1367 = vadd.xlane.f32.xlu0 %v1366
  %v1368 = vpop.xlane.xlu0 %1367
  %v1369 = vrcp.pop %v1365
  %v1370 = vrcp.pop %v1368
  %v1371 = vmul.f32 %v1360, %v1369
  %v1372 = vmul.f32 %v1362, %v1370
  %1373 = vrot.lane.b32.xlu0 %v516, 48
  %v1374 = vpop.permute.xlu0 %1373
  %v1377 = vsel %vm527, %v1371, 0
  %1379 = vmatprep.subr.mxu0 0.0
  %1380 = vmatpush1.msra.mxu0 0.0
  %1381 = vmatprep.subr.mxu0 0.0
  %1382 = vmatpush1.msra.mxu0 0.0
  %1383 = vmatprep.subr.mxu0 0.0
  %1384 = vmatpush1.msra.mxu0 0.0
  %1385 = vmatprep.subr.mxu0 0.0
  %1386 = vmatpush1.msra.mxu0 0.0
  %1387 = vmatprep.subr.mxu0 0.0
  %1388 = vmatpush1.msra.mxu0 0.0
  %1389 = vmatprep.subr.mxu0 0.0
  %1390 = vmatpush1.msra.mxu0 0.0
  %1391 = vmatprep.subr.mxu0 0.0
  %1392 = vmatpush1.msra.mxu0 0.0
  %1393 = vmatprep.subr.mxu0 0.0
  %1394 = vmatpush1.msra.mxu0 0.0
  %1395 = vmatprep.subr.mxu0 0.0
  %1396 = vmatpush1.msra.mxu0 0.0
  %1397 = vmatprep.subr.mxu0 0.0
  %1398 = vmatpush1.msra.mxu0 0.0
  %1399 = vmatprep.subr.mxu0 0.0
  %1400 = vmatpush1.msra.mxu0 0.0
  %1401 = vmatprep.subr.mxu0 0.0
  %1402 = vmatpush1.msra.mxu0 0.0
  %1403 = vmatprep.subr.mxu0 0.0
  %1404 = vmatpush1.msra.mxu0 0.0
  %1405 = vmatprep.subr.mxu0 0.0
  %1406 = vmatpush1.msra.mxu0 0.0
  %1407 = vmatprep.subr.mxu0 0.0
  %1408 = vmatpush1.msra.mxu0 0.0
  %1409 = vmatprep.subr.mxu0 0.0
  %1410 = vmatpush1.msra.mxu0 %v1374
  %1411 = vmatprep.subr.mxu0 0.0
  %1412 = vmatpush2.msra.mxu0 0.0
  %1413 = vmatprep.subr.mxu0 0.0
  %1414 = vmatpush2.msra.mxu0 0.0
  %1415 = vmatprep.subr.mxu0 0.0
  %1416 = vmatpush2.msra.mxu0 0.0
  %1417 = vmatprep.subr.mxu0 0.0
  %1418 = vmatpush2.msra.mxu0 0.0
  %1419 = vmatprep.subr.mxu0 0.0
  %1420 = vmatpush2.msra.mxu0 0.0
  %1421 = vmatprep.subr.mxu0 0.0
  %1422 = vmatpush2.msra.mxu0 0.0
  %1423 = vmatprep.subr.mxu0 0.0
  %1424 = vmatpush2.msra.mxu0 0.0
  %1425 = vmatprep.subr.mxu0 0.0
  %1426 = vmatpush2.msra.mxu0 0.0
  %1427 = vmatprep.subr.mxu0 0.0
  %1428 = vmatpush2.msra.mxu0 0.0
  %1429 = vmatprep.subr.mxu0 0.0
  %1430 = vmatpush2.msra.mxu0 0.0
  %1431 = vmatprep.subr.mxu0 0.0
  %1432 = vmatpush2.msra.mxu0 0.0
  %1433 = vmatprep.subr.mxu0 0.0
  %1434 = vmatpush2.msra.mxu0 0.0
  %1435 = vmatprep.subr.mxu0 0.0
  %1436 = vmatpush2.msra.mxu0 0.0
  %1437 = vmatprep.subr.mxu0 0.0
  %1438 = vmatpush2.msra.mxu0 0.0
  %1439 = vmatprep.subr.mxu0 0.0
  %1440 = vmatpush2.msra.mxu0 0.0
  %1441 = vmatprep.subr.mxu0 0.0
  %1442 = vmatpush2.msra.mxu0 0.0
  %1443 = vmatprep.mubr.f32.mxu0 0.0
  %1444 = vmatmul.mubr.f32.gmra.mxu0 %v1377
  %v1445 = vpop.f32.mrf.mxu0
  %v1446 = vadd.f32 0.0, %v1445
  %v1447 = vpop.f32.mrf.mxu0
  %1448 = vdwg.mxu0
  %1449 = vrot.lane.b32.xlu0 %v521, 48
  %v1450 = vpop.permute.xlu0 %1449
  %v1453 = vsel %vm527, %v1372, 0
  %1455 = vmatprep.subr.mxu0 0.0
  %1456 = vmatpush1.msra.mxu0 0.0
  %1457 = vmatprep.subr.mxu0 0.0
  %1458 = vmatpush1.msra.mxu0 0.0
  %1459 = vmatprep.subr.mxu0 0.0
  %1460 = vmatpush1.msra.mxu0 0.0
  %1461 = vmatprep.subr.mxu0 0.0
  %1462 = vmatpush1.msra.mxu0 0.0
  %1463 = vmatprep.subr.mxu0 0.0
  %1464 = vmatpush1.msra.mxu0 0.0
  %1465 = vmatprep.subr.mxu0 0.0
  %1466 = vmatpush1.msra.mxu0 0.0
  %1467 = vmatprep.subr.mxu0 0.0
  %1468 = vmatpush1.msra.mxu0 0.0
  %1469 = vmatprep.subr.mxu0 0.0
  %1470 = vmatpush1.msra.mxu0 0.0
  %1471 = vmatprep.subr.mxu0 0.0
  %1472 = vmatpush1.msra.mxu0 0.0
  %1473 = vmatprep.subr.mxu0 0.0
  %1474 = vmatpush1.msra.mxu0 0.0
  %1475 = vmatprep.subr.mxu0 0.0
  %1476 = vmatpush1.msra.mxu0 0.0
  %1477 = vmatprep.subr.mxu0 0.0
  %1478 = vmatpush1.msra.mxu0 0.0
  %1479 = vmatprep.subr.mxu0 0.0
  %1480 = vmatpush1.msra.mxu0 0.0
  %1481 = vmatprep.subr.mxu0 0.0
  %1482 = vmatpush1.msra.mxu0 0.0
  %1483 = vmatprep.subr.mxu0 0.0
  %1484 = vmatpush1.msra.mxu0 0.0
  %1485 = vmatprep.subr.mxu0 0.0
  %1486 = vmatpush1.msra.mxu0 %v1450
  %1487 = vmatprep.subr.mxu0 0.0
  %1488 = vmatpush2.msra.mxu0 0.0
  %1489 = vmatprep.subr.mxu0 0.0
  %1490 = vmatpush2.msra.mxu0 0.0
  %1491 = vmatprep.subr.mxu0 0.0
  %1492 = vmatpush2.msra.mxu0 0.0
  %1493 = vmatprep.subr.mxu0 0.0
  %1494 = vmatpush2.msra.mxu0 0.0
  %1495 = vmatprep.subr.mxu0 0.0
  %1496 = vmatpush2.msra.mxu0 0.0
  %1497 = vmatprep.subr.mxu0 0.0
  %1498 = vmatpush2.msra.mxu0 0.0
  %1499 = vmatprep.subr.mxu0 0.0
  %1500 = vmatpush2.msra.mxu0 0.0
  %1501 = vmatprep.subr.mxu0 0.0
  %1502 = vmatpush2.msra.mxu0 0.0
  %1503 = vmatprep.subr.mxu0 0.0
  %1504 = vmatpush2.msra.mxu0 0.0
  %1505 = vmatprep.subr.mxu0 0.0
  %1506 = vmatpush2.msra.mxu0 0.0
  %1507 = vmatprep.subr.mxu0 0.0
  %1508 = vmatpush2.msra.mxu0 0.0
  %1509 = vmatprep.subr.mxu0 0.0
  %1510 = vmatpush2.msra.mxu0 0.0
  %1511 = vmatprep.subr.mxu0 0.0
  %1512 = vmatpush2.msra.mxu0 0.0
  %1513 = vmatprep.subr.mxu0 0.0
  %1514 = vmatpush2.msra.mxu0 0.0
  %1515 = vmatprep.subr.mxu0 0.0
  %1516 = vmatpush2.msra.mxu0 0.0
  %1517 = vmatprep.subr.mxu0 0.0
  %1518 = vmatpush2.msra.mxu0 0.0
  %1519 = vmatprep.mubr.f32.mxu0 0.0
  %1520 = vmatmul.mubr.f32.gmra.mxu0 %v1453
  %v1521 = vpop.f32.mrf.mxu0
  %v1522 = vadd.f32 0.0, %v1521
  %v1523 = vpop.f32.mrf.mxu0
  %1524 = vdwg.mxu0
  %1525 = vrot.lane.b32.xlu0 %v516, 104
  %v1526 = vpop.permute.xlu0 %1525
  %1527 = vrot.lane.b32.xlu0 %v516, 72
  %v1528 = vpop.permute.xlu0 %1527
  %v1529 = vsel %vm527, %v1526, 0
  %v1531 = vsel %vm527, %v1528, 0
  %1533 = vmatprep.subr.mxu0 0.0
  %1534 = vmatpush1.xpose.msra.mxu0 0.0
  %1535 = vmatprep.subr.mxu0 0.0
  %1536 = vmatpush1.xpose.msra.mxu0 0.0
  %1537 = vmatprep.subr.mxu0 0.0
  %1538 = vmatpush1.xpose.msra.mxu0 0.0
  %1539 = vmatprep.subr.mxu0 0.0
  %1540 = vmatpush1.xpose.msra.mxu0 0.0
  %1541 = vmatprep.subr.mxu0 0.0
  %1542 = vmatpush1.xpose.msra.mxu0 0.0
  %1543 = vmatprep.subr.mxu0 0.0
  %1544 = vmatpush1.xpose.msra.mxu0 0.0
  %1545 = vmatprep.subr.mxu0 0.0
  %1546 = vmatpush1.xpose.msra.mxu0 0.0
  %1547 = vmatprep.subr.mxu0 0.0
  %1548 = vmatpush1.xpose.msra.mxu0 0.0
  %1549 = vmatprep.subr.mxu0 0.0
  %1550 = vmatpush1.xpose.msra.mxu0 0.0
  %1551 = vmatprep.subr.mxu0 0.0
  %1552 = vmatpush1.xpose.msra.mxu0 0.0
  %1553 = vmatprep.subr.mxu0 0.0
  %1554 = vmatpush1.xpose.msra.mxu0 0.0
  %1555 = vmatprep.subr.mxu0 0.0
  %1556 = vmatpush1.xpose.msra.mxu0 0.0
  %1557 = vmatprep.subr.mxu0 0.0
  %1558 = vmatpush1.xpose.msra.mxu0 0.0
  %1559 = vmatprep.subr.mxu0 0.0
  %1560 = vmatpush1.xpose.msra.mxu0 0.0
  %1561 = vmatprep.subr.mxu0 0.0
  %1562 = vmatpush1.xpose.msra.mxu0 0.0
  %1563 = vmatprep.subr.mxu0 0.0
  %1564 = vmatpush1.xpose.msra.mxu0 %v1531
  %1565 = vmatprep.subr.mxu0 0.0
  %1566 = vmatpush2.xpose.msra.mxu0 0.0
  %1567 = vmatprep.subr.mxu0 0.0
  %1568 = vmatpush2.xpose.msra.mxu0 0.0
  %1569 = vmatprep.subr.mxu0 0.0
  %1570 = vmatpush2.xpose.msra.mxu0 0.0
  %1571 = vmatprep.subr.mxu0 0.0
  %1572 = vmatpush2.xpose.msra.mxu0 0.0
  %1573 = vmatprep.subr.mxu0 0.0
  %1574 = vmatpush2.xpose.msra.mxu0 0.0
  %1575 = vmatprep.subr.mxu0 0.0
  %1576 = vmatpush2.xpose.msra.mxu0 0.0
  %1577 = vmatprep.subr.mxu0 0.0
  %1578 = vmatpush2.xpose.msra.mxu0 0.0
  %1579 = vmatprep.subr.mxu0 0.0
  %1580 = vmatpush2.xpose.msra.mxu0 0.0
  %1581 = vmatprep.subr.mxu0 0.0
  %1582 = vmatpush2.xpose.msra.mxu0 0.0
  %1583 = vmatprep.subr.mxu0 0.0
  %1584 = vmatpush2.xpose.msra.mxu0 0.0
  %1585 = vmatprep.subr.mxu0 0.0
  %1586 = vmatpush2.xpose.msra.mxu0 0.0
  %1587 = vmatprep.subr.mxu0 0.0
  %1588 = vmatpush2.xpose.msra.mxu0 0.0
  %1589 = vmatprep.subr.mxu0 0.0
  %1590 = vmatpush2.xpose.msra.mxu0 0.0
  %1591 = vmatprep.subr.mxu0 0.0
  %1592 = vmatpush2.xpose.msra.mxu0 0.0
  %1593 = vmatprep.subr.mxu0 0.0
  %1594 = vmatpush2.xpose.msra.mxu0 0.0
  %1595 = vmatprep.subr.mxu0 0.0
  %1596 = vmatpush2.xpose.msra.mxu0 0.0
  %1597 = vmatprep.mubr.f32.mxu0 0.0
  %1598 = vmatmul.mubr.f32.gmra.mxu0 %v1529
  %v1599 = vpop.f32.mrf.mxu0
  %v1600 = vadd.f32 0.0, %v1599
  %v1601 = vpop.f32.mrf.mxu0
  %1602 = vdwg.mxu0
  %1603 = vrot.lane.b32.xlu0 %v521, 104
  %v1604 = vpop.permute.xlu0 %1603
  %1605 = vrot.lane.b32.xlu0 %v521, 72
  %v1606 = vpop.permute.xlu0 %1605
  %v1607 = vsel %vm527, %v1604, 0
  %v1609 = vsel %vm527, %v1606, 0
  %1611 = vmatprep.subr.mxu0 0.0
  %1612 = vmatpush1.xpose.msra.mxu0 0.0
  %1613 = vmatprep.subr.mxu0 0.0
  %1614 = vmatpush1.xpose.msra.mxu0 0.0
  %1615 = vmatprep.subr.mxu0 0.0
  %1616 = vmatpush1.xpose.msra.mxu0 0.0
  %1617 = vmatprep.subr.mxu0 0.0
  %1618 = vmatpush1.xpose.msra.mxu0 0.0
  %1619 = vmatprep.subr.mxu0 0.0
  %1620 = vmatpush1.xpose.msra.mxu0 0.0
  %1621 = vmatprep.subr.mxu0 0.0
  %1622 = vmatpush1.xpose.msra.mxu0 0.0
  %1623 = vmatprep.subr.mxu0 0.0
  %1624 = vmatpush1.xpose.msra.mxu0 0.0
  %1625 = vmatprep.subr.mxu0 0.0
  %1626 = vmatpush1.xpose.msra.mxu0 0.0
  %1627 = vmatprep.subr.mxu0 0.0
  %1628 = vmatpush1.xpose.msra.mxu0 0.0
  %1629 = vmatprep.subr.mxu0 0.0
  %1630 = vmatpush1.xpose.msra.mxu0 0.0
  %1631 = vmatprep.subr.mxu0 0.0
  %1632 = vmatpush1.xpose.msra.mxu0 0.0
  %1633 = vmatprep.subr.mxu0 0.0
  %1634 = vmatpush1.xpose.msra.mxu0 0.0
  %1635 = vmatprep.subr.mxu0 0.0
  %1636 = vmatpush1.xpose.msra.mxu0 0.0
  %1637 = vmatprep.subr.mxu0 0.0
  %1638 = vmatpush1.xpose.msra.mxu0 0.0
  %1639 = vmatprep.subr.mxu0 0.0
  %1640 = vmatpush1.xpose.msra.mxu0 0.0
  %1641 = vmatprep.subr.mxu0 0.0
  %1642 = vmatpush1.xpose.msra.mxu0 %v1609
  %1643 = vmatprep.subr.mxu0 0.0
  %1644 = vmatpush2.xpose.msra.mxu0 0.0
  %1645 = vmatprep.subr.mxu0 0.0
  %1646 = vmatpush2.xpose.msra.mxu0 0.0
  %1647 = vmatprep.subr.mxu0 0.0
  %1648 = vmatpush2.xpose.msra.mxu0 0.0
  %1649 = vmatprep.subr.mxu0 0.0
  %1650 = vmatpush2.xpose.msra.mxu0 0.0
  %1651 = vmatprep.subr.mxu0 0.0
  %1652 = vmatpush2.xpose.msra.mxu0 0.0
  %1653 = vmatprep.subr.mxu0 0.0
  %1654 = vmatpush2.xpose.msra.mxu0 0.0
  %1655 = vmatprep.subr.mxu0 0.0
  %1656 = vmatpush2.xpose.msra.mxu0 0.0
  %1657 = vmatprep.subr.mxu0 0.0
  %1658 = vmatpush2.xpose.msra.mxu0 0.0
  %1659 = vmatprep.subr.mxu0 0.0
  %1660 = vmatpush2.xpose.msra.mxu0 0.0
  %1661 = vmatprep.subr.mxu0 0.0
  %1662 = vmatpush2.xpose.msra.mxu0 0.0
  %1663 = vmatprep.subr.mxu0 0.0
  %1664 = vmatpush2.xpose.msra.mxu0 0.0
  %1665 = vmatprep.subr.mxu0 0.0
  %1666 = vmatpush2.xpose.msra.mxu0 0.0
  %1667 = vmatprep.subr.mxu0 0.0
  %1668 = vmatpush2.xpose.msra.mxu0 0.0
  %1669 = vmatprep.subr.mxu0 0.0
  %1670 = vmatpush2.xpose.msra.mxu0 0.0
  %1671 = vmatprep.subr.mxu0 0.0
  %1672 = vmatpush2.xpose.msra.mxu0 0.0
  %1673 = vmatprep.subr.mxu0 0.0
  %1674 = vmatpush2.xpose.msra.mxu0 0.0
  %1675 = vmatprep.mubr.f32.mxu0 0.0
  %1676 = vmatmul.mubr.f32.gmra.mxu0 %v1607
  %v1677 = vpop.f32.mrf.mxu0
  %v1678 = vadd.f32 0.0, %v1677
  %v1679 = vpop.f32.mrf.mxu0
  %1680 = vdwg.mxu0
  %v1681 = vmul.f32 %v1600, 0.35355338
  %v1682 = vmul.f32 %v1678, 0.35355338
  %v1683 = vadd.f32 %v1681, %v366
  %v1684 = vadd.f32 %v1682, %v366
  %v1685 = vsel %vm527, %v1683, -inf
  %1686 = vmax.xlane.f32.xlu0 %v1685
  %v1687 = vpop.xlane.xlu0 %1686
  %v1688 = vsel %vm527, %v1684, -inf
  %1689 = vmax.xlane.f32.xlu0 %v1688
  %v1690 = vpop.xlane.xlu0 %1689
  %v1691 = vsub.f32 %v1683, %v1687
  %v1692 = vsub.f32 %v1684, %v1690
  %v1693 = vmul.f32 %v1691, 1.442695
  %v1694 = vpow.pop %v1693
  %v1695 = vmul.f32 %v1692, 1.442695
  %v1696 = vpow.pop %v1695
  %v1697 = vsel %vm527, %v1694, 0.0
  %1698 = vadd.xlane.f32.xlu0 %v1697
  %v1699 = vpop.xlane.xlu0 %1698
  %v1700 = vsel %vm527, %v1696, 0.0
  %1701 = vadd.xlane.f32.xlu0 %v1700
  %v1702 = vpop.xlane.xlu0 %1701
  %v1703 = vrcp.pop %v1699
  %v1704 = vrcp.pop %v1702
  %v1705 = vmul.f32 %v1694, %v1703
  %v1706 = vmul.f32 %v1696, %v1704
  %1707 = vrot.lane.b32.xlu0 %v516, 40
  %v1708 = vpop.permute.xlu0 %1707
  %v1711 = vsel %vm527, %v1705, 0
  %1713 = vmatprep.subr.mxu0 0.0
  %1714 = vmatpush1.msra.mxu0 0.0
  %1715 = vmatprep.subr.mxu0 0.0
  %1716 = vmatpush1.msra.mxu0 0.0
  %1717 = vmatprep.subr.mxu0 0.0
  %1718 = vmatpush1.msra.mxu0 0.0
  %1719 = vmatprep.subr.mxu0 0.0
  %1720 = vmatpush1.msra.mxu0 0.0
  %1721 = vmatprep.subr.mxu0 0.0
  %1722 = vmatpush1.msra.mxu0 0.0
  %1723 = vmatprep.subr.mxu0 0.0
  %1724 = vmatpush1.msra.mxu0 0.0
  %1725 = vmatprep.subr.mxu0 0.0
  %1726 = vmatpush1.msra.mxu0 0.0
  %1727 = vmatprep.subr.mxu0 0.0
  %1728 = vmatpush1.msra.mxu0 0.0
  %1729 = vmatprep.subr.mxu0 0.0
  %1730 = vmatpush1.msra.mxu0 0.0
  %1731 = vmatprep.subr.mxu0 0.0
  %1732 = vmatpush1.msra.mxu0 0.0
  %1733 = vmatprep.subr.mxu0 0.0
  %1734 = vmatpush1.msra.mxu0 0.0
  %1735 = vmatprep.subr.mxu0 0.0
  %1736 = vmatpush1.msra.mxu0 0.0
  %1737 = vmatprep.subr.mxu0 0.0
  %1738 = vmatpush1.msra.mxu0 0.0
  %1739 = vmatprep.subr.mxu0 0.0
  %1740 = vmatpush1.msra.mxu0 0.0
  %1741 = vmatprep.subr.mxu0 0.0
  %1742 = vmatpush1.msra.mxu0 0.0
  %1743 = vmatprep.subr.mxu0 0.0
  %1744 = vmatpush1.msra.mxu0 %v1708
  %1745 = vmatprep.subr.mxu0 0.0
  %1746 = vmatpush2.msra.mxu0 0.0
  %1747 = vmatprep.subr.mxu0 0.0
  %1748 = vmatpush2.msra.mxu0 0.0
  %1749 = vmatprep.subr.mxu0 0.0
  %1750 = vmatpush2.msra.mxu0 0.0
  %1751 = vmatprep.subr.mxu0 0.0
  %1752 = vmatpush2.msra.mxu0 0.0
  %1753 = vmatprep.subr.mxu0 0.0
  %1754 = vmatpush2.msra.mxu0 0.0
  %1755 = vmatprep.subr.mxu0 0.0
  %1756 = vmatpush2.msra.mxu0 0.0
  %1757 = vmatprep.subr.mxu0 0.0
  %1758 = vmatpush2.msra.mxu0 0.0
  %1759 = vmatprep.subr.mxu0 0.0
  %1760 = vmatpush2.msra.mxu0 0.0
  %1761 = vmatprep.subr.mxu0 0.0
  %1762 = vmatpush2.msra.mxu0 0.0
  %1763 = vmatprep.subr.mxu0 0.0
  %1764 = vmatpush2.msra.mxu0 0.0
  %1765 = vmatprep.subr.mxu0 0.0
  %1766 = vmatpush2.msra.mxu0 0.0
  %1767 = vmatprep.subr.mxu0 0.0
  %1768 = vmatpush2.msra.mxu0 0.0
  %1769 = vmatprep.subr.mxu0 0.0
  %1770 = vmatpush2.msra.mxu0 0.0
  %1771 = vmatprep.subr.mxu0 0.0
  %1772 = vmatpush2.msra.mxu0 0.0
  %1773 = vmatprep.subr.mxu0 0.0
  %1774 = vmatpush2.msra.mxu0 0.0
  %1775 = vmatprep.subr.mxu0 0.0
  %1776 = vmatpush2.msra.mxu0 0.0
  %1777 = vmatprep.mubr.f32.mxu0 0.0
  %1778 = vmatmul.mubr.f32.gmra.mxu0 %v1711
  %v1779 = vpop.f32.mrf.mxu0
  %v1780 = vadd.f32 0.0, %v1779
  %v1781 = vpop.f32.mrf.mxu0
  %1782 = vdwg.mxu0
  %1783 = vrot.lane.b32.xlu0 %v521, 40
  %v1784 = vpop.permute.xlu0 %1783
  %v1787 = vsel %vm527, %v1706, 0
  %1789 = vmatprep.subr.mxu0 0.0
  %1790 = vmatpush1.msra.mxu0 0.0
  %1791 = vmatprep.subr.mxu0 0.0
  %1792 = vmatpush1.msra.mxu0 0.0
  %1793 = vmatprep.subr.mxu0 0.0
  %1794 = vmatpush1.msra.mxu0 0.0
  %1795 = vmatprep.subr.mxu0 0.0
  %1796 = vmatpush1.msra.mxu0 0.0
  %1797 = vmatprep.subr.mxu0 0.0
  %1798 = vmatpush1.msra.mxu0 0.0
  %1799 = vmatprep.subr.mxu0 0.0
  %1800 = vmatpush1.msra.mxu0 0.0
  %1801 = vmatprep.subr.mxu0 0.0
  %1802 = vmatpush1.msra.mxu0 0.0
  %1803 = vmatprep.subr.mxu0 0.0
  %1804 = vmatpush1.msra.mxu0 0.0
  %1805 = vmatprep.subr.mxu0 0.0
  %1806 = vmatpush1.msra.mxu0 0.0
  %1807 = vmatprep.subr.mxu0 0.0
  %1808 = vmatpush1.msra.mxu0 0.0
  %1809 = vmatprep.subr.mxu0 0.0
  %1810 = vmatpush1.msra.mxu0 0.0
  %1811 = vmatprep.subr.mxu0 0.0
  %1812 = vmatpush1.msra.mxu0 0.0
  %1813 = vmatprep.subr.mxu0 0.0
  %1814 = vmatpush1.msra.mxu0 0.0
  %1815 = vmatprep.subr.mxu0 0.0
  %1816 = vmatpush1.msra.mxu0 0.0
  %1817 = vmatprep.subr.mxu0 0.0
  %1818 = vmatpush1.msra.mxu0 0.0
  %1819 = vmatprep.subr.mxu0 0.0
  %1820 = vmatpush1.msra.mxu0 %v1784
  %1821 = vmatprep.subr.mxu0 0.0
  %1822 = vmatpush2.msra.mxu0 0.0
  %1823 = vmatprep.subr.mxu0 0.0
  %1824 = vmatpush2.msra.mxu0 0.0
  %1825 = vmatprep.subr.mxu0 0.0
  %1826 = vmatpush2.msra.mxu0 0.0
  %1827 = vmatprep.subr.mxu0 0.0
  %1828 = vmatpush2.msra.mxu0 0.0
  %1829 = vmatprep.subr.mxu0 0.0
  %1830 = vmatpush2.msra.mxu0 0.0
  %1831 = vmatprep.subr.mxu0 0.0
  %1832 = vmatpush2.msra.mxu0 0.0
  %1833 = vmatprep.subr.mxu0 0.0
  %1834 = vmatpush2.msra.mxu0 0.0
  %1835 = vmatprep.subr.mxu0 0.0
  %1836 = vmatpush2.msra.mxu0 0.0
  %1837 = vmatprep.subr.mxu0 0.0
  %1838 = vmatpush2.msra.mxu0 0.0
  %1839 = vmatprep.subr.mxu0 0.0
  %1840 = vmatpush2.msra.mxu0 0.0
  %1841 = vmatprep.subr.mxu0 0.0
  %1842 = vmatpush2.msra.mxu0 0.0
  %1843 = vmatprep.subr.mxu0 0.0
  %1844 = vmatpush2.msra.mxu0 0.0
  %1845 = vmatprep.subr.mxu0 0.0
  %1846 = vmatpush2.msra.mxu0 0.0
  %1847 = vmatprep.subr.mxu0 0.0
  %1848 = vmatpush2.msra.mxu0 0.0
  %1849 = vmatprep.subr.mxu0 0.0
  %1850 = vmatpush2.msra.mxu0 0.0
  %1851 = vmatprep.subr.mxu0 0.0
  %1852 = vmatpush2.msra.mxu0 0.0
  %1853 = vmatprep.mubr.f32.mxu0 0.0
  %1854 = vmatmul.mubr.f32.gmra.mxu0 %v1787
  %v1855 = vpop.f32.mrf.mxu0
  %v1856 = vadd.f32 0.0, %v1855
  %v1857 = vpop.f32.mrf.mxu0
  %1858 = vdwg.mxu0
  %1861 = vrot.lane.b32.xlu0 %v1112, 8
  %v1862 = vpop.permute.xlu0 %1861
  %1863 = vrot.lane.b32.xlu0 %v1188, 8
  %v1864 = vpop.permute.xlu0 %1863
  %1869 = vrot.lane.b32.xlu0 %v1446, 16
  %v1870 = vpop.permute.xlu0 %1869
  %1871 = vrot.lane.b32.xlu0 %v1522, 16
  %v1872 = vpop.permute.xlu0 %1871
  %1877 = vrot.lane.b32.xlu0 %v1780, 24
  %v1878 = vpop.permute.xlu0 %1877
  %1879 = vrot.lane.b32.xlu0 %v1856, 24
  %v1880 = vpop.permute.xlu0 %1879
  %v1883 = vsel %vm527, %v778, %v1862
  %v1884 = vsel %vm527, %v854, %v1864
  %vm1885 = vcmask 130048
  %v1886 = vsel %vm1885, %v1883, %v1870
  %v1887 = vsel %vm1885, %v1884, %v1872
  %vm1888 = vcmask 195584
  %v1889 = vsel %vm1888, %v1886, %v1878
  %v1890 = vsel %vm1888, %v1887, %v1880
  %1895 = vrot.lane.b32.xlu0 %v375, 32
  %v1896 = vpop.permute.xlu0 %1895
  %1897 = vrot.lane.b32.xlu0 %v376, 32
  %v1898 = vpop.permute.xlu0 %1897
  %1899 = vrot.lane.b32.xlu0 %v377, 32
  %v1900 = vpop.permute.xlu0 %1899
  %1901 = vrot.lane.b32.xlu0 %v378, 32
  %v1902 = vpop.permute.xlu0 %1901
  %v1908 = vsel %vm399, %v1889, 0
  %v1911 = vsel %vm399, %v1890, 0
  %1913 = vmatprep.subr.mxu0 0.0
  %1914 = vmatpush1.msra.mxu0 0.0
  %1915 = vmatprep.subr.mxu0 0.0
  %1916 = vmatpush1.msra.mxu0 0.0
  %1917 = vmatprep.subr.mxu0 0.0
  %1918 = vmatpush1.msra.mxu0 0.0
  %1919 = vmatprep.subr.mxu0 0.0
  %1920 = vmatpush1.msra.mxu0 0.0
  %1921 = vmatprep.subr.mxu0 0.0
  %1922 = vmatpush1.msra.mxu0 0.0
  %1923 = vmatprep.subr.mxu0 0.0
  %1924 = vmatpush1.msra.mxu0 0.0
  %1925 = vmatprep.subr.mxu0 0.0
  %1926 = vmatpush1.msra.mxu0 0.0
  %1927 = vmatprep.subr.mxu0 0.0
  %1928 = vmatpush1.msra.mxu0 0.0
  %1929 = vmatprep.subr.mxu0 0.0
  %1930 = vmatpush1.msra.mxu0 0.0
  %1931 = vmatprep.subr.mxu0 0.0
  %1932 = vmatpush1.msra.mxu0 0.0
  %1933 = vmatprep.subr.mxu0 0.0
  %1934 = vmatpush1.msra.mxu0 0.0
  %1935 = vmatprep.subr.mxu0 0.0
  %1936 = vmatpush1.msra.mxu0 0.0
  %1937 = vmatprep.subr.mxu0 0.0
  %1938 = vmatpush1.msra.mxu0 %v1902
  %1939 = vmatprep.subr.mxu0 0.0
  %1940 = vmatpush1.msra.mxu0 %v1900
  %1941 = vmatprep.subr.mxu0 0.0
  %1942 = vmatpush1.msra.mxu0 %v1898
  %1943 = vmatprep.subr.mxu0 0.0
  %1944 = vmatpush1.msra.mxu0 %v1896
  %1945 = vmatprep.subr.mxu0 0.0
  %1946 = vmatpush2.msra.mxu0 0.0
  %1947 = vmatprep.subr.mxu0 0.0
  %1948 = vmatpush2.msra.mxu0 0.0
  %1949 = vmatprep.subr.mxu0 0.0
  %1950 = vmatpush2.msra.mxu0 0.0
  %1951 = vmatprep.subr.mxu0 0.0
  %1952 = vmatpush2.msra.mxu0 0.0
  %1953 = vmatprep.subr.mxu0 0.0
  %1954 = vmatpush2.msra.mxu0 0.0
  %1955 = vmatprep.subr.mxu0 0.0
  %1956 = vmatpush2.msra.mxu0 0.0
  %1957 = vmatprep.subr.mxu0 0.0
  %1958 = vmatpush2.msra.mxu0 0.0
  %1959 = vmatprep.subr.mxu0 0.0
  %1960 = vmatpush2.msra.mxu0 0.0
  %1961 = vmatprep.subr.mxu0 0.0
  %1962 = vmatpush2.msra.mxu0 0.0
  %1963 = vmatprep.subr.mxu0 0.0
  %1964 = vmatpush2.msra.mxu0 0.0
  %1965 = vmatprep.subr.mxu0 0.0
  %1966 = vmatpush2.msra.mxu0 0.0
  %1967 = vmatprep.subr.mxu0 0.0
  %1968 = vmatpush2.msra.mxu0 0.0
  %1969 = vmatprep.subr.mxu0 0.0
  %1970 = vmatpush2.msra.mxu0 0.0
  %1971 = vmatprep.subr.mxu0 0.0
  %1972 = vmatpush2.msra.mxu0 0.0
  %1973 = vmatprep.subr.mxu0 0.0
  %1974 = vmatpush2.msra.mxu0 0.0
  %1975 = vmatprep.subr.mxu0 0.0
  %1976 = vmatpush2.msra.mxu0 0.0
  %1977 = vmatprep.mubr.f32.mxu0 0.0
  %1978 = vmatmul.mubr.f32.gmra.mxu0 %v1908
  %v1979 = vpop.f32.mrf.mxu0
  %v1980 = vadd.f32 0.0, %v1979
  %v1981 = vpop.f32.mrf.mxu0
  %1982 = vmatprep.mubr.f32.mxu0 0.0
  %1983 = vmatmul.mubr.f32.gmra.mxu0 %v1911
  %v1984 = vpop.f32.mrf.mxu0
  %v1985 = vadd.f32 0.0, %v1984
  %v1986 = vpop.f32.mrf.mxu0
  %1987 = vdwg.mxu0
  %v1988 = vadd.f32 %v361, %v1980
  %v1989 = vadd.f32 %v362, %v1985
  %v1990 = vlaneseq
  %v1991 = vshrl.u32 %v1990, 7
  %v1992 = vsub.s32 0, %v1991
  %v1993 = vrot.slane %v370, %v1992
  %v1994 = vadd.f32 %v1988, %v1993
  %v1995 = vadd.f32 %v1989, %v1993
  %v1996 = vsel %vm399, %v1994, 0.0
  %1997 = vadd.xlane.f32.xlu0 %v1996
  %v1998 = vpop.xlane.xlu0 %1997
  %v1999 = vsel %vm399, %v1995, 0.0
  %2000 = vadd.xlane.f32.xlu0 %v1999
  %v2001 = vpop.xlane.xlu0 %2000
  %v2002 = vmul.f32 %v1998, %v406
  %v2003 = vmul.f32 %v2001, %v406
  %v2004 = vsub.f32 %v1994, %v2002
  %v2005 = vsub.f32 %v1995, %v2003
  %v2006 = vmul.f32 %v2004, %v2004
  %v2007 = vmul.f32 %v2005, %v2005
  %v2008 = vsel %vm399, %v2006, 0.0
  %2009 = vadd.xlane.f32.xlu0 %v2008
  %v2010 = vpop.xlane.xlu0 %2009
  %v2011 = vsel %vm399, %v2007, 0.0
  %2012 = vadd.xlane.f32.xlu0 %v2011
  %v2013 = vpop.xlane.xlu0 %2012
  %v2014 = vmul.f32 %v2010, %v406
  %v2015 = vmul.f32 %v2013, %v406
  %v2016 = vadd.f32 %v2014, 1e-06
  %v2017 = vadd.f32 %v2015, 1e-06
  %v2018 = vrsqrt.pop %v2016
  %v2019 = vrsqrt.pop %v2017
  %v2020 = vmul.f32 %v2004, %v2018
  %v2021 = vmul.f32 %v2005, %v2019
  %v2022 = vlaneseq
  %v2023 = vshrl.u32 %v2022, 7
  %v2024 = vsub.s32 0, %v2023
  %v2025 = vrot.slane %v371, %v2024
  %v2026 = vmul.f32 %v2020, %v2025
  %v2027 = vmul.f32 %v2021, %v2025
  %v2028 = vlaneseq
  %v2029 = vshrl.u32 %v2028, 7
  %v2030 = vsub.s32 0, %v2029
  %v2031 = vrot.slane %v372, %v2030
  %v2032 = vadd.f32 %v2026, %v2031
  %v2033 = vadd.f32 %v2027, %v2031
  %v2034 = vlaneseq
  %v2035 = vshrl.u32 %v2034, 7
  %v2036 = vsub.s32 0, %v2035
  %v2037 = vrot.slane %v373, %v2036
  %v2039 = vsel %vm399, %v2032, 0
  %v2042 = vsel %vm399, %v2033, 0
  %2044 = vmatprep.subr.mxu0 0.0
  %2045 = vmatpush1.msra.mxu0 0.0
  %2046 = vmatprep.subr.mxu0 0.0
  %2047 = vmatpush1.msra.mxu0 0.0
  %2048 = vmatprep.subr.mxu0 0.0
  %2049 = vmatpush1.msra.mxu0 0.0
  %2050 = vmatprep.subr.mxu0 0.0
  %2051 = vmatpush1.msra.mxu0 0.0
  %2052 = vmatprep.subr.mxu0 0.0
  %2053 = vmatpush1.msra.mxu0 0.0
  %2054 = vmatprep.subr.mxu0 0.0
  %2055 = vmatpush1.msra.mxu0 0.0
  %2056 = vmatprep.subr.mxu0 0.0
  %2057 = vmatpush1.msra.mxu0 0.0
  %2058 = vmatprep.subr.mxu0 0.0
  %2059 = vmatpush1.msra.mxu0 0.0
  %2060 = vmatprep.subr.mxu0 0.0
  %2061 = vmatpush1.msra.mxu0 0.0
  %2062 = vmatprep.subr.mxu0 0.0
  %2063 = vmatpush1.msra.mxu0 0.0
  %2064 = vmatprep.subr.mxu0 0.0
  %2065 = vmatpush1.msra.mxu0 0.0
  %2066 = vmatprep.subr.mxu0 0.0
  %2067 = vmatpush1.msra.mxu0 0.0
  %2068 = vmatprep.subr.mxu0 0.0
  %2069 = vmatpush1.msra.mxu0 %v382
  %2070 = vmatprep.subr.mxu0 0.0
  %2071 = vmatpush1.msra.mxu0 %v381
  %2072 = vmatprep.subr.mxu0 0.0
  %2073 = vmatpush1.msra.mxu0 %v380
  %2074 = vmatprep.subr.mxu0 0.0
  %2075 = vmatpush1.msra.mxu0 %v379
  %2076 = vmatprep.subr.mxu0 0.0
  %2077 = vmatpush2.msra.mxu0 0.0
  %2078 = vmatprep.subr.mxu0 0.0
  %2079 = vmatpush2.msra.mxu0 0.0
  %2080 = vmatprep.subr.mxu0 0.0
  %2081 = vmatpush2.msra.mxu0 0.0
  %2082 = vmatprep.subr.mxu0 0.0
  %2083 = vmatpush2.msra.mxu0 0.0
  %2084 = vmatprep.subr.mxu0 0.0
  %2085 = vmatpush2.msra.mxu0 0.0
  %2086 = vmatprep.subr.mxu0 0.0
  %2087 = vmatpush2.msra.mxu0 0.0
  %2088 = vmatprep.subr.mxu0 0.0
  %2089 = vmatpush2.msra.mxu0 0.0
  %2090 = vmatprep.subr.mxu0 0.0
  %2091 = vmatpush2.msra.mxu0 0.0
  %2092 = vmatprep.subr.mxu0 0.0
  %2093 = vmatpush2.msra.mxu0 0.0
  %2094 = vmatprep.subr.mxu0 0.0
  %2095 = vmatpush2.msra.mxu0 0.0
  %2096 = vmatprep.subr.mxu0 0.0
  %2097 = vmatpush2.msra.mxu0 0.0
  %2098 = vmatprep.subr.mxu0 0.0
  %2099 = vmatpush2.msra.mxu0 0.0
  %2100 = vmatprep.subr.mxu0 0.0
  %2101 = vmatpush2.msra.mxu0 0.0
  %2102 = vmatprep.subr.mxu0 0.0
  %2103 = vmatpush2.msra.mxu0 0.0
  %2104 = vmatprep.subr.mxu0 0.0
  %2105 = vmatpush2.msra.mxu0 0.0
  %2106 = vmatprep.subr.mxu0 0.0
  %2107 = vmatpush2.msra.mxu0 0.0
  %2108 = vmatprep.mubr.f32.mxu0 0.0
  %2109 = vmatmul.mubr.f32.gmra.mxu0 %v2039
  %v2110 = vpop.f32.mrf.mxu0
  %v2111 = vadd.f32 %v2037, %v2110
  %v2112 = vpop.f32.mrf.mxu0
  %2113 = vmatprep.mubr.f32.mxu0 0.0
  %2114 = vmatmul.mubr.f32.gmra.mxu0 %v2042
  %v2115 = vpop.f32.mrf.mxu0
  %v2116 = vadd.f32 %v2037, %v2115
  %v2117 = vpop.f32.mrf.mxu0
  %2118 = vdwg.mxu0
  %v2119 = vmul.f32 %v2111, 0.5
  %v2120 = vmul.f32 %v2116, 0.5
  %v2121 = vmul.f32 %v2111, 0.70710677
  %v2122 = vmul.f32 %v2116, 0.70710677
  %v2123 = verf.f32.pop %v2121
  %v2124 = verf.f32.pop %v2122
  %v2125 = vadd.f32 %v2123, 1.0
  %v2126 = vadd.f32 %v2124, 1.0
  %v2127 = vmul.f32 %v2119, %v2125
  %v2128 = vmul.f32 %v2120, %v2126
  %2129 = vmatprep.subr.mxu0 0.0
  %2130 = vmatpush1.msra.mxu0 %v398
  %2131 = vmatprep.subr.mxu0 0.0
  %2132 = vmatpush1.msra.mxu0 %v397
  %2133 = vmatprep.subr.mxu0 0.0
  %2134 = vmatpush1.msra.mxu0 %v396
  %2135 = vmatprep.subr.mxu0 0.0
  %2136 = vmatpush1.msra.mxu0 %v395
  %2137 = vmatprep.subr.mxu0 0.0
  %2138 = vmatpush1.msra.mxu0 %v394
  %2139 = vmatprep.subr.mxu0 0.0
  %2140 = vmatpush1.msra.mxu0 %v393
  %2141 = vmatprep.subr.mxu0 0.0
  %2142 = vmatpush1.msra.mxu0 %v392
  %2143 = vmatprep.subr.mxu0 0.0
  %2144 = vmatpush1.msra.mxu0 %v391
  %2145 = vmatprep.subr.mxu0 0.0
  %2146 = vmatpush1.msra.mxu0 %v390
  %2147 = vmatprep.subr.mxu0 0.0
  %2148 = vmatpush1.msra.mxu0 %v389
  %2149 = vmatprep.subr.mxu0 0.0
  %2150 = vmatpush1.msra.mxu0 %v388
  %2151 = vmatprep.subr.mxu0 0.0
  %2152 = vmatpush1.msra.mxu0 %v387
  %2153 = vmatprep.subr.mxu0 0.0
  %2154 = vmatpush1.msra.mxu0 %v386
  %2155 = vmatprep.subr.mxu0 0.0
  %2156 = vmatpush1.msra.mxu0 %v385
  %2157 = vmatprep.subr.mxu0 0.0
  %2158 = vmatpush1.msra.mxu0 %v384
  %2159 = vmatprep.subr.mxu0 0.0
  %2160 = vmatpush1.msra.mxu0 %v383
  %2161 = vmatprep.subr.mxu0 0.0
  %2162 = vmatpush2.msra.mxu0 0.0
  %2163 = vmatprep.subr.mxu0 0.0
  %2164 = vmatpush2.msra.mxu0 0.0
  %2165 = vmatprep.subr.mxu0 0.0
  %2166 = vmatpush2.msra.mxu0 0.0
  %2167 = vmatprep.subr.mxu0 0.0
  %2168 = vmatpush2.msra.mxu0 0.0
  %2169 = vmatprep.subr.mxu0 0.0
  %2170 = vmatpush2.msra.mxu0 0.0
  %2171 = vmatprep.subr.mxu0 0.0
  %2172 = vmatpush2.msra.mxu0 0.0
  %2173 = vmatprep.subr.mxu0 0.0
  %2174 = vmatpush2.msra.mxu0 0.0
  %2175 = vmatprep.subr.mxu0 0.0
  %2176 = vmatpush2.msra.mxu0 0.0
  %2177 = vmatprep.subr.mxu0 0.0
  %2178 = vmatpush2.msra.mxu0 0.0
  %2179 = vmatprep.subr.mxu0 0.0
  %2180 = vmatpush2.msra.mxu0 0.0
  %2181 = vmatprep.subr.mxu0 0.0
  %2182 = vmatpush2.msra.mxu0 0.0
  %2183 = vmatprep.subr.mxu0 0.0
  %2184 = vmatpush2.msra.mxu0 0.0
  %2185 = vmatprep.subr.mxu0 0.0
  %2186 = vmatpush2.msra.mxu0 0.0
  %2187 = vmatprep.subr.mxu0 0.0
  %2188 = vmatpush2.msra.mxu0 0.0
  %2189 = vmatprep.subr.mxu0 0.0
  %2190 = vmatpush2.msra.mxu0 0.0
  %2191 = vmatprep.subr.mxu0 0.0
  %2192 = vmatpush2.msra.mxu0 0.0
  %2193 = vmatprep.mubr.f32.mxu0 0.0
  %2194 = vmatmul.mubr.f32.gmra.mxu0 %v2127
  %v2195 = vpop.f32.mrf.mxu0
  %v2196 = vadd.f32 0.0, %v2195
  %v2197 = vpop.f32.mrf.mxu0
  %2198 = vmatprep.mubr.f32.mxu0 0.0
  %2199 = vmatmul.mubr.f32.gmra.mxu0 %v2128
  %v2200 = vpop.f32.mrf.mxu0
  %v2201 = vadd.f32 0.0, %v2200
  %v2202 = vpop.f32.mrf.mxu0
  %2203 = vdwg.mxu0
  %v2204 = vadd.f32 %v1994, %v2196
  %v2205 = vadd.f32 %v1995, %v2201
  %v2206 = vlaneseq
  %v2207 = vshrl.u32 %v2206, 7
  %v2208 = vsub.s32 0, %v2207
  %v2209 = vrot.slane %v374, %v2208
  %v2210 = vadd.f32 %v2204, %v2209
  %v2211 = vadd.f32 %v2205, %v2209
  %v2212 = vld [vmem:[%s3 + $0xb] sm:$0x1]
  %v2213 = vld [vmem:[%s3 + $0xc] sm:$0x1]
  %v2214 = vld [vmem:[%s3 + $0xd] sm:$0x1]
  %v2215 = vld [vmem:[%s3 + $0xe] sm:$0x1]
  %v2216 = vld [vmem:[%s3 + $0xf] sm:$0x1]
  %v2217 = vld [vmem:[%s3 + $0x10] sm:$0x1]
  %v2218 = vld [vmem:[%s3 + $0x11] sm:$0x1]
  %v2219 = vld [vmem:[%s3 + $0x12] sm:$0x1]
  %v2220 = vld [vmem:[%s4 + $0x40] sm:$0xff]
  %v2221 = vld [vmem:[%s4 + $0x50] sm:$0xff]
  %v2222 = vld [vmem:[%s4 + $0x60] sm:$0xff]
  %v2223 = vld [vmem:[%s4 + $0x70] sm:$0xff]
  %v2224 = vld [vmem:[%s4 + $0x48] sm:$0xff]
  %v2225 = vld [vmem:[%s4 + $0x58] sm:$0xff]
  %v2226 = vld [vmem:[%s4 + $0x68] sm:$0xff]
  %v2227 = vld [vmem:[%s4 + $0x78] sm:$0xff]
  %v2228 = vld [vmem:[%s5 + $0x80] sm:$0xff]
  %v2229 = vld [vmem:[%s5 + $0x88] sm:$0xff]
  %v2230 = vld [vmem:[%s5 + $0x90] sm:$0xff]
  %v2231 = vld [vmem:[%s5 + $0x98] sm:$0xff]
  %v2232 = vld [vmem:[%s5 + $0xa0] sm:$0xff]
  %v2233 = vld [vmem:[%s5 + $0xa8] sm:$0xff]
  %v2234 = vld [vmem:[%s5 + $0xb0] sm:$0xff]
  %v2235 = vld [vmem:[%s5 + $0xb8] sm:$0xff]
  %v2236 = vld [vmem:[%s5 + $0xc0] sm:$0xff]
  %v2237 = vld [vmem:[%s5 + $0xc8] sm:$0xff]
  %v2238 = vld [vmem:[%s5 + $0xd0] sm:$0xff]
  %v2239 = vld [vmem:[%s5 + $0xd8] sm:$0xff]
  %v2240 = vld [vmem:[%s5 + $0xe0] sm:$0xff]
  %v2241 = vld [vmem:[%s5 + $0xe8] sm:$0xff]
  %v2242 = vld [vmem:[%s5 + $0xf0] sm:$0xff]
  %v2243 = vld [vmem:[%s5 + $0xf8] sm:$0xff]
  %v2244 = vsel %vm399, %v2210, 0.0
  %2245 = vadd.xlane.f32.xlu0 %v2244
  %v2246 = vpop.xlane.xlu0 %2245
  %v2247 = vsel %vm399, %v2211, 0.0
  %2248 = vadd.xlane.f32.xlu0 %v2247
  %v2249 = vpop.xlane.xlu0 %2248
  %v2250 = vmul.f32 %v2246, %v406
  %v2251 = vmul.f32 %v2249, %v406
  %v2252 = vsub.f32 %v2210, %v2250
  %v2253 = vsub.f32 %v2211, %v2251
  %v2254 = vmul.f32 %v2252, %v2252
  %v2255 = vmul.f32 %v2253, %v2253
  %v2256 = vsel %vm399, %v2254, 0.0
  %2257 = vadd.xlane.f32.xlu0 %v2256
  %v2258 = vpop.xlane.xlu0 %2257
  %v2259 = vsel %vm399, %v2255, 0.0
  %2260 = vadd.xlane.f32.xlu0 %v2259
  %v2261 = vpop.xlane.xlu0 %2260
  %v2262 = vmul.f32 %v2258, %v406
  %v2263 = vmul.f32 %v2261, %v406
  %v2264 = vadd.f32 %v2262, 1e-06
  %v2265 = vadd.f32 %v2263, 1e-06
  %v2266 = vrsqrt.pop %v2264
  %v2267 = vrsqrt.pop %v2265
  %v2268 = vmul.f32 %v2252, %v2266
  %v2269 = vmul.f32 %v2253, %v2267
  %v2270 = vlaneseq
  %v2271 = vshrl.u32 %v2270, 7
  %v2272 = vsub.s32 0, %v2271
  %v2273 = vrot.slane %v2212, %v2272
  %v2274 = vmul.f32 %v2268, %v2273
  %v2275 = vmul.f32 %v2269, %v2273
  %v2276 = vlaneseq
  %v2277 = vshrl.u32 %v2276, 7
  %v2278 = vsub.s32 0, %v2277
  %v2279 = vrot.slane %v2213, %v2278
  %v2280 = vadd.f32 %v2274, %v2279
  %v2281 = vadd.f32 %v2275, %v2279
  %v2282 = vlaneseq
  %v2283 = vshrl.u32 %v2282, 7
  %v2284 = vsub.s32 0, %v2283
  %v2285 = vrot.slane %v2214, %v2284
  %v2287 = vsel %vm399, %v2280, 0
  %v2290 = vsel %vm399, %v2281, 0
  %2292 = vmatprep.subr.mxu0 0.0
  %2293 = vmatpush1.msra.mxu0 0.0
  %2294 = vmatprep.subr.mxu0 0.0
  %2295 = vmatpush1.msra.mxu0 0.0
  %2296 = vmatprep.subr.mxu0 0.0
  %2297 = vmatpush1.msra.mxu0 0.0
  %2298 = vmatprep.subr.mxu0 0.0
  %2299 = vmatpush1.msra.mxu0 0.0
  %2300 = vmatprep.subr.mxu0 0.0
  %2301 = vmatpush1.msra.mxu0 0.0
  %2302 = vmatprep.subr.mxu0 0.0
  %2303 = vmatpush1.msra.mxu0 0.0
  %2304 = vmatprep.subr.mxu0 0.0
  %2305 = vmatpush1.msra.mxu0 0.0
  %2306 = vmatprep.subr.mxu0 0.0
  %2307 = vmatpush1.msra.mxu0 0.0
  %2308 = vmatprep.subr.mxu0 0.0
  %2309 = vmatpush1.msra.mxu0 0.0
  %2310 = vmatprep.subr.mxu0 0.0
  %2311 = vmatpush1.msra.mxu0 0.0
  %2312 = vmatprep.subr.mxu0 0.0
  %2313 = vmatpush1.msra.mxu0 0.0
  %2314 = vmatprep.subr.mxu0 0.0
  %2315 = vmatpush1.msra.mxu0 0.0
  %2316 = vmatprep.subr.mxu0 0.0
  %2317 = vmatpush1.msra.mxu0 %v2223
  %2318 = vmatprep.subr.mxu0 0.0
  %2319 = vmatpush1.msra.mxu0 %v2222
  %2320 = vmatprep.subr.mxu0 0.0
  %2321 = vmatpush1.msra.mxu0 %v2221
  %2322 = vmatprep.subr.mxu0 0.0
  %2323 = vmatpush1.msra.mxu0 %v2220
  %2324 = vmatprep.subr.mxu0 0.0
  %2325 = vmatpush2.msra.mxu0 0.0
  %2326 = vmatprep.subr.mxu0 0.0
  %2327 = vmatpush2.msra.mxu0 0.0
  %2328 = vmatprep.subr.mxu0 0.0
  %2329 = vmatpush2.msra.mxu0 0.0
  %2330 = vmatprep.subr.mxu0 0.0
  %2331 = vmatpush2.msra.mxu0 0.0
  %2332 = vmatprep.subr.mxu0 0.0
  %2333 = vmatpush2.msra.mxu0 0.0
  %2334 = vmatprep.subr.mxu0 0.0
  %2335 = vmatpush2.msra.mxu0 0.0
  %2336 = vmatprep.subr.mxu0 0.0
  %2337 = vmatpush2.msra.mxu0 0.0
  %2338 = vmatprep.subr.mxu0 0.0
  %2339 = vmatpush2.msra.mxu0 0.0
  %2340 = vmatprep.subr.mxu0 0.0
  %2341 = vmatpush2.msra.mxu0 0.0
  %2342 = vmatprep.subr.mxu0 0.0
  %2343 = vmatpush2.msra.mxu0 0.0
  %2344 = vmatprep.subr.mxu0 0.0
  %2345 = vmatpush2.msra.mxu0 0.0
  %2346 = vmatprep.subr.mxu0 0.0
  %2347 = vmatpush2.msra.mxu0 0.0
  %2348 = vmatprep.subr.mxu0 0.0
  %2349 = vmatpush2.msra.mxu0 0.0
  %2350 = vmatprep.subr.mxu0 0.0
  %2351 = vmatpush2.msra.mxu0 0.0
  %2352 = vmatprep.subr.mxu0 0.0
  %2353 = vmatpush2.msra.mxu0 0.0
  %2354 = vmatprep.subr.mxu0 0.0
  %2355 = vmatpush2.msra.mxu0 0.0
  %2356 = vmatprep.mubr.f32.mxu0 0.0
  %2357 = vmatmul.mubr.f32.gmra.mxu0 %v2287
  %v2358 = vpop.f32.mrf.mxu0
  %v2359 = vadd.f32 %v2285, %v2358
  %v2360 = vpop.f32.mrf.mxu0
  %2361 = vmatprep.mubr.f32.mxu0 0.0
  %2362 = vmatmul.mubr.f32.gmra.mxu0 %v2290
  %v2363 = vpop.f32.mrf.mxu0
  %v2364 = vadd.f32 %v2285, %v2363
  %v2365 = vpop.f32.mrf.mxu0
  %2366 = vdwg.mxu0
  %2368 = vrot.lane.b32.xlu0 %v2359, 96
  %v2369 = vpop.permute.xlu0 %2368
  %v2370 = vsel %vm527, %v2359, 0
  %v2372 = vsel %vm527, %v2369, 0
  %2374 = vmatprep.subr.mxu0 0.0
  %2375 = vmatpush1.xpose.msra.mxu0 0.0
  %2376 = vmatprep.subr.mxu0 0.0
  %2377 = vmatpush1.xpose.msra.mxu0 0.0
  %2378 = vmatprep.subr.mxu0 0.0
  %2379 = vmatpush1.xpose.msra.mxu0 0.0
  %2380 = vmatprep.subr.mxu0 0.0
  %2381 = vmatpush1.xpose.msra.mxu0 0.0
  %2382 = vmatprep.subr.mxu0 0.0
  %2383 = vmatpush1.xpose.msra.mxu0 0.0
  %2384 = vmatprep.subr.mxu0 0.0
  %2385 = vmatpush1.xpose.msra.mxu0 0.0
  %2386 = vmatprep.subr.mxu0 0.0
  %2387 = vmatpush1.xpose.msra.mxu0 0.0
  %2388 = vmatprep.subr.mxu0 0.0
  %2389 = vmatpush1.xpose.msra.mxu0 0.0
  %2390 = vmatprep.subr.mxu0 0.0
  %2391 = vmatpush1.xpose.msra.mxu0 0.0
  %2392 = vmatprep.subr.mxu0 0.0
  %2393 = vmatpush1.xpose.msra.mxu0 0.0
  %2394 = vmatprep.subr.mxu0 0.0
  %2395 = vmatpush1.xpose.msra.mxu0 0.0
  %2396 = vmatprep.subr.mxu0 0.0
  %2397 = vmatpush1.xpose.msra.mxu0 0.0
  %2398 = vmatprep.subr.mxu0 0.0
  %2399 = vmatpush1.xpose.msra.mxu0 0.0
  %2400 = vmatprep.subr.mxu0 0.0
  %2401 = vmatpush1.xpose.msra.mxu0 0.0
  %2402 = vmatprep.subr.mxu0 0.0
  %2403 = vmatpush1.xpose.msra.mxu0 0.0
  %2404 = vmatprep.subr.mxu0 0.0
  %2405 = vmatpush1.xpose.msra.mxu0 %v2372
  %2406 = vmatprep.subr.mxu0 0.0
  %2407 = vmatpush2.xpose.msra.mxu0 0.0
  %2408 = vmatprep.subr.mxu0 0.0
  %2409 = vmatpush2.xpose.msra.mxu0 0.0
  %2410 = vmatprep.subr.mxu0 0.0
  %2411 = vmatpush2.xpose.msra.mxu0 0.0
  %2412 = vmatprep.subr.mxu0 0.0
  %2413 = vmatpush2.xpose.msra.mxu0 0.0
  %2414 = vmatprep.subr.mxu0 0.0
  %2415 = vmatpush2.xpose.msra.mxu0 0.0
  %2416 = vmatprep.subr.mxu0 0.0
  %2417 = vmatpush2.xpose.msra.mxu0 0.0
  %2418 = vmatprep.subr.mxu0 0.0
  %2419 = vmatpush2.xpose.msra.mxu0 0.0
  %2420 = vmatprep.subr.mxu0 0.0
  %2421 = vmatpush2.xpose.msra.mxu0 0.0
  %2422 = vmatprep.subr.mxu0 0.0
  %2423 = vmatpush2.xpose.msra.mxu0 0.0
  %2424 = vmatprep.subr.mxu0 0.0
  %2425 = vmatpush2.xpose.msra.mxu0 0.0
  %2426 = vmatprep.subr.mxu0 0.0
  %2427 = vmatpush2.xpose.msra.mxu0 0.0
  %2428 = vmatprep.subr.mxu0 0.0
  %2429 = vmatpush2.xpose.msra.mxu0 0.0
  %2430 = vmatprep.subr.mxu0 0.0
  %2431 = vmatpush2.xpose.msra.mxu0 0.0
  %2432 = vmatprep.subr.mxu0 0.0
  %2433 = vmatpush2.xpose.msra.mxu0 0.0
  %2434 = vmatprep.subr.mxu0 0.0
  %2435 = vmatpush2.xpose.msra.mxu0 0.0
  %2436 = vmatprep.subr.mxu0 0.0
  %2437 = vmatpush2.xpose.msra.mxu0 0.0
  %2438 = vmatprep.mubr.f32.mxu0 0.0
  %2439 = vmatmul.mubr.f32.gmra.mxu0 %v2370
  %v2440 = vpop.f32.mrf.mxu0
  %v2441 = vadd.f32 0.0, %v2440
  %v2442 = vpop.f32.mrf.mxu0
  %2443 = vdwg.mxu0
  %2445 = vrot.lane.b32.xlu0 %v2364, 96
  %v2446 = vpop.permute.xlu0 %2445
  %v2447 = vsel %vm527, %v2364, 0
  %v2449 = vsel %vm527, %v2446, 0
  %2451 = vmatprep.subr.mxu0 0.0
  %2452 = vmatpush1.xpose.msra.mxu0 0.0
  %2453 = vmatprep.subr.mxu0 0.0
  %2454 = vmatpush1.xpose.msra.mxu0 0.0
  %2455 = vmatprep.subr.mxu0 0.0
  %2456 = vmatpush1.xpose.msra.mxu0 0.0
  %2457 = vmatprep.subr.mxu0 0.0
  %2458 = vmatpush1.xpose.msra.mxu0 0.0
  %2459 = vmatprep.subr.mxu0 0.0
  %2460 = vmatpush1.xpose.msra.mxu0 0.0
  %2461 = vmatprep.subr.mxu0 0.0
  %2462 = vmatpush1.xpose.msra.mxu0 0.0
  %2463 = vmatprep.subr.mxu0 0.0
  %2464 = vmatpush1.xpose.msra.mxu0 0.0
  %2465 = vmatprep.subr.mxu0 0.0
  %2466 = vmatpush1.xpose.msra.mxu0 0.0
  %2467 = vmatprep.subr.mxu0 0.0
  %2468 = vmatpush1.xpose.msra.mxu0 0.0
  %2469 = vmatprep.subr.mxu0 0.0
  %2470 = vmatpush1.xpose.msra.mxu0 0.0
  %2471 = vmatprep.subr.mxu0 0.0
  %2472 = vmatpush1.xpose.msra.mxu0 0.0
  %2473 = vmatprep.subr.mxu0 0.0
  %2474 = vmatpush1.xpose.msra.mxu0 0.0
  %2475 = vmatprep.subr.mxu0 0.0
  %2476 = vmatpush1.xpose.msra.mxu0 0.0
  %2477 = vmatprep.subr.mxu0 0.0
  %2478 = vmatpush1.xpose.msra.mxu0 0.0
  %2479 = vmatprep.subr.mxu0 0.0
  %2480 = vmatpush1.xpose.msra.mxu0 0.0
  %2481 = vmatprep.subr.mxu0 0.0
  %2482 = vmatpush1.xpose.msra.mxu0 %v2449
  %2483 = vmatprep.subr.mxu0 0.0
  %2484 = vmatpush2.xpose.msra.mxu0 0.0
  %2485 = vmatprep.subr.mxu0 0.0
  %2486 = vmatpush2.xpose.msra.mxu0 0.0
  %2487 = vmatprep.subr.mxu0 0.0
  %2488 = vmatpush2.xpose.msra.mxu0 0.0
  %2489 = vmatprep.subr.mxu0 0.0
  %2490 = vmatpush2.xpose.msra.mxu0 0.0
  %2491 = vmatprep.subr.mxu0 0.0
  %2492 = vmatpush2.xpose.msra.mxu0 0.0
  %2493 = vmatprep.subr.mxu0 0.0
  %2494 = vmatpush2.xpose.msra.mxu0 0.0
  %2495 = vmatprep.subr.mxu0 0.0
  %2496 = vmatpush2.xpose.msra.mxu0 0.0
  %2497 = vmatprep.subr.mxu0 0.0
  %2498 = vmatpush2.xpose.msra.mxu0 0.0
  %2499 = vmatprep.subr.mxu0 0.0
  %2500 = vmatpush2.xpose.msra.mxu0 0.0
  %2501 = vmatprep.subr.mxu0 0.0
  %2502 = vmatpush2.xpose.msra.mxu0 0.0
  %2503 = vmatprep.subr.mxu0 0.0
  %2504 = vmatpush2.xpose.msra.mxu0 0.0
  %2505 = vmatprep.subr.mxu0 0.0
  %2506 = vmatpush2.xpose.msra.mxu0 0.0
  %2507 = vmatprep.subr.mxu0 0.0
  %2508 = vmatpush2.xpose.msra.mxu0 0.0
  %2509 = vmatprep.subr.mxu0 0.0
  %2510 = vmatpush2.xpose.msra.mxu0 0.0
  %2511 = vmatprep.subr.mxu0 0.0
  %2512 = vmatpush2.xpose.msra.mxu0 0.0
  %2513 = vmatprep.subr.mxu0 0.0
  %2514 = vmatpush2.xpose.msra.mxu0 0.0
  %2515 = vmatprep.mubr.f32.mxu0 0.0
  %2516 = vmatmul.mubr.f32.gmra.mxu0 %v2447
  %v2517 = vpop.f32.mrf.mxu0
  %v2518 = vadd.f32 0.0, %v2517
  %v2519 = vpop.f32.mrf.mxu0
  %2520 = vdwg.mxu0
  %v2521 = vmul.f32 %v2441, 0.35355338
  %v2522 = vmul.f32 %v2518, 0.35355338
  %v2523 = vadd.f32 %v2521, %v366
  %v2524 = vadd.f32 %v2522, %v366
  %v2525 = vsel %vm527, %v2523, -inf
  %2526 = vmax.xlane.f32.xlu0 %v2525
  %v2527 = vpop.xlane.xlu0 %2526
  %v2528 = vsel %vm527, %v2524, -inf
  %2529 = vmax.xlane.f32.xlu0 %v2528
  %v2530 = vpop.xlane.xlu0 %2529
  %v2531 = vsub.f32 %v2523, %v2527
  %v2532 = vsub.f32 %v2524, %v2530
  %v2533 = vmul.f32 %v2531, 1.442695
  %v2534 = vpow.pop %v2533
  %v2535 = vmul.f32 %v2532, 1.442695
  %v2536 = vpow.pop %v2535
  %v2537 = vsel %vm527, %v2534, 0.0
  %2538 = vadd.xlane.f32.xlu0 %v2537
  %v2539 = vpop.xlane.xlu0 %2538
  %v2540 = vsel %vm527, %v2536, 0.0
  %2541 = vadd.xlane.f32.xlu0 %v2540
  %v2542 = vpop.xlane.xlu0 %2541
  %v2543 = vrcp.pop %v2539
  %v2544 = vrcp.pop %v2542
  %v2545 = vmul.f32 %v2534, %v2543
  %v2546 = vmul.f32 %v2536, %v2544
  %2547 = vrot.lane.b32.xlu0 %v2359, 64
  %v2548 = vpop.permute.xlu0 %2547
  %v2551 = vsel %vm527, %v2545, 0
  %2553 = vmatprep.subr.mxu0 0.0
  %2554 = vmatpush1.msra.mxu0 0.0
  %2555 = vmatprep.subr.mxu0 0.0
  %2556 = vmatpush1.msra.mxu0 0.0
  %2557 = vmatprep.subr.mxu0 0.0
  %2558 = vmatpush1.msra.mxu0 0.0
  %2559 = vmatprep.subr.mxu0 0.0
  %2560 = vmatpush1.msra.mxu0 0.0
  %2561 = vmatprep.subr.mxu0 0.0
  %2562 = vmatpush1.msra.mxu0 0.0
  %2563 = vmatprep.subr.mxu0 0.0
  %2564 = vmatpush1.msra.mxu0 0.0
  %2565 = vmatprep.subr.mxu0 0.0
  %2566 = vmatpush1.msra.mxu0 0.0
  %2567 = vmatprep.subr.mxu0 0.0
  %2568 = vmatpush1.msra.mxu0 0.0
  %2569 = vmatprep.subr.mxu0 0.0
  %2570 = vmatpush1.msra.mxu0 0.0
  %2571 = vmatprep.subr.mxu0 0.0
  %2572 = vmatpush1.msra.mxu0 0.0
  %2573 = vmatprep.subr.mxu0 0.0
  %2574 = vmatpush1.msra.mxu0 0.0
  %2575 = vmatprep.subr.mxu0 0.0
  %2576 = vmatpush1.msra.mxu0 0.0
  %2577 = vmatprep.subr.mxu0 0.0
  %2578 = vmatpush1.msra.mxu0 0.0
  %2579 = vmatprep.subr.mxu0 0.0
  %2580 = vmatpush1.msra.mxu0 0.0
  %2581 = vmatprep.subr.mxu0 0.0
  %2582 = vmatpush1.msra.mxu0 0.0
  %2583 = vmatprep.subr.mxu0 0.0
  %2584 = vmatpush1.msra.mxu0 %v2548
  %2585 = vmatprep.subr.mxu0 0.0
  %2586 = vmatpush2.msra.mxu0 0.0
  %2587 = vmatprep.subr.mxu0 0.0
  %2588 = vmatpush2.msra.mxu0 0.0
  %2589 = vmatprep.subr.mxu0 0.0
  %2590 = vmatpush2.msra.mxu0 0.0
  %2591 = vmatprep.subr.mxu0 0.0
  %2592 = vmatpush2.msra.mxu0 0.0
  %2593 = vmatprep.subr.mxu0 0.0
  %2594 = vmatpush2.msra.mxu0 0.0
  %2595 = vmatprep.subr.mxu0 0.0
  %2596 = vmatpush2.msra.mxu0 0.0
  %2597 = vmatprep.subr.mxu0 0.0
  %2598 = vmatpush2.msra.mxu0 0.0
  %2599 = vmatprep.subr.mxu0 0.0
  %2600 = vmatpush2.msra.mxu0 0.0
  %2601 = vmatprep.subr.mxu0 0.0
  %2602 = vmatpush2.msra.mxu0 0.0
  %2603 = vmatprep.subr.mxu0 0.0
  %2604 = vmatpush2.msra.mxu0 0.0
  %2605 = vmatprep.subr.mxu0 0.0
  %2606 = vmatpush2.msra.mxu0 0.0
  %2607 = vmatprep.subr.mxu0 0.0
  %2608 = vmatpush2.msra.mxu0 0.0
  %2609 = vmatprep.subr.mxu0 0.0
  %2610 = vmatpush2.msra.mxu0 0.0
  %2611 = vmatprep.subr.mxu0 0.0
  %2612 = vmatpush2.msra.mxu0 0.0
  %2613 = vmatprep.subr.mxu0 0.0
  %2614 = vmatpush2.msra.mxu0 0.0
  %2615 = vmatprep.subr.mxu0 0.0
  %2616 = vmatpush2.msra.mxu0 0.0
  %2617 = vmatprep.mubr.f32.mxu0 0.0
  %2618 = vmatmul.mubr.f32.gmra.mxu0 %v2551
  %v2619 = vpop.f32.mrf.mxu0
  %v2620 = vadd.f32 0.0, %v2619
  %v2621 = vpop.f32.mrf.mxu0
  %2622 = vdwg.mxu0
  %2623 = vrot.lane.b32.xlu0 %v2364, 64
  %v2624 = vpop.permute.xlu0 %2623
  %v2627 = vsel %vm527, %v2546, 0
  %2629 = vmatprep.subr.mxu0 0.0
  %2630 = vmatpush1.msra.mxu0 0.0
  %2631 = vmatprep.subr.mxu0 0.0
  %2632 = vmatpush1.msra.mxu0 0.0
  %2633 = vmatprep.subr.mxu0 0.0
  %2634 = vmatpush1.msra.mxu0 0.0
  %2635 = vmatprep.subr.mxu0 0.0
  %2636 = vmatpush1.msra.mxu0 0.0
  %2637 = vmatprep.subr.mxu0 0.0
  %2638 = vmatpush1.msra.mxu0 0.0
  %2639 = vmatprep.subr.mxu0 0.0
  %2640 = vmatpush1.msra.mxu0 0.0
  %2641 = vmatprep.subr.mxu0 0.0
  %2642 = vmatpush1.msra.mxu0 0.0
  %2643 = vmatprep.subr.mxu0 0.0
  %2644 = vmatpush1.msra.mxu0 0.0
  %2645 = vmatprep.subr.mxu0 0.0
  %2646 = vmatpush1.msra.mxu0 0.0
  %2647 = vmatprep.subr.mxu0 0.0
  %2648 = vmatpush1.msra.mxu0 0.0
  %2649 = vmatprep.subr.mxu0 0.0
  %2650 = vmatpush1.msra.mxu0 0.0
  %2651 = vmatprep.subr.mxu0 0.0
  %2652 = vmatpush1.msra.mxu0 0.0
  %2653 = vmatprep.subr.mxu0 0.0
  %2654 = vmatpush1.msra.mxu0 0.0
  %2655 = vmatprep.subr.mxu0 0.0
  %2656 = vmatpush1.msra.mxu0 0.0
  %2657 = vmatprep.subr.mxu0 0.0
  %2658 = vmatpush1.msra.mxu0 0.0
  %2659 = vmatprep.subr.mxu0 0.0
  %2660 = vmatpush1.msra.mxu0 %v2624
  %2661 = vmatprep.subr.mxu0 0.0
  %2662 = vmatpush2.msra.mxu0 0.0
  %2663 = vmatprep.subr.mxu0 0.0
  %2664 = vmatpush2.msra.mxu0 0.0
  %2665 = vmatprep.subr.mxu0 0.0
  %2666 = vmatpush2.msra.mxu0 0.0
  %2667 = vmatprep.subr.mxu0 0.0
  %2668 = vmatpush2.msra.mxu0 0.0
  %2669 = vmatprep.subr.mxu0 0.0
  %2670 = vmatpush2.msra.mxu0 0.0
  %2671 = vmatprep.subr.mxu0 0.0
  %2672 = vmatpush2.msra.mxu0 0.0
  %2673 = vmatprep.subr.mxu0 0.0
  %2674 = vmatpush2.msra.mxu0 0.0
  %2675 = vmatprep.subr.mxu0 0.0
  %2676 = vmatpush2.msra.mxu0 0.0
  %2677 = vmatprep.subr.mxu0 0.0
  %2678 = vmatpush2.msra.mxu0 0.0
  %2679 = vmatprep.subr.mxu0 0.0
  %2680 = vmatpush2.msra.mxu0 0.0
  %2681 = vmatprep.subr.mxu0 0.0
  %2682 = vmatpush2.msra.mxu0 0.0
  %2683 = vmatprep.subr.mxu0 0.0
  %2684 = vmatpush2.msra.mxu0 0.0
  %2685 = vmatprep.subr.mxu0 0.0
  %2686 = vmatpush2.msra.mxu0 0.0
  %2687 = vmatprep.subr.mxu0 0.0
  %2688 = vmatpush2.msra.mxu0 0.0
  %2689 = vmatprep.subr.mxu0 0.0
  %2690 = vmatpush2.msra.mxu0 0.0
  %2691 = vmatprep.subr.mxu0 0.0
  %2692 = vmatpush2.msra.mxu0 0.0
  %2693 = vmatprep.mubr.f32.mxu0 0.0
  %2694 = vmatmul.mubr.f32.gmra.mxu0 %v2627
  %v2695 = vpop.f32.mrf.mxu0
  %v2696 = vadd.f32 0.0, %v2695
  %v2697 = vpop.f32.mrf.mxu0
  %2698 = vdwg.mxu0
  %2699 = vrot.lane.b32.xlu0 %v2359, 120
  %v2700 = vpop.permute.xlu0 %2699
  %2701 = vrot.lane.b32.xlu0 %v2359, 88
  %v2702 = vpop.permute.xlu0 %2701
  %v2703 = vsel %vm527, %v2700, 0
  %v2705 = vsel %vm527, %v2702, 0
  %2707 = vmatprep.subr.mxu0 0.0
  %2708 = vmatpush1.xpose.msra.mxu0 0.0
  %2709 = vmatprep.subr.mxu0 0.0
  %2710 = vmatpush1.xpose.msra.mxu0 0.0
  %2711 = vmatprep.subr.mxu0 0.0
  %2712 = vmatpush1.xpose.msra.mxu0 0.0
  %2713 = vmatprep.subr.mxu0 0.0
  %2714 = vmatpush1.xpose.msra.mxu0 0.0
  %2715 = vmatprep.subr.mxu0 0.0
  %2716 = vmatpush1.xpose.msra.mxu0 0.0
  %2717 = vmatprep.subr.mxu0 0.0
  %2718 = vmatpush1.xpose.msra.mxu0 0.0
  %2719 = vmatprep.subr.mxu0 0.0
  %2720 = vmatpush1.xpose.msra.mxu0 0.0
  %2721 = vmatprep.subr.mxu0 0.0
  %2722 = vmatpush1.xpose.msra.mxu0 0.0
  %2723 = vmatprep.subr.mxu0 0.0
  %2724 = vmatpush1.xpose.msra.mxu0 0.0
  %2725 = vmatprep.subr.mxu0 0.0
  %2726 = vmatpush1.xpose.msra.mxu0 0.0
  %2727 = vmatprep.subr.mxu0 0.0
  %2728 = vmatpush1.xpose.msra.mxu0 0.0
  %2729 = vmatprep.subr.mxu0 0.0
  %2730 = vmatpush1.xpose.msra.mxu0 0.0
  %2731 = vmatprep.subr.mxu0 0.0
  %2732 = vmatpush1.xpose.msra.mxu0 0.0
  %2733 = vmatprep.subr.mxu0 0.0
  %2734 = vmatpush1.xpose.msra.mxu0 0.0
  %2735 = vmatprep.subr.mxu0 0.0
  %2736 = vmatpush1.xpose.msra.mxu0 0.0
  %2737 = vmatprep.subr.mxu0 0.0
  %2738 = vmatpush1.xpose.msra.mxu0 %v2705
  %2739 = vmatprep.subr.mxu0 0.0
  %2740 = vmatpush2.xpose.msra.mxu0 0.0
  %2741 = vmatprep.subr.mxu0 0.0
  %2742 = vmatpush2.xpose.msra.mxu0 0.0
  %2743 = vmatprep.subr.mxu0 0.0
  %2744 = vmatpush2.xpose.msra.mxu0 0.0
  %2745 = vmatprep.subr.mxu0 0.0
  %2746 = vmatpush2.xpose.msra.mxu0 0.0
  %2747 = vmatprep.subr.mxu0 0.0
  %2748 = vmatpush2.xpose.msra.mxu0 0.0
  %2749 = vmatprep.subr.mxu0 0.0
  %2750 = vmatpush2.xpose.msra.mxu0 0.0
  %2751 = vmatprep.subr.mxu0 0.0
  %2752 = vmatpush2.xpose.msra.mxu0 0.0
  %2753 = vmatprep.subr.mxu0 0.0
  %2754 = vmatpush2.xpose.msra.mxu0 0.0
  %2755 = vmatprep.subr.mxu0 0.0
  %2756 = vmatpush2.xpose.msra.mxu0 0.0
  %2757 = vmatprep.subr.mxu0 0.0
  %2758 = vmatpush2.xpose.msra.mxu0 0.0
  %2759 = vmatprep.subr.mxu0 0.0
  %2760 = vmatpush2.xpose.msra.mxu0 0.0
  %2761 = vmatprep.subr.mxu0 0.0
  %2762 = vmatpush2.xpose.msra.mxu0 0.0
  %2763 = vmatprep.subr.mxu0 0.0
  %2764 = vmatpush2.xpose.msra.mxu0 0.0
  %2765 = vmatprep.subr.mxu0 0.0
  %2766 = vmatpush2.xpose.msra.mxu0 0.0
  %2767 = vmatprep.subr.mxu0 0.0
  %2768 = vmatpush2.xpose.msra.mxu0 0.0
  %2769 = vmatprep.subr.mxu0 0.0
  %2770 = vmatpush2.xpose.msra.mxu0 0.0
  %2771 = vmatprep.mubr.f32.mxu0 0.0
  %2772 = vmatmul.mubr.f32.gmra.mxu0 %v2703
  %v2773 = vpop.f32.mrf.mxu0
  %v2774 = vadd.f32 0.0, %v2773
  %v2775 = vpop.f32.mrf.mxu0
  %2776 = vdwg.mxu0
  %2777 = vrot.lane.b32.xlu0 %v2364, 120
  %v2778 = vpop.permute.xlu0 %2777
  %2779 = vrot.lane.b32.xlu0 %v2364, 88
  %v2780 = vpop.permute.xlu0 %2779
  %v2781 = vsel %vm527, %v2778, 0
  %v2783 = vsel %vm527, %v2780, 0
  %2785 = vmatprep.subr.mxu0 0.0
  %2786 = vmatpush1.xpose.msra.mxu0 0.0
  %2787 = vmatprep.subr.mxu0 0.0
  %2788 = vmatpush1.xpose.msra.mxu0 0.0
  %2789 = vmatprep.subr.mxu0 0.0
  %2790 = vmatpush1.xpose.msra.mxu0 0.0
  %2791 = vmatprep.subr.mxu0 0.0
  %2792 = vmatpush1.xpose.msra.mxu0 0.0
  %2793 = vmatprep.subr.mxu0 0.0
  %2794 = vmatpush1.xpose.msra.mxu0 0.0
  %2795 = vmatprep.subr.mxu0 0.0
  %2796 = vmatpush1.xpose.msra.mxu0 0.0
  %2797 = vmatprep.subr.mxu0 0.0
  %2798 = vmatpush1.xpose.msra.mxu0 0.0
  %2799 = vmatprep.subr.mxu0 0.0
  %2800 = vmatpush1.xpose.msra.mxu0 0.0
  %2801 = vmatprep.subr.mxu0 0.0
  %2802 = vmatpush1.xpose.msra.mxu0 0.0
  %2803 = vmatprep.subr.mxu0 0.0
  %2804 = vmatpush1.xpose.msra.mxu0 0.0
  %2805 = vmatprep.subr.mxu0 0.0
  %2806 = vmatpush1.xpose.msra.mxu0 0.0
  %2807 = vmatprep.subr.mxu0 0.0
  %2808 = vmatpush1.xpose.msra.mxu0 0.0
  %2809 = vmatprep.subr.mxu0 0.0
  %2810 = vmatpush1.xpose.msra.mxu0 0.0
  %2811 = vmatprep.subr.mxu0 0.0
  %2812 = vmatpush1.xpose.msra.mxu0 0.0
  %2813 = vmatprep.subr.mxu0 0.0
  %2814 = vmatpush1.xpose.msra.mxu0 0.0
  %2815 = vmatprep.subr.mxu0 0.0
  %2816 = vmatpush1.xpose.msra.mxu0 %v2783
  %2817 = vmatprep.subr.mxu0 0.0
  %2818 = vmatpush2.xpose.msra.mxu0 0.0
  %2819 = vmatprep.subr.mxu0 0.0
  %2820 = vmatpush2.xpose.msra.mxu0 0.0
  %2821 = vmatprep.subr.mxu0 0.0
  %2822 = vmatpush2.xpose.msra.mxu0 0.0
  %2823 = vmatprep.subr.mxu0 0.0
  %2824 = vmatpush2.xpose.msra.mxu0 0.0
  %2825 = vmatprep.subr.mxu0 0.0
  %2826 = vmatpush2.xpose.msra.mxu0 0.0
  %2827 = vmatprep.subr.mxu0 0.0
  %2828 = vmatpush2.xpose.msra.mxu0 0.0
  %2829 = vmatprep.subr.mxu0 0.0
  %2830 = vmatpush2.xpose.msra.mxu0 0.0
  %2831 = vmatprep.subr.mxu0 0.0
  %2832 = vmatpush2.xpose.msra.mxu0 0.0
  %2833 = vmatprep.subr.mxu0 0.0
  %2834 = vmatpush2.xpose.msra.mxu0 0.0
  %2835 = vmatprep.subr.mxu0 0.0
  %2836 = vmatpush2.xpose.msra.mxu0 0.0
  %2837 = vmatprep.subr.mxu0 0.0
  %2838 = vmatpush2.xpose.msra.mxu0 0.0
  %2839 = vmatprep.subr.mxu0 0.0
  %2840 = vmatpush2.xpose.msra.mxu0 0.0
  %2841 = vmatprep.subr.mxu0 0.0
  %2842 = vmatpush2.xpose.msra.mxu0 0.0
  %2843 = vmatprep.subr.mxu0 0.0
  %2844 = vmatpush2.xpose.msra.mxu0 0.0
  %2845 = vmatprep.subr.mxu0 0.0
  %2846 = vmatpush2.xpose.msra.mxu0 0.0
  %2847 = vmatprep.subr.mxu0 0.0
  %2848 = vmatpush2.xpose.msra.mxu0 0.0
  %2849 = vmatprep.mubr.f32.mxu0 0.0
  %2850 = vmatmul.mubr.f32.gmra.mxu0 %v2781
  %v2851 = vpop.f32.mrf.mxu0
  %v2852 = vadd.f32 0.0, %v2851
  %v2853 = vpop.f32.mrf.mxu0
  %2854 = vdwg.mxu0
  %v2855 = vmul.f32 %v2774, 0.35355338
  %v2856 = vmul.f32 %v2852, 0.35355338
  %v2857 = vadd.f32 %v2855, %v366
  %v2858 = vadd.f32 %v2856, %v366
  %v2859 = vsel %vm527, %v2857, -inf
  %2860 = vmax.xlane.f32.xlu0 %v2859
  %v2861 = vpop.xlane.xlu0 %2860
  %v2862 = vsel %vm527, %v2858, -inf
  %2863 = vmax.xlane.f32.xlu0 %v2862
  %v2864 = vpop.xlane.xlu0 %2863
  %v2865 = vsub.f32 %v2857, %v2861
  %v2866 = vsub.f32 %v2858, %v2864
  %v2867 = vmul.f32 %v2865, 1.442695
  %v2868 = vpow.pop %v2867
  %v2869 = vmul.f32 %v2866, 1.442695
  %v2870 = vpow.pop %v2869
  %v2871 = vsel %vm527, %v2868, 0.0
  %2872 = vadd.xlane.f32.xlu0 %v2871
  %v2873 = vpop.xlane.xlu0 %2872
  %v2874 = vsel %vm527, %v2870, 0.0
  %2875 = vadd.xlane.f32.xlu0 %v2874
  %v2876 = vpop.xlane.xlu0 %2875
  %v2877 = vrcp.pop %v2873
  %v2878 = vrcp.pop %v2876
  %v2879 = vmul.f32 %v2868, %v2877
  %v2880 = vmul.f32 %v2870, %v2878
  %2881 = vrot.lane.b32.xlu0 %v2359, 56
  %v2882 = vpop.permute.xlu0 %2881
  %v2885 = vsel %vm527, %v2879, 0
  %2887 = vmatprep.subr.mxu0 0.0
  %2888 = vmatpush1.msra.mxu0 0.0
  %2889 = vmatprep.subr.mxu0 0.0
  %2890 = vmatpush1.msra.mxu0 0.0
  %2891 = vmatprep.subr.mxu0 0.0
  %2892 = vmatpush1.msra.mxu0 0.0
  %2893 = vmatprep.subr.mxu0 0.0
  %2894 = vmatpush1.msra.mxu0 0.0
  %2895 = vmatprep.subr.mxu0 0.0
  %2896 = vmatpush1.msra.mxu0 0.0
  %2897 = vmatprep.subr.mxu0 0.0
  %2898 = vmatpush1.msra.mxu0 0.0
  %2899 = vmatprep.subr.mxu0 0.0
  %2900 = vmatpush1.msra.mxu0 0.0
  %2901 = vmatprep.subr.mxu0 0.0
  %2902 = vmatpush1.msra.mxu0 0.0
  %2903 = vmatprep.subr.mxu0 0.0
  %2904 = vmatpush1.msra.mxu0 0.0
  %2905 = vmatprep.subr.mxu0 0.0
  %2906 = vmatpush1.msra.mxu0 0.0
  %2907 = vmatprep.subr.mxu0 0.0
  %2908 = vmatpush1.msra.mxu0 0.0
  %2909 = vmatprep.subr.mxu0 0.0
  %2910 = vmatpush1.msra.mxu0 0.0
  %2911 = vmatprep.subr.mxu0 0.0
  %2912 = vmatpush1.msra.mxu0 0.0
  %2913 = vmatprep.subr.mxu0 0.0
  %2914 = vmatpush1.msra.mxu0 0.0
  %2915 = vmatprep.subr.mxu0 0.0
  %2916 = vmatpush1.msra.mxu0 0.0
  %2917 = vmatprep.subr.mxu0 0.0
  %2918 = vmatpush1.msra.mxu0 %v2882
  %2919 = vmatprep.subr.mxu0 0.0
  %2920 = vmatpush2.msra.mxu0 0.0
  %2921 = vmatprep.subr.mxu0 0.0
  %2922 = vmatpush2.msra.mxu0 0.0
  %2923 = vmatprep.subr.mxu0 0.0
  %2924 = vmatpush2.msra.mxu0 0.0
  %2925 = vmatprep.subr.mxu0 0.0
  %2926 = vmatpush2.msra.mxu0 0.0
  %2927 = vmatprep.subr.mxu0 0.0
  %2928 = vmatpush2.msra.mxu0 0.0
  %2929 = vmatprep.subr.mxu0 0.0
  %2930 = vmatpush2.msra.mxu0 0.0
  %2931 = vmatprep.subr.mxu0 0.0
  %2932 = vmatpush2.msra.mxu0 0.0
  %2933 = vmatprep.subr.mxu0 0.0
  %2934 = vmatpush2.msra.mxu0 0.0
  %2935 = vmatprep.subr.mxu0 0.0
  %2936 = vmatpush2.msra.mxu0 0.0
  %2937 = vmatprep.subr.mxu0 0.0
  %2938 = vmatpush2.msra.mxu0 0.0
  %2939 = vmatprep.subr.mxu0 0.0
  %2940 = vmatpush2.msra.mxu0 0.0
  %2941 = vmatprep.subr.mxu0 0.0
  %2942 = vmatpush2.msra.mxu0 0.0
  %2943 = vmatprep.subr.mxu0 0.0
  %2944 = vmatpush2.msra.mxu0 0.0
  %2945 = vmatprep.subr.mxu0 0.0
  %2946 = vmatpush2.msra.mxu0 0.0
  %2947 = vmatprep.subr.mxu0 0.0
  %2948 = vmatpush2.msra.mxu0 0.0
  %2949 = vmatprep.subr.mxu0 0.0
  %2950 = vmatpush2.msra.mxu0 0.0
  %2951 = vmatprep.mubr.f32.mxu0 0.0
  %2952 = vmatmul.mubr.f32.gmra.mxu0 %v2885
  %v2953 = vpop.f32.mrf.mxu0
  %v2954 = vadd.f32 0.0, %v2953
  %v2955 = vpop.f32.mrf.mxu0
  %2956 = vdwg.mxu0
  %2957 = vrot.lane.b32.xlu0 %v2364, 56
  %v2958 = vpop.permute.xlu0 %2957
  %v2961 = vsel %vm527, %v2880, 0
  %2963 = vmatprep.subr.mxu0 0.0
  %2964 = vmatpush1.msra.mxu0 0.0
  %2965 = vmatprep.subr.mxu0 0.0
  %2966 = vmatpush1.msra.mxu0 0.0
  %2967 = vmatprep.subr.mxu0 0.0
  %2968 = vmatpush1.msra.mxu0 0.0
  %2969 = vmatprep.subr.mxu0 0.0
  %2970 = vmatpush1.msra.mxu0 0.0
  %2971 = vmatprep.subr.mxu0 0.0
  %2972 = vmatpush1.msra.mxu0 0.0
  %2973 = vmatprep.subr.mxu0 0.0
  %2974 = vmatpush1.msra.mxu0 0.0
  %2975 = vmatprep.subr.mxu0 0.0
  %2976 = vmatpush1.msra.mxu0 0.0
  %2977 = vmatprep.subr.mxu0 0.0
  %2978 = vmatpush1.msra.mxu0 0.0
  %2979 = vmatprep.subr.mxu0 0.0
  %2980 = vmatpush1.msra.mxu0 0.0
  %2981 = vmatprep.subr.mxu0 0.0
  %2982 = vmatpush1.msra.mxu0 0.0
  %2983 = vmatprep.subr.mxu0 0.0
  %2984 = vmatpush1.msra.mxu0 0.0
  %2985 = vmatprep.subr.mxu0 0.0
  %2986 = vmatpush1.msra.mxu0 0.0
  %2987 = vmatprep.subr.mxu0 0.0
  %2988 = vmatpush1.msra.mxu0 0.0
  %2989 = vmatprep.subr.mxu0 0.0
  %2990 = vmatpush1.msra.mxu0 0.0
  %2991 = vmatprep.subr.mxu0 0.0
  %2992 = vmatpush1.msra.mxu0 0.0
  %2993 = vmatprep.subr.mxu0 0.0
  %2994 = vmatpush1.msra.mxu0 %v2958
  %2995 = vmatprep.subr.mxu0 0.0
  %2996 = vmatpush2.msra.mxu0 0.0
  %2997 = vmatprep.subr.mxu0 0.0
  %2998 = vmatpush2.msra.mxu0 0.0
  %2999 = vmatprep.subr.mxu0 0.0
  %3000 = vmatpush2.msra.mxu0 0.0
  %3001 = vmatprep.subr.mxu0 0.0
  %3002 = vmatpush2.msra.mxu0 0.0
  %3003 = vmatprep.subr.mxu0 0.0
  %3004 = vmatpush2.msra.mxu0 0.0
  %3005 = vmatprep.subr.mxu0 0.0
  %3006 = vmatpush2.msra.mxu0 0.0
  %3007 = vmatprep.subr.mxu0 0.0
  %3008 = vmatpush2.msra.mxu0 0.0
  %3009 = vmatprep.subr.mxu0 0.0
  %3010 = vmatpush2.msra.mxu0 0.0
  %3011 = vmatprep.subr.mxu0 0.0
  %3012 = vmatpush2.msra.mxu0 0.0
  %3013 = vmatprep.subr.mxu0 0.0
  %3014 = vmatpush2.msra.mxu0 0.0
  %3015 = vmatprep.subr.mxu0 0.0
  %3016 = vmatpush2.msra.mxu0 0.0
  %3017 = vmatprep.subr.mxu0 0.0
  %3018 = vmatpush2.msra.mxu0 0.0
  %3019 = vmatprep.subr.mxu0 0.0
  %3020 = vmatpush2.msra.mxu0 0.0
  %3021 = vmatprep.subr.mxu0 0.0
  %3022 = vmatpush2.msra.mxu0 0.0
  %3023 = vmatprep.subr.mxu0 0.0
  %3024 = vmatpush2.msra.mxu0 0.0
  %3025 = vmatprep.subr.mxu0 0.0
  %3026 = vmatpush2.msra.mxu0 0.0
  %3027 = vmatprep.mubr.f32.mxu0 0.0
  %3028 = vmatmul.mubr.f32.gmra.mxu0 %v2961
  %v3029 = vpop.f32.mrf.mxu0
  %v3030 = vadd.f32 0.0, %v3029
  %v3031 = vpop.f32.mrf.mxu0
  %3032 = vdwg.mxu0
  %3033 = vrot.lane.b32.xlu0 %v2359, 112
  %v3034 = vpop.permute.xlu0 %3033
  %3035 = vrot.lane.b32.xlu0 %v2359, 80
  %v3036 = vpop.permute.xlu0 %3035
  %v3037 = vsel %vm527, %v3034, 0
  %v3039 = vsel %vm527, %v3036, 0
  %3041 = vmatprep.subr.mxu0 0.0
  %3042 = vmatpush1.xpose.msra.mxu0 0.0
  %3043 = vmatprep.subr.mxu0 0.0
  %3044 = vmatpush1.xpose.msra.mxu0 0.0
  %3045 = vmatprep.subr.mxu0 0.0
  %3046 = vmatpush1.xpose.msra.mxu0 0.0
  %3047 = vmatprep.subr.mxu0 0.0
  %3048 = vmatpush1.xpose.msra.mxu0 0.0
  %3049 = vmatprep.subr.mxu0 0.0
  %3050 = vmatpush1.xpose.msra.mxu0 0.0
  %3051 = vmatprep.subr.mxu0 0.0
  %3052 = vmatpush1.xpose.msra.mxu0 0.0
  %3053 = vmatprep.subr.mxu0 0.0
  %3054 = vmatpush1.xpose.msra.mxu0 0.0
  %3055 = vmatprep.subr.mxu0 0.0
  %3056 = vmatpush1.xpose.msra.mxu0 0.0
  %3057 = vmatprep.subr.mxu0 0.0
  %3058 = vmatpush1.xpose.msra.mxu0 0.0
  %3059 = vmatprep.subr.mxu0 0.0
  %3060 = vmatpush1.xpose.msra.mxu0 0.0
  %3061 = vmatprep.subr.mxu0 0.0
  %3062 = vmatpush1.xpose.msra.mxu0 0.0
  %3063 = vmatprep.subr.mxu0 0.0
  %3064 = vmatpush1.xpose.msra.mxu0 0.0
  %3065 = vmatprep.subr.mxu0 0.0
  %3066 = vmatpush1.xpose.msra.mxu0 0.0
  %3067 = vmatprep.subr.mxu0 0.0
  %3068 = vmatpush1.xpose.msra.mxu0 0.0
  %3069 = vmatprep.subr.mxu0 0.0
  %3070 = vmatpush1.xpose.msra.mxu0 0.0
  %3071 = vmatprep.subr.mxu0 0.0
  %3072 = vmatpush1.xpose.msra.mxu0 %v3039
  %3073 = vmatprep.subr.mxu0 0.0
  %3074 = vmatpush2.xpose.msra.mxu0 0.0
  %3075 = vmatprep.subr.mxu0 0.0
  %3076 = vmatpush2.xpose.msra.mxu0 0.0
  %3077 = vmatprep.subr.mxu0 0.0
  %3078 = vmatpush2.xpose.msra.mxu0 0.0
  %3079 = vmatprep.subr.mxu0 0.0
  %3080 = vmatpush2.xpose.msra.mxu0 0.0
  %3081 = vmatprep.subr.mxu0 0.0
  %3082 = vmatpush2.xpose.msra.mxu0 0.0
  %3083 = vmatprep.subr.mxu0 0.0
  %3084 = vmatpush2.xpose.msra.mxu0 0.0
  %3085 = vmatprep.subr.mxu0 0.0
  %3086 = vmatpush2.xpose.msra.mxu0 0.0
  %3087 = vmatprep.subr.mxu0 0.0
  %3088 = vmatpush2.xpose.msra.mxu0 0.0
  %3089 = vmatprep.subr.mxu0 0.0
  %3090 = vmatpush2.xpose.msra.mxu0 0.0
  %3091 = vmatprep.subr.mxu0 0.0
  %3092 = vmatpush2.xpose.msra.mxu0 0.0
  %3093 = vmatprep.subr.mxu0 0.0
  %3094 = vmatpush2.xpose.msra.mxu0 0.0
  %3095 = vmatprep.subr.mxu0 0.0
  %3096 = vmatpush2.xpose.msra.mxu0 0.0
  %3097 = vmatprep.subr.mxu0 0.0
  %3098 = vmatpush2.xpose.msra.mxu0 0.0
  %3099 = vmatprep.subr.mxu0 0.0
  %3100 = vmatpush2.xpose.msra.mxu0 0.0
  %3101 = vmatprep.subr.mxu0 0.0
  %3102 = vmatpush2.xpose.msra.mxu0 0.0
  %3103 = vmatprep.subr.mxu0 0.0
  %3104 = vmatpush2.xpose.msra.mxu0 0.0
  %3105 = vmatprep.mubr.f32.mxu0 0.0
  %3106 = vmatmul.mubr.f32.gmra.mxu0 %v3037
  %v3107 = vpop.f32.mrf.mxu0
  %v3108 = vadd.f32 0.0, %v3107
  %v3109 = vpop.f32.mrf.mxu0
  %3110 = vdwg.mxu0
  %3111 = vrot.lane.b32.xlu0 %v2364, 112
  %v3112 = vpop.permute.xlu0 %3111
  %3113 = vrot.lane.b32.xlu0 %v2364, 80
  %v3114 = vpop.permute.xlu0 %3113
  %v3115 = vsel %vm527, %v3112, 0
  %v3117 = vsel %vm527, %v3114, 0
  %3119 = vmatprep.subr.mxu0 0.0
  %3120 = vmatpush1.xpose.msra.mxu0 0.0
  %3121 = vmatprep.subr.mxu0 0.0
  %3122 = vmatpush1.xpose.msra.mxu0 0.0
  %3123 = vmatprep.subr.mxu0 0.0
  %3124 = vmatpush1.xpose.msra.mxu0 0.0
  %3125 = vmatprep.subr.mxu0 0.0
  %3126 = vmatpush1.xpose.msra.mxu0 0.0
  %3127 = vmatprep.subr.mxu0 0.0
  %3128 = vmatpush1.xpose.msra.mxu0 0.0
  %3129 = vmatprep.subr.mxu0 0.0
  %3130 = vmatpush1.xpose.msra.mxu0 0.0
  %3131 = vmatprep.subr.mxu0 0.0
  %3132 = vmatpush1.xpose.msra.mxu0 0.0
  %3133 = vmatprep.subr.mxu0 0.0
  %3134 = vmatpush1.xpose.msra.mxu0 0.0
  %3135 = vmatprep.subr.mxu0 0.0
  %3136 = vmatpush1.xpose.msra.mxu0 0.0
  %3137 = vmatprep.subr.mxu0 0.0
  %3138 = vmatpush1.xpose.msra.mxu0 0.0
  %3139 = vmatprep.subr.mxu0 0.0
  %3140 = vmatpush1.xpose.msra.mxu0 0.0
  %3141 = vmatprep.subr.mxu0 0.0
  %3142 = vmatpush1.xpose.msra.mxu0 0.0
  %3143 = vmatprep.subr.mxu0 0.0
  %3144 = vmatpush1.xpose.msra.mxu0 0.0
  %3145 = vmatprep.subr.mxu0 0.0
  %3146 = vmatpush1.xpose.msra.mxu0 0.0
  %3147 = vmatprep.subr.mxu0 0.0
  %3148 = vmatpush1.xpose.msra.mxu0 0.0
  %3149 = vmatprep.subr.mxu0 0.0
  %3150 = vmatpush1.xpose.msra.mxu0 %v3117
  %3151 = vmatprep.subr.mxu0 0.0
  %3152 = vmatpush2.xpose.msra.mxu0 0.0
  %3153 = vmatprep.subr.mxu0 0.0
  %3154 = vmatpush2.xpose.msra.mxu0 0.0
  %3155 = vmatprep.subr.mxu0 0.0
  %3156 = vmatpush2.xpose.msra.mxu0 0.0
  %3157 = vmatprep.subr.mxu0 0.0
  %3158 = vmatpush2.xpose.msra.mxu0 0.0
  %3159 = vmatprep.subr.mxu0 0.0
  %3160 = vmatpush2.xpose.msra.mxu0 0.0
  %3161 = vmatprep.subr.mxu0 0.0
  %3162 = vmatpush2.xpose.msra.mxu0 0.0
  %3163 = vmatprep.subr.mxu0 0.0
  %3164 = vmatpush2.xpose.msra.mxu0 0.0
  %3165 = vmatprep.subr.mxu0 0.0
  %3166 = vmatpush2.xpose.msra.mxu0 0.0
  %3167 = vmatprep.subr.mxu0 0.0
  %3168 = vmatpush2.xpose.msra.mxu0 0.0
  %3169 = vmatprep.subr.mxu0 0.0
  %3170 = vmatpush2.xpose.msra.mxu0 0.0
  %3171 = vmatprep.subr.mxu0 0.0
  %3172 = vmatpush2.xpose.msra.mxu0 0.0
  %3173 = vmatprep.subr.mxu0 0.0
  %3174 = vmatpush2.xpose.msra.mxu0 0.0
  %3175 = vmatprep.subr.mxu0 0.0
  %3176 = vmatpush2.xpose.msra.mxu0 0.0
  %3177 = vmatprep.subr.mxu0 0.0
  %3178 = vmatpush2.xpose.msra.mxu0 0.0
  %3179 = vmatprep.subr.mxu0 0.0
  %3180 = vmatpush2.xpose.msra.mxu0 0.0
  %3181 = vmatprep.subr.mxu0 0.0
  %3182 = vmatpush2.xpose.msra.mxu0 0.0
  %3183 = vmatprep.mubr.f32.mxu0 0.0
  %3184 = vmatmul.mubr.f32.gmra.mxu0 %v3115
  %v3185 = vpop.f32.mrf.mxu0
  %v3186 = vadd.f32 0.0, %v3185
  %v3187 = vpop.f32.mrf.mxu0
  %3188 = vdwg.mxu0
  %v3189 = vmul.f32 %v3108, 0.35355338
  %v3190 = vmul.f32 %v3186, 0.35355338
  %v3191 = vadd.f32 %v3189, %v366
  %v3192 = vadd.f32 %v3190, %v366
  %v3193 = vsel %vm527, %v3191, -inf
  %3194 = vmax.xlane.f32.xlu0 %v3193
  %v3195 = vpop.xlane.xlu0 %3194
  %v3196 = vsel %vm527, %v3192, -inf
  %3197 = vmax.xlane.f32.xlu0 %v3196
  %v3198 = vpop.xlane.xlu0 %3197
  %v3199 = vsub.f32 %v3191, %v3195
  %v3200 = vsub.f32 %v3192, %v3198
  %v3201 = vmul.f32 %v3199, 1.442695
  %v3202 = vpow.pop %v3201
  %v3203 = vmul.f32 %v3200, 1.442695
  %v3204 = vpow.pop %v3203
  %v3205 = vsel %vm527, %v3202, 0.0
  %3206 = vadd.xlane.f32.xlu0 %v3205
  %v3207 = vpop.xlane.xlu0 %3206
  %v3208 = vsel %vm527, %v3204, 0.0
  %3209 = vadd.xlane.f32.xlu0 %v3208
  %v3210 = vpop.xlane.xlu0 %3209
  %v3211 = vrcp.pop %v3207
  %v3212 = vrcp.pop %v3210
  %v3213 = vmul.f32 %v3202, %v3211
  %v3214 = vmul.f32 %v3204, %v3212
  %3215 = vrot.lane.b32.xlu0 %v2359, 48
  %v3216 = vpop.permute.xlu0 %3215
  %v3219 = vsel %vm527, %v3213, 0
  %3221 = vmatprep.subr.mxu0 0.0
  %3222 = vmatpush1.msra.mxu0 0.0
  %3223 = vmatprep.subr.mxu0 0.0
  %3224 = vmatpush1.msra.mxu0 0.0
  %3225 = vmatprep.subr.mxu0 0.0
  %3226 = vmatpush1.msra.mxu0 0.0
  %3227 = vmatprep.subr.mxu0 0.0
  %3228 = vmatpush1.msra.mxu0 0.0
  %3229 = vmatprep.subr.mxu0 0.0
  %3230 = vmatpush1.msra.mxu0 0.0
  %3231 = vmatprep.subr.mxu0 0.0
  %3232 = vmatpush1.msra.mxu0 0.0
  %3233 = vmatprep.subr.mxu0 0.0
  %3234 = vmatpush1.msra.mxu0 0.0
  %3235 = vmatprep.subr.mxu0 0.0
  %3236 = vmatpush1.msra.mxu0 0.0
  %3237 = vmatprep.subr.mxu0 0.0
  %3238 = vmatpush1.msra.mxu0 0.0
  %3239 = vmatprep.subr.mxu0 0.0
  %3240 = vmatpush1.msra.mxu0 0.0
  %3241 = vmatprep.subr.mxu0 0.0
  %3242 = vmatpush1.msra.mxu0 0.0
  %3243 = vmatprep.subr.mxu0 0.0
  %3244 = vmatpush1.msra.mxu0 0.0
  %3245 = vmatprep.subr.mxu0 0.0
  %3246 = vmatpush1.msra.mxu0 0.0
  %3247 = vmatprep.subr.mxu0 0.0
  %3248 = vmatpush1.msra.mxu0 0.0
  %3249 = vmatprep.subr.mxu0 0.0
  %3250 = vmatpush1.msra.mxu0 0.0
  %3251 = vmatprep.subr.mxu0 0.0
  %3252 = vmatpush1.msra.mxu0 %v3216
  %3253 = vmatprep.subr.mxu0 0.0
  %3254 = vmatpush2.msra.mxu0 0.0
  %3255 = vmatprep.subr.mxu0 0.0
  %3256 = vmatpush2.msra.mxu0 0.0
  %3257 = vmatprep.subr.mxu0 0.0
  %3258 = vmatpush2.msra.mxu0 0.0
  %3259 = vmatprep.subr.mxu0 0.0
  %3260 = vmatpush2.msra.mxu0 0.0
  %3261 = vmatprep.subr.mxu0 0.0
  %3262 = vmatpush2.msra.mxu0 0.0
  %3263 = vmatprep.subr.mxu0 0.0
  %3264 = vmatpush2.msra.mxu0 0.0
  %3265 = vmatprep.subr.mxu0 0.0
  %3266 = vmatpush2.msra.mxu0 0.0
  %3267 = vmatprep.subr.mxu0 0.0
  %3268 = vmatpush2.msra.mxu0 0.0
  %3269 = vmatprep.subr.mxu0 0.0
  %3270 = vmatpush2.msra.mxu0 0.0
  %3271 = vmatprep.subr.mxu0 0.0
  %3272 = vmatpush2.msra.mxu0 0.0
  %3273 = vmatprep.subr.mxu0 0.0
  %3274 = vmatpush2.msra.mxu0 0.0
  %3275 = vmatprep.subr.mxu0 0.0
  %3276 = vmatpush2.msra.mxu0 0.0
  %3277 = vmatprep.subr.mxu0 0.0
  %3278 = vmatpush2.msra.mxu0 0.0
  %3279 = vmatprep.subr.mxu0 0.0
  %3280 = vmatpush2.msra.mxu0 0.0
  %3281 = vmatprep.subr.mxu0 0.0
  %3282 = vmatpush2.msra.mxu0 0.0
  %3283 = vmatprep.subr.mxu0 0.0
  %3284 = vmatpush2.msra.mxu0 0.0
  %3285 = vmatprep.mubr.f32.mxu0 0.0
  %3286 = vmatmul.mubr.f32.gmra.mxu0 %v3219
  %v3287 = vpop.f32.mrf.mxu0
  %v3288 = vadd.f32 0.0, %v3287
  %v3289 = vpop.f32.mrf.mxu0
  %3290 = vdwg.mxu0
  %3291 = vrot.lane.b32.xlu0 %v2364, 48
  %v3292 = vpop.permute.xlu0 %3291
  %v3295 = vsel %vm527, %v3214, 0
  %3297 = vmatprep.subr.mxu0 0.0
  %3298 = vmatpush1.msra.mxu0 0.0
  %3299 = vmatprep.subr.mxu0 0.0
  %3300 = vmatpush1.msra.mxu0 0.0
  %3301 = vmatprep.subr.mxu0 0.0
  %3302 = vmatpush1.msra.mxu0 0.0
  %3303 = vmatprep.subr.mxu0 0.0
  %3304 = vmatpush1.msra.mxu0 0.0
  %3305 = vmatprep.subr.mxu0 0.0
  %3306 = vmatpush1.msra.mxu0 0.0
  %3307 = vmatprep.subr.mxu0 0.0
  %3308 = vmatpush1.msra.mxu0 0.0
  %3309 = vmatprep.subr.mxu0 0.0
  %3310 = vmatpush1.msra.mxu0 0.0
  %3311 = vmatprep.subr.mxu0 0.0
  %3312 = vmatpush1.msra.mxu0 0.0
  %3313 = vmatprep.subr.mxu0 0.0
  %3314 = vmatpush1.msra.mxu0 0.0
  %3315 = vmatprep.subr.mxu0 0.0
  %3316 = vmatpush1.msra.mxu0 0.0
  %3317 = vmatprep.subr.mxu0 0.0
  %3318 = vmatpush1.msra.mxu0 0.0
  %3319 = vmatprep.subr.mxu0 0.0
  %3320 = vmatpush1.msra.mxu0 0.0
  %3321 = vmatprep.subr.mxu0 0.0
  %3322 = vmatpush1.msra.mxu0 0.0
  %3323 = vmatprep.subr.mxu0 0.0
  %3324 = vmatpush1.msra.mxu0 0.0
  %3325 = vmatprep.subr.mxu0 0.0
  %3326 = vmatpush1.msra.mxu0 0.0
  %3327 = vmatprep.subr.mxu0 0.0
  %3328 = vmatpush1.msra.mxu0 %v3292
  %3329 = vmatprep.subr.mxu0 0.0
  %3330 = vmatpush2.msra.mxu0 0.0
  %3331 = vmatprep.subr.mxu0 0.0
  %3332 = vmatpush2.msra.mxu0 0.0
  %3333 = vmatprep.subr.mxu0 0.0
  %3334 = vmatpush2.msra.mxu0 0.0
  %3335 = vmatprep.subr.mxu0 0.0
  %3336 = vmatpush2.msra.mxu0 0.0
  %3337 = vmatprep.subr.mxu0 0.0
  %3338 = vmatpush2.msra.mxu0 0.0
  %3339 = vmatprep.subr.mxu0 0.0
  %3340 = vmatpush2.msra.mxu0 0.0
  %3341 = vmatprep.subr.mxu0 0.0
  %3342 = vmatpush2.msra.mxu0 0.0
  %3343 = vmatprep.subr.mxu0 0.0
  %3344 = vmatpush2.msra.mxu0 0.0
  %3345 = vmatprep.subr.mxu0 0.0
  %3346 = vmatpush2.msra.mxu0 0.0
  %3347 = vmatprep.subr.mxu0 0.0
  %3348 = vmatpush2.msra.mxu0 0.0
  %3349 = vmatprep.subr.mxu0 0.0
  %3350 = vmatpush2.msra.mxu0 0.0
  %3351 = vmatprep.subr.mxu0 0.0
  %3352 = vmatpush2.msra.mxu0 0.0
  %3353 = vmatprep.subr.mxu0 0.0
  %3354 = vmatpush2.msra.mxu0 0.0
  %3355 = vmatprep.subr.mxu0 0.0
  %3356 = vmatpush2.msra.mxu0 0.0
  %3357 = vmatprep.subr.mxu0 0.0
  %3358 = vmatpush2.msra.mxu0 0.0
  %3359 = vmatprep.subr.mxu0 0.0
  %3360 = vmatpush2.msra.mxu0 0.0
  %3361 = vmatprep.mubr.f32.mxu0 0.0
  %3362 = vmatmul.mubr.f32.gmra.mxu0 %v3295
  %v3363 = vpop.f32.mrf.mxu0
  %v3364 = vadd.f32 0.0, %v3363
  %v3365 = vpop.f32.mrf.mxu0
  %3366 = vdwg.mxu0
  %3367 = vrot.lane.b32.xlu0 %v2359, 104
  %v3368 = vpop.permute.xlu0 %3367
  %3369 = vrot.lane.b32.xlu0 %v2359, 72
  %v3370 = vpop.permute.xlu0 %3369
  %v3371 = vsel %vm527, %v3368, 0
  %v3373 = vsel %vm527, %v3370, 0
  %3375 = vmatprep.subr.mxu0 0.0
  %3376 = vmatpush1.xpose.msra.mxu0 0.0
  %3377 = vmatprep.subr.mxu0 0.0
  %3378 = vmatpush1.xpose.msra.mxu0 0.0
  %3379 = vmatprep.subr.mxu0 0.0
  %3380 = vmatpush1.xpose.msra.mxu0 0.0
  %3381 = vmatprep.subr.mxu0 0.0
  %3382 = vmatpush1.xpose.msra.mxu0 0.0
  %3383 = vmatprep.subr.mxu0 0.0
  %3384 = vmatpush1.xpose.msra.mxu0 0.0
  %3385 = vmatprep.subr.mxu0 0.0
  %3386 = vmatpush1.xpose.msra.mxu0 0.0
  %3387 = vmatprep.subr.mxu0 0.0
  %3388 = vmatpush1.xpose.msra.mxu0 0.0
  %3389 = vmatprep.subr.mxu0 0.0
  %3390 = vmatpush1.xpose.msra.mxu0 0.0
  %3391 = vmatprep.subr.mxu0 0.0
  %3392 = vmatpush1.xpose.msra.mxu0 0.0
  %3393 = vmatprep.subr.mxu0 0.0
  %3394 = vmatpush1.xpose.msra.mxu0 0.0
  %3395 = vmatprep.subr.mxu0 0.0
  %3396 = vmatpush1.xpose.msra.mxu0 0.0
  %3397 = vmatprep.subr.mxu0 0.0
  %3398 = vmatpush1.xpose.msra.mxu0 0.0
  %3399 = vmatprep.subr.mxu0 0.0
  %3400 = vmatpush1.xpose.msra.mxu0 0.0
  %3401 = vmatprep.subr.mxu0 0.0
  %3402 = vmatpush1.xpose.msra.mxu0 0.0
  %3403 = vmatprep.subr.mxu0 0.0
  %3404 = vmatpush1.xpose.msra.mxu0 0.0
  %3405 = vmatprep.subr.mxu0 0.0
  %3406 = vmatpush1.xpose.msra.mxu0 %v3373
  %3407 = vmatprep.subr.mxu0 0.0
  %3408 = vmatpush2.xpose.msra.mxu0 0.0
  %3409 = vmatprep.subr.mxu0 0.0
  %3410 = vmatpush2.xpose.msra.mxu0 0.0
  %3411 = vmatprep.subr.mxu0 0.0
  %3412 = vmatpush2.xpose.msra.mxu0 0.0
  %3413 = vmatprep.subr.mxu0 0.0
  %3414 = vmatpush2.xpose.msra.mxu0 0.0
  %3415 = vmatprep.subr.mxu0 0.0
  %3416 = vmatpush2.xpose.msra.mxu0 0.0
  %3417 = vmatprep.subr.mxu0 0.0
  %3418 = vmatpush2.xpose.msra.mxu0 0.0
  %3419 = vmatprep.subr.mxu0 0.0
  %3420 = vmatpush2.xpose.msra.mxu0 0.0
  %3421 = vmatprep.subr.mxu0 0.0
  %3422 = vmatpush2.xpose.msra.mxu0 0.0
  %3423 = vmatprep.subr.mxu0 0.0
  %3424 = vmatpush2.xpose.msra.mxu0 0.0
  %3425 = vmatprep.subr.mxu0 0.0
  %3426 = vmatpush2.xpose.msra.mxu0 0.0
  %3427 = vmatprep.subr.mxu0 0.0
  %3428 = vmatpush2.xpose.msra.mxu0 0.0
  %3429 = vmatprep.subr.mxu0 0.0
  %3430 = vmatpush2.xpose.msra.mxu0 0.0
  %3431 = vmatprep.subr.mxu0 0.0
  %3432 = vmatpush2.xpose.msra.mxu0 0.0
  %3433 = vmatprep.subr.mxu0 0.0
  %3434 = vmatpush2.xpose.msra.mxu0 0.0
  %3435 = vmatprep.subr.mxu0 0.0
  %3436 = vmatpush2.xpose.msra.mxu0 0.0
  %3437 = vmatprep.subr.mxu0 0.0
  %3438 = vmatpush2.xpose.msra.mxu0 0.0
  %3439 = vmatprep.mubr.f32.mxu0 0.0
  %3440 = vmatmul.mubr.f32.gmra.mxu0 %v3371
  %v3441 = vpop.f32.mrf.mxu0
  %v3442 = vadd.f32 0.0, %v3441
  %v3443 = vpop.f32.mrf.mxu0
  %3444 = vdwg.mxu0
  %3445 = vrot.lane.b32.xlu0 %v2364, 104
  %v3446 = vpop.permute.xlu0 %3445
  %3447 = vrot.lane.b32.xlu0 %v2364, 72
  %v3448 = vpop.permute.xlu0 %3447
  %v3449 = vsel %vm527, %v3446, 0
  %v3451 = vsel %vm527, %v3448, 0
  %3453 = vmatprep.subr.mxu0 0.0
  %3454 = vmatpush1.xpose.msra.mxu0 0.0
  %3455 = vmatprep.subr.mxu0 0.0
  %3456 = vmatpush1.xpose.msra.mxu0 0.0
  %3457 = vmatprep.subr.mxu0 0.0
  %3458 = vmatpush1.xpose.msra.mxu0 0.0
  %3459 = vmatprep.subr.mxu0 0.0
  %3460 = vmatpush1.xpose.msra.mxu0 0.0
  %3461 = vmatprep.subr.mxu0 0.0
  %3462 = vmatpush1.xpose.msra.mxu0 0.0
  %3463 = vmatprep.subr.mxu0 0.0
  %3464 = vmatpush1.xpose.msra.mxu0 0.0
  %3465 = vmatprep.subr.mxu0 0.0
  %3466 = vmatpush1.xpose.msra.mxu0 0.0
  %3467 = vmatprep.subr.mxu0 0.0
  %3468 = vmatpush1.xpose.msra.mxu0 0.0
  %3469 = vmatprep.subr.mxu0 0.0
  %3470 = vmatpush1.xpose.msra.mxu0 0.0
  %3471 = vmatprep.subr.mxu0 0.0
  %3472 = vmatpush1.xpose.msra.mxu0 0.0
  %3473 = vmatprep.subr.mxu0 0.0
  %3474 = vmatpush1.xpose.msra.mxu0 0.0
  %3475 = vmatprep.subr.mxu0 0.0
  %3476 = vmatpush1.xpose.msra.mxu0 0.0
  %3477 = vmatprep.subr.mxu0 0.0
  %3478 = vmatpush1.xpose.msra.mxu0 0.0
  %3479 = vmatprep.subr.mxu0 0.0
  %3480 = vmatpush1.xpose.msra.mxu0 0.0
  %3481 = vmatprep.subr.mxu0 0.0
  %3482 = vmatpush1.xpose.msra.mxu0 0.0
  %3483 = vmatprep.subr.mxu0 0.0
  %3484 = vmatpush1.xpose.msra.mxu0 %v3451
  %3485 = vmatprep.subr.mxu0 0.0
  %3486 = vmatpush2.xpose.msra.mxu0 0.0
  %3487 = vmatprep.subr.mxu0 0.0
  %3488 = vmatpush2.xpose.msra.mxu0 0.0
  %3489 = vmatprep.subr.mxu0 0.0
  %3490 = vmatpush2.xpose.msra.mxu0 0.0
  %3491 = vmatprep.subr.mxu0 0.0
  %3492 = vmatpush2.xpose.msra.mxu0 0.0
  %3493 = vmatprep.subr.mxu0 0.0
  %3494 = vmatpush2.xpose.msra.mxu0 0.0
  %3495 = vmatprep.subr.mxu0 0.0
  %3496 = vmatpush2.xpose.msra.mxu0 0.0
  %3497 = vmatprep.subr.mxu0 0.0
  %3498 = vmatpush2.xpose.msra.mxu0 0.0
  %3499 = vmatprep.subr.mxu0 0.0
  %3500 = vmatpush2.xpose.msra.mxu0 0.0
  %3501 = vmatprep.subr.mxu0 0.0
  %3502 = vmatpush2.xpose.msra.mxu0 0.0
  %3503 = vmatprep.subr.mxu0 0.0
  %3504 = vmatpush2.xpose.msra.mxu0 0.0
  %3505 = vmatprep.subr.mxu0 0.0
  %3506 = vmatpush2.xpose.msra.mxu0 0.0
  %3507 = vmatprep.subr.mxu0 0.0
  %3508 = vmatpush2.xpose.msra.mxu0 0.0
  %3509 = vmatprep.subr.mxu0 0.0
  %3510 = vmatpush2.xpose.msra.mxu0 0.0
  %3511 = vmatprep.subr.mxu0 0.0
  %3512 = vmatpush2.xpose.msra.mxu0 0.0
  %3513 = vmatprep.subr.mxu0 0.0
  %3514 = vmatpush2.xpose.msra.mxu0 0.0
  %3515 = vmatprep.subr.mxu0 0.0
  %3516 = vmatpush2.xpose.msra.mxu0 0.0
  %3517 = vmatprep.mubr.f32.mxu0 0.0
  %3518 = vmatmul.mubr.f32.gmra.mxu0 %v3449
  %v3519 = vpop.f32.mrf.mxu0
  %v3520 = vadd.f32 0.0, %v3519
  %v3521 = vpop.f32.mrf.mxu0
  %3522 = vdwg.mxu0
  %v3523 = vmul.f32 %v3442, 0.35355338
  %v3524 = vmul.f32 %v3520, 0.35355338
  %v3525 = vadd.f32 %v3523, %v366
  %v3526 = vadd.f32 %v3524, %v366
  %v3527 = vsel %vm527, %v3525, -inf
  %3528 = vmax.xlane.f32.xlu0 %v3527
  %v3529 = vpop.xlane.xlu0 %3528
  %v3530 = vsel %vm527, %v3526, -inf
  %3531 = vmax.xlane.f32.xlu0 %v3530
  %v3532 = vpop.xlane.xlu0 %3531
  %v3533 = vsub.f32 %v3525, %v3529
  %v3534 = vsub.f32 %v3526, %v3532
  %v3535 = vmul.f32 %v3533, 1.442695
  %v3536 = vpow.pop %v3535
  %v3537 = vmul.f32 %v3534, 1.442695
  %v3538 = vpow.pop %v3537
  %v3539 = vsel %vm527, %v3536, 0.0
  %3540 = vadd.xlane.f32.xlu0 %v3539
  %v3541 = vpop.xlane.xlu0 %3540
  %v3542 = vsel %vm527, %v3538, 0.0
  %3543 = vadd.xlane.f32.xlu0 %v3542
  %v3544 = vpop.xlane.xlu0 %3543
  %v3545 = vrcp.pop %v3541
  %v3546 = vrcp.pop %v3544
  %v3547 = vmul.f32 %v3536, %v3545
  %v3548 = vmul.f32 %v3538, %v3546
  %3549 = vrot.lane.b32.xlu0 %v2359, 40
  %v3550 = vpop.permute.xlu0 %3549
  %v3553 = vsel %vm527, %v3547, 0
  %3555 = vmatprep.subr.mxu0 0.0
  %3556 = vmatpush1.msra.mxu0 0.0
  %3557 = vmatprep.subr.mxu0 0.0
  %3558 = vmatpush1.msra.mxu0 0.0
  %3559 = vmatprep.subr.mxu0 0.0
  %3560 = vmatpush1.msra.mxu0 0.0
  %3561 = vmatprep.subr.mxu0 0.0
  %3562 = vmatpush1.msra.mxu0 0.0
  %3563 = vmatprep.subr.mxu0 0.0
  %3564 = vmatpush1.msra.mxu0 0.0
  %3565 = vmatprep.subr.mxu0 0.0
  %3566 = vmatpush1.msra.mxu0 0.0
  %3567 = vmatprep.subr.mxu0 0.0
  %3568 = vmatpush1.msra.mxu0 0.0
  %3569 = vmatprep.subr.mxu0 0.0
  %3570 = vmatpush1.msra.mxu0 0.0
  %3571 = vmatprep.subr.mxu0 0.0
  %3572 = vmatpush1.msra.mxu0 0.0
  %3573 = vmatprep.subr.mxu0 0.0
  %3574 = vmatpush1.msra.mxu0 0.0
  %3575 = vmatprep.subr.mxu0 0.0
  %3576 = vmatpush1.msra.mxu0 0.0
  %3577 = vmatprep.subr.mxu0 0.0
  %3578 = vmatpush1.msra.mxu0 0.0
  %3579 = vmatprep.subr.mxu0 0.0
  %3580 = vmatpush1.msra.mxu0 0.0
  %3581 = vmatprep.subr.mxu0 0.0
  %3582 = vmatpush1.msra.mxu0 0.0
  %3583 = vmatprep.subr.mxu0 0.0
  %3584 = vmatpush1.msra.mxu0 0.0
  %3585 = vmatprep.subr.mxu0 0.0
  %3586 = vmatpush1.msra.mxu0 %v3550
  %3587 = vmatprep.subr.mxu0 0.0
  %3588 = vmatpush2.msra.mxu0 0.0
  %3589 = vmatprep.subr.mxu0 0.0
  %3590 = vmatpush2.msra.mxu0 0.0
  %3591 = vmatprep.subr.mxu0 0.0
  %3592 = vmatpush2.msra.mxu0 0.0
  %3593 = vmatprep.subr.mxu0 0.0
  %3594 = vmatpush2.msra.mxu0 0.0
  %3595 = vmatprep.subr.mxu0 0.0
  %3596 = vmatpush2.msra.mxu0 0.0
  %3597 = vmatprep.subr.mxu0 0.0
  %3598 = vmatpush2.msra.mxu0 0.0
  %3599 = vmatprep.subr.mxu0 0.0
  %3600 = vmatpush2.msra.mxu0 0.0
  %3601 = vmatprep.subr.mxu0 0.0
  %3602 = vmatpush2.msra.mxu0 0.0
  %3603 = vmatprep.subr.mxu0 0.0
  %3604 = vmatpush2.msra.mxu0 0.0
  %3605 = vmatprep.subr.mxu0 0.0
  %3606 = vmatpush2.msra.mxu0 0.0
  %3607 = vmatprep.subr.mxu0 0.0
  %3608 = vmatpush2.msra.mxu0 0.0
  %3609 = vmatprep.subr.mxu0 0.0
  %3610 = vmatpush2.msra.mxu0 0.0
  %3611 = vmatprep.subr.mxu0 0.0
  %3612 = vmatpush2.msra.mxu0 0.0
  %3613 = vmatprep.subr.mxu0 0.0
  %3614 = vmatpush2.msra.mxu0 0.0
  %3615 = vmatprep.subr.mxu0 0.0
  %3616 = vmatpush2.msra.mxu0 0.0
  %3617 = vmatprep.subr.mxu0 0.0
  %3618 = vmatpush2.msra.mxu0 0.0
  %3619 = vmatprep.mubr.f32.mxu0 0.0
  %3620 = vmatmul.mubr.f32.gmra.mxu0 %v3553
  %v3621 = vpop.f32.mrf.mxu0
  %v3622 = vadd.f32 0.0, %v3621
  %v3623 = vpop.f32.mrf.mxu0
  %3624 = vdwg.mxu0
  %3625 = vrot.lane.b32.xlu0 %v2364, 40
  %v3626 = vpop.permute.xlu0 %3625
  %v3629 = vsel %vm527, %v3548, 0
  %3631 = vmatprep.subr.mxu0 0.0
  %3632 = vmatpush1.msra.mxu0 0.0
  %3633 = vmatprep.subr.mxu0 0.0
  %3634 = vmatpush1.msra.mxu0 0.0
  %3635 = vmatprep.subr.mxu0 0.0
  %3636 = vmatpush1.msra.mxu0 0.0
  %3637 = vmatprep.subr.mxu0 0.0
  %3638 = vmatpush1.msra.mxu0 0.0
  %3639 = vmatprep.subr.mxu0 0.0
  %3640 = vmatpush1.msra.mxu0 0.0
  %3641 = vmatprep.subr.mxu0 0.0
  %3642 = vmatpush1.msra.mxu0 0.0
  %3643 = vmatprep.subr.mxu0 0.0
  %3644 = vmatpush1.msra.mxu0 0.0
  %3645 = vmatprep.subr.mxu0 0.0
  %3646 = vmatpush1.msra.mxu0 0.0
  %3647 = vmatprep.subr.mxu0 0.0
  %3648 = vmatpush1.msra.mxu0 0.0
  %3649 = vmatprep.subr.mxu0 0.0
  %3650 = vmatpush1.msra.mxu0 0.0
  %3651 = vmatprep.subr.mxu0 0.0
  %3652 = vmatpush1.msra.mxu0 0.0
  %3653 = vmatprep.subr.mxu0 0.0
  %3654 = vmatpush1.msra.mxu0 0.0
  %3655 = vmatprep.subr.mxu0 0.0
  %3656 = vmatpush1.msra.mxu0 0.0
  %3657 = vmatprep.subr.mxu0 0.0
  %3658 = vmatpush1.msra.mxu0 0.0
  %3659 = vmatprep.subr.mxu0 0.0
  %3660 = vmatpush1.msra.mxu0 0.0
  %3661 = vmatprep.subr.mxu0 0.0
  %3662 = vmatpush1.msra.mxu0 %v3626
  %3663 = vmatprep.subr.mxu0 0.0
  %3664 = vmatpush2.msra.mxu0 0.0
  %3665 = vmatprep.subr.mxu0 0.0
  %3666 = vmatpush2.msra.mxu0 0.0
  %3667 = vmatprep.subr.mxu0 0.0
  %3668 = vmatpush2.msra.mxu0 0.0
  %3669 = vmatprep.subr.mxu0 0.0
  %3670 = vmatpush2.msra.mxu0 0.0
  %3671 = vmatprep.subr.mxu0 0.0
  %3672 = vmatpush2.msra.mxu0 0.0
  %3673 = vmatprep.subr.mxu0 0.0
  %3674 = vmatpush2.msra.mxu0 0.0
  %3675 = vmatprep.subr.mxu0 0.0
  %3676 = vmatpush2.msra.mxu0 0.0
  %3677 = vmatprep.subr.mxu0 0.0
  %3678 = vmatpush2.msra.mxu0 0.0
  %3679 = vmatprep.subr.mxu0 0.0
  %3680 = vmatpush2.msra.mxu0 0.0
  %3681 = vmatprep.subr.mxu0 0.0
  %3682 = vmatpush2.msra.mxu0 0.0
  %3683 = vmatprep.subr.mxu0 0.0
  %3684 = vmatpush2.msra.mxu0 0.0
  %3685 = vmatprep.subr.mxu0 0.0
  %3686 = vmatpush2.msra.mxu0 0.0
  %3687 = vmatprep.subr.mxu0 0.0
  %3688 = vmatpush2.msra.mxu0 0.0
  %3689 = vmatprep.subr.mxu0 0.0
  %3690 = vmatpush2.msra.mxu0 0.0
  %3691 = vmatprep.subr.mxu0 0.0
  %3692 = vmatpush2.msra.mxu0 0.0
  %3693 = vmatprep.subr.mxu0 0.0
  %3694 = vmatpush2.msra.mxu0 0.0
  %3695 = vmatprep.mubr.f32.mxu0 0.0
  %3696 = vmatmul.mubr.f32.gmra.mxu0 %v3629
  %v3697 = vpop.f32.mrf.mxu0
  %v3698 = vadd.f32 0.0, %v3697
  %v3699 = vpop.f32.mrf.mxu0
  %3700 = vdwg.mxu0
  %3703 = vrot.lane.b32.xlu0 %v2954, 8
  %v3704 = vpop.permute.xlu0 %3703
  %3705 = vrot.lane.b32.xlu0 %v3030, 8
  %v3706 = vpop.permute.xlu0 %3705
  %3711 = vrot.lane.b32.xlu0 %v3288, 16
  %v3712 = vpop.permute.xlu0 %3711
  %3713 = vrot.lane.b32.xlu0 %v3364, 16
  %v3714 = vpop.permute.xlu0 %3713
  %3719 = vrot.lane.b32.xlu0 %v3622, 24
  %v3720 = vpop.permute.xlu0 %3719
  %3721 = vrot.lane.b32.xlu0 %v3698, 24
  %v3722 = vpop.permute.xlu0 %3721
  %v3725 = vsel %vm527, %v2620, %v3704
  %v3726 = vsel %vm527, %v2696, %v3706
  %v3727 = vsel %vm1885, %v3725, %v3712
  %v3728 = vsel %vm1885, %v3726, %v3714
  %v3729 = vsel %vm1888, %v3727, %v3720
  %v3730 = vsel %vm1888, %v3728, %v3722
  %3735 = vrot.lane.b32.xlu0 %v2220, 32
  %v3736 = vpop.permute.xlu0 %3735
  %3737 = vrot.lane.b32.xlu0 %v2221, 32
  %v3738 = vpop.permute.xlu0 %3737
  %3739 = vrot.lane.b32.xlu0 %v2222, 32
  %v3740 = vpop.permute.xlu0 %3739
  %3741 = vrot.lane.b32.xlu0 %v2223, 32
  %v3742 = vpop.permute.xlu0 %3741
  %v3748 = vsel %vm399, %v3729, 0
  %v3751 = vsel %vm399, %v3730, 0
  %3753 = vmatprep.subr.mxu0 0.0
  %3754 = vmatpush1.msra.mxu0 0.0
  %3755 = vmatprep.subr.mxu0 0.0
  %3756 = vmatpush1.msra.mxu0 0.0
  %3757 = vmatprep.subr.mxu0 0.0
  %3758 = vmatpush1.msra.mxu0 0.0
  %3759 = vmatprep.subr.mxu0 0.0
  %3760 = vmatpush1.msra.mxu0 0.0
  %3761 = vmatprep.subr.mxu0 0.0
  %3762 = vmatpush1.msra.mxu0 0.0
  %3763 = vmatprep.subr.mxu0 0.0
  %3764 = vmatpush1.msra.mxu0 0.0
  %3765 = vmatprep.subr.mxu0 0.0
  %3766 = vmatpush1.msra.mxu0 0.0
  %3767 = vmatprep.subr.mxu0 0.0
  %3768 = vmatpush1.msra.mxu0 0.0
  %3769 = vmatprep.subr.mxu0 0.0
  %3770 = vmatpush1.msra.mxu0 0.0
  %3771 = vmatprep.subr.mxu0 0.0
  %3772 = vmatpush1.msra.mxu0 0.0
  %3773 = vmatprep.subr.mxu0 0.0
  %3774 = vmatpush1.msra.mxu0 0.0
  %3775 = vmatprep.subr.mxu0 0.0
  %3776 = vmatpush1.msra.mxu0 0.0
  %3777 = vmatprep.subr.mxu0 0.0
  %3778 = vmatpush1.msra.mxu0 %v3742
  %3779 = vmatprep.subr.mxu0 0.0
  %3780 = vmatpush1.msra.mxu0 %v3740
  %3781 = vmatprep.subr.mxu0 0.0
  %3782 = vmatpush1.msra.mxu0 %v3738
  %3783 = vmatprep.subr.mxu0 0.0
  %3784 = vmatpush1.msra.mxu0 %v3736
  %3785 = vmatprep.subr.mxu0 0.0
  %3786 = vmatpush2.msra.mxu0 0.0
  %3787 = vmatprep.subr.mxu0 0.0
  %3788 = vmatpush2.msra.mxu0 0.0
  %3789 = vmatprep.subr.mxu0 0.0
  %3790 = vmatpush2.msra.mxu0 0.0
  %3791 = vmatprep.subr.mxu0 0.0
  %3792 = vmatpush2.msra.mxu0 0.0
  %3793 = vmatprep.subr.mxu0 0.0
  %3794 = vmatpush2.msra.mxu0 0.0
  %3795 = vmatprep.subr.mxu0 0.0
  %3796 = vmatpush2.msra.mxu0 0.0
  %3797 = vmatprep.subr.mxu0 0.0
  %3798 = vmatpush2.msra.mxu0 0.0
  %3799 = vmatprep.subr.mxu0 0.0
  %3800 = vmatpush2.msra.mxu0 0.0
  %3801 = vmatprep.subr.mxu0 0.0
  %3802 = vmatpush2.msra.mxu0 0.0
  %3803 = vmatprep.subr.mxu0 0.0
  %3804 = vmatpush2.msra.mxu0 0.0
  %3805 = vmatprep.subr.mxu0 0.0
  %3806 = vmatpush2.msra.mxu0 0.0
  %3807 = vmatprep.subr.mxu0 0.0
  %3808 = vmatpush2.msra.mxu0 0.0
  %3809 = vmatprep.subr.mxu0 0.0
  %3810 = vmatpush2.msra.mxu0 0.0
  %3811 = vmatprep.subr.mxu0 0.0
  %3812 = vmatpush2.msra.mxu0 0.0
  %3813 = vmatprep.subr.mxu0 0.0
  %3814 = vmatpush2.msra.mxu0 0.0
  %3815 = vmatprep.subr.mxu0 0.0
  %3816 = vmatpush2.msra.mxu0 0.0
  %3817 = vmatprep.mubr.f32.mxu0 0.0
  %3818 = vmatmul.mubr.f32.gmra.mxu0 %v3748
  %v3819 = vpop.f32.mrf.mxu0
  %v3820 = vadd.f32 0.0, %v3819
  %v3821 = vpop.f32.mrf.mxu0
  %3822 = vmatprep.mubr.f32.mxu0 0.0
  %3823 = vmatmul.mubr.f32.gmra.mxu0 %v3751
  %v3824 = vpop.f32.mrf.mxu0
  %v3825 = vadd.f32 0.0, %v3824
  %v3826 = vpop.f32.mrf.mxu0
  %3827 = vdwg.mxu0
  %v3828 = vadd.f32 %v2210, %v3820
  %v3829 = vadd.f32 %v2211, %v3825
  %v3830 = vlaneseq
  %v3831 = vshrl.u32 %v3830, 7
  %v3832 = vsub.s32 0, %v3831
  %v3833 = vrot.slane %v2215, %v3832
  %v3834 = vadd.f32 %v3828, %v3833
  %v3835 = vadd.f32 %v3829, %v3833
  %v3836 = vsel %vm399, %v3834, 0.0
  %3837 = vadd.xlane.f32.xlu0 %v3836
  %v3838 = vpop.xlane.xlu0 %3837
  %v3839 = vsel %vm399, %v3835, 0.0
  %3840 = vadd.xlane.f32.xlu0 %v3839
  %v3841 = vpop.xlane.xlu0 %3840
  %v3842 = vmul.f32 %v3838, %v406
  %v3843 = vmul.f32 %v3841, %v406
  %v3844 = vsub.f32 %v3834, %v3842
  %v3845 = vsub.f32 %v3835, %v3843
  %v3846 = vmul.f32 %v3844, %v3844
  %v3847 = vmul.f32 %v3845, %v3845
  %v3848 = vsel %vm399, %v3846, 0.0
  %3849 = vadd.xlane.f32.xlu0 %v3848
  %v3850 = vpop.xlane.xlu0 %3849
  %v3851 = vsel %vm399, %v3847, 0.0
  %3852 = vadd.xlane.f32.xlu0 %v3851
  %v3853 = vpop.xlane.xlu0 %3852
  %v3854 = vmul.f32 %v3850, %v406
  %v3855 = vmul.f32 %v3853, %v406
  %v3856 = vadd.f32 %v3854, 1e-06
  %v3857 = vadd.f32 %v3855, 1e-06
  %v3858 = vrsqrt.pop %v3856
  %v3859 = vrsqrt.pop %v3857
  %v3860 = vmul.f32 %v3844, %v3858
  %v3861 = vmul.f32 %v3845, %v3859
  %v3862 = vlaneseq
  %v3863 = vshrl.u32 %v3862, 7
  %v3864 = vsub.s32 0, %v3863
  %v3865 = vrot.slane %v2216, %v3864
  %v3866 = vmul.f32 %v3860, %v3865
  %v3867 = vmul.f32 %v3861, %v3865
  %v3868 = vlaneseq
  %v3869 = vshrl.u32 %v3868, 7
  %v3870 = vsub.s32 0, %v3869
  %v3871 = vrot.slane %v2217, %v3870
  %v3872 = vadd.f32 %v3866, %v3871
  %v3873 = vadd.f32 %v3867, %v3871
  %v3874 = vlaneseq
  %v3875 = vshrl.u32 %v3874, 7
  %v3876 = vsub.s32 0, %v3875
  %v3877 = vrot.slane %v2218, %v3876
  %v3879 = vsel %vm399, %v3872, 0
  %v3882 = vsel %vm399, %v3873, 0
  %3884 = vmatprep.subr.mxu0 0.0
  %3885 = vmatpush1.msra.mxu0 0.0
  %3886 = vmatprep.subr.mxu0 0.0
  %3887 = vmatpush1.msra.mxu0 0.0
  %3888 = vmatprep.subr.mxu0 0.0
  %3889 = vmatpush1.msra.mxu0 0.0
  %3890 = vmatprep.subr.mxu0 0.0
  %3891 = vmatpush1.msra.mxu0 0.0
  %3892 = vmatprep.subr.mxu0 0.0
  %3893 = vmatpush1.msra.mxu0 0.0
  %3894 = vmatprep.subr.mxu0 0.0
  %3895 = vmatpush1.msra.mxu0 0.0
  %3896 = vmatprep.subr.mxu0 0.0
  %3897 = vmatpush1.msra.mxu0 0.0
  %3898 = vmatprep.subr.mxu0 0.0
  %3899 = vmatpush1.msra.mxu0 0.0
  %3900 = vmatprep.subr.mxu0 0.0
  %3901 = vmatpush1.msra.mxu0 0.0
  %3902 = vmatprep.subr.mxu0 0.0
  %3903 = vmatpush1.msra.mxu0 0.0
  %3904 = vmatprep.subr.mxu0 0.0
  %3905 = vmatpush1.msra.mxu0 0.0
  %3906 = vmatprep.subr.mxu0 0.0
  %3907 = vmatpush1.msra.mxu0 0.0
  %3908 = vmatprep.subr.mxu0 0.0
  %3909 = vmatpush1.msra.mxu0 %v2227
  %3910 = vmatprep.subr.mxu0 0.0
  %3911 = vmatpush1.msra.mxu0 %v2226
  %3912 = vmatprep.subr.mxu0 0.0
  %3913 = vmatpush1.msra.mxu0 %v2225
  %3914 = vmatprep.subr.mxu0 0.0
  %3915 = vmatpush1.msra.mxu0 %v2224
  %3916 = vmatprep.subr.mxu0 0.0
  %3917 = vmatpush2.msra.mxu0 0.0
  %3918 = vmatprep.subr.mxu0 0.0
  %3919 = vmatpush2.msra.mxu0 0.0
  %3920 = vmatprep.subr.mxu0 0.0
  %3921 = vmatpush2.msra.mxu0 0.0
  %3922 = vmatprep.subr.mxu0 0.0
  %3923 = vmatpush2.msra.mxu0 0.0
  %3924 = vmatprep.subr.mxu0 0.0
  %3925 = vmatpush2.msra.mxu0 0.0
  %3926 = vmatprep.subr.mxu0 0.0
  %3927 = vmatpush2.msra.mxu0 0.0
  %3928 = vmatprep.subr.mxu0 0.0
  %3929 = vmatpush2.msra.mxu0 0.0
  %3930 = vmatprep.subr.mxu0 0.0
  %3931 = vmatpush2.msra.mxu0 0.0
  %3932 = vmatprep.subr.mxu0 0.0
  %3933 = vmatpush2.msra.mxu0 0.0
  %3934 = vmatprep.subr.mxu0 0.0
  %3935 = vmatpush2.msra.mxu0 0.0
  %3936 = vmatprep.subr.mxu0 0.0
  %3937 = vmatpush2.msra.mxu0 0.0
  %3938 = vmatprep.subr.mxu0 0.0
  %3939 = vmatpush2.msra.mxu0 0.0
  %3940 = vmatprep.subr.mxu0 0.0
  %3941 = vmatpush2.msra.mxu0 0.0
  %3942 = vmatprep.subr.mxu0 0.0
  %3943 = vmatpush2.msra.mxu0 0.0
  %3944 = vmatprep.subr.mxu0 0.0
  %3945 = vmatpush2.msra.mxu0 0.0
  %3946 = vmatprep.subr.mxu0 0.0
  %3947 = vmatpush2.msra.mxu0 0.0
  %3948 = vmatprep.mubr.f32.mxu0 0.0
  %3949 = vmatmul.mubr.f32.gmra.mxu0 %v3879
  %v3950 = vpop.f32.mrf.mxu0
  %v3951 = vadd.f32 %v3877, %v3950
  %v3952 = vpop.f32.mrf.mxu0
  %3953 = vmatprep.mubr.f32.mxu0 0.0
  %3954 = vmatmul.mubr.f32.gmra.mxu0 %v3882
  %v3955 = vpop.f32.mrf.mxu0
  %v3956 = vadd.f32 %v3877, %v3955
  %v3957 = vpop.f32.mrf.mxu0
  %3958 = vdwg.mxu0
  %v3959 = vmul.f32 %v3951, 0.5
  %v3960 = vmul.f32 %v3956, 0.5
  %v3961 = vmul.f32 %v3951, 0.70710677
  %v3962 = vmul.f32 %v3956, 0.70710677
  %v3963 = verf.f32.pop %v3961
  %v3964 = verf.f32.pop %v3962
  %v3965 = vadd.f32 %v3963, 1.0
  %v3966 = vadd.f32 %v3964, 1.0
  %v3967 = vmul.f32 %v3959, %v3965
  %v3968 = vmul.f32 %v3960, %v3966
  %3969 = vmatprep.subr.mxu0 0.0
  %3970 = vmatpush1.msra.mxu0 %v2243
  %3971 = vmatprep.subr.mxu0 0.0
  %3972 = vmatpush1.msra.mxu0 %v2242
  %3973 = vmatprep.subr.mxu0 0.0
  %3974 = vmatpush1.msra.mxu0 %v2241
  %3975 = vmatprep.subr.mxu0 0.0
  %3976 = vmatpush1.msra.mxu0 %v2240
  %3977 = vmatprep.subr.mxu0 0.0
  %3978 = vmatpush1.msra.mxu0 %v2239
  %3979 = vmatprep.subr.mxu0 0.0
  %3980 = vmatpush1.msra.mxu0 %v2238
  %3981 = vmatprep.subr.mxu0 0.0
  %3982 = vmatpush1.msra.mxu0 %v2237
  %3983 = vmatprep.subr.mxu0 0.0
  %3984 = vmatpush1.msra.mxu0 %v2236
  %3985 = vmatprep.subr.mxu0 0.0
  %3986 = vmatpush1.msra.mxu0 %v2235
  %3987 = vmatprep.subr.mxu0 0.0
  %3988 = vmatpush1.msra.mxu0 %v2234
  %3989 = vmatprep.subr.mxu0 0.0
  %3990 = vmatpush1.msra.mxu0 %v2233
  %3991 = vmatprep.subr.mxu0 0.0
  %3992 = vmatpush1.msra.mxu0 %v2232
  %3993 = vmatprep.subr.mxu0 0.0
  %3994 = vmatpush1.msra.mxu0 %v2231
  %3995 = vmatprep.subr.mxu0 0.0
  %3996 = vmatpush1.msra.mxu0 %v2230
  %3997 = vmatprep.subr.mxu0 0.0
  %3998 = vmatpush1.msra.mxu0 %v2229
  %3999 = vmatprep.subr.mxu0 0.0
  %4000 = vmatpush1.msra.mxu0 %v2228
  %4001 = vmatprep.subr.mxu0 0.0
  %4002 = vmatpush2.msra.mxu0 0.0
  %4003 = vmatprep.subr.mxu0 0.0
  %4004 = vmatpush2.msra.mxu0 0.0
  %4005 = vmatprep.subr.mxu0 0.0
  %4006 = vmatpush2.msra.mxu0 0.0
  %4007 = vmatprep.subr.mxu0 0.0
  %4008 = vmatpush2.msra.mxu0 0.0
  %4009 = vmatprep.subr.mxu0 0.0
  %4010 = vmatpush2.msra.mxu0 0.0
  %4011 = vmatprep.subr.mxu0 0.0
  %4012 = vmatpush2.msra.mxu0 0.0
  %4013 = vmatprep.subr.mxu0 0.0
  %4014 = vmatpush2.msra.mxu0 0.0
  %4015 = vmatprep.subr.mxu0 0.0
  %4016 = vmatpush2.msra.mxu0 0.0
  %4017 = vmatprep.subr.mxu0 0.0
  %4018 = vmatpush2.msra.mxu0 0.0
  %4019 = vmatprep.subr.mxu0 0.0
  %4020 = vmatpush2.msra.mxu0 0.0
  %4021 = vmatprep.subr.mxu0 0.0
  %4022 = vmatpush2.msra.mxu0 0.0
  %4023 = vmatprep.subr.mxu0 0.0
  %4024 = vmatpush2.msra.mxu0 0.0
  %4025 = vmatprep.subr.mxu0 0.0
  %4026 = vmatpush2.msra.mxu0 0.0
  %4027 = vmatprep.subr.mxu0 0.0
  %4028 = vmatpush2.msra.mxu0 0.0
  %4029 = vmatprep.subr.mxu0 0.0
  %4030 = vmatpush2.msra.mxu0 0.0
  %4031 = vmatprep.subr.mxu0 0.0
  %4032 = vmatpush2.msra.mxu0 0.0
  %4033 = vmatprep.mubr.f32.mxu0 0.0
  %4034 = vmatmul.mubr.f32.gmra.mxu0 %v3967
  %v4035 = vpop.f32.mrf.mxu0
  %v4036 = vadd.f32 0.0, %v4035
  %v4037 = vpop.f32.mrf.mxu0
  %4038 = vmatprep.mubr.f32.mxu0 0.0
  %4039 = vmatmul.mubr.f32.gmra.mxu0 %v3968
  %v4040 = vpop.f32.mrf.mxu0
  %v4041 = vadd.f32 0.0, %v4040
  %v4042 = vpop.f32.mrf.mxu0
  %4043 = vdwg.mxu0
  %v4044 = vadd.f32 %v3834, %v4036
  %v4045 = vadd.f32 %v3835, %v4041
  %v4046 = vlaneseq
  %v4047 = vshrl.u32 %v4046, 7
  %v4048 = vsub.s32 0, %v4047
  %v4049 = vrot.slane %v2219, %v4048
  %v4050 = vadd.f32 %v4044, %v4049
  %v4051 = vadd.f32 %v4045, %v4049
  %v4052 = vlaneseq
  %v4053 = vshrl.u32 %v4052, 7
  %v4054 = vmul.u32 %v4053, 8
  %vm4055 = vcmp.eq.s32.totalorder %v364, %v4054
  %v4056 = vsel %vm4055, 1, 0
  %v4057 = vcvt.s32.f32 %v4056
  %v4059 = vsel %vm1885, %v4057, 0
  %4061 = vmatprep.subr.mxu0 0.0
  %4062 = vmatpush1.msra.mxu0 0.0
  %4063 = vmatprep.subr.mxu0 0.0
  %4064 = vmatpush1.msra.mxu0 0.0
  %4065 = vmatprep.subr.mxu0 0.0
  %4066 = vmatpush1.msra.mxu0 0.0
  %4067 = vmatprep.subr.mxu0 0.0
  %4068 = vmatpush1.msra.mxu0 0.0
  %4069 = vmatprep.subr.mxu0 0.0
  %4070 = vmatpush1.msra.mxu0 0.0
  %4071 = vmatprep.subr.mxu0 0.0
  %4072 = vmatpush1.msra.mxu0 0.0
  %4073 = vmatprep.subr.mxu0 0.0
  %4074 = vmatpush1.msra.mxu0 0.0
  %4075 = vmatprep.subr.mxu0 0.0
  %4076 = vmatpush1.msra.mxu0 0.0
  %4077 = vmatprep.subr.mxu0 0.0
  %4078 = vmatpush1.msra.mxu0 0.0
  %4079 = vmatprep.subr.mxu0 0.0
  %4080 = vmatpush1.msra.mxu0 0.0
  %4081 = vmatprep.subr.mxu0 0.0
  %4082 = vmatpush1.msra.mxu0 0.0
  %4083 = vmatprep.subr.mxu0 0.0
  %4084 = vmatpush1.msra.mxu0 0.0
  %4085 = vmatprep.subr.mxu0 0.0
  %4086 = vmatpush1.msra.mxu0 0.0
  %4087 = vmatprep.subr.mxu0 0.0
  %4088 = vmatpush1.msra.mxu0 0.0
  %4089 = vmatprep.subr.mxu0 0.0
  %4090 = vmatpush1.msra.mxu0 %v4051
  %4091 = vmatprep.subr.mxu0 0.0
  %4092 = vmatpush1.msra.mxu0 %v4050
  %4093 = vmatprep.subr.mxu0 0.0
  %4094 = vmatpush2.msra.mxu0 0.0
  %4095 = vmatprep.subr.mxu0 0.0
  %4096 = vmatpush2.msra.mxu0 0.0
  %4097 = vmatprep.subr.mxu0 0.0
  %4098 = vmatpush2.msra.mxu0 0.0
  %4099 = vmatprep.subr.mxu0 0.0
  %4100 = vmatpush2.msra.mxu0 0.0
  %4101 = vmatprep.subr.mxu0 0.0
  %4102 = vmatpush2.msra.mxu0 0.0
  %4103 = vmatprep.subr.mxu0 0.0
  %4104 = vmatpush2.msra.mxu0 0.0
  %4105 = vmatprep.subr.mxu0 0.0
  %4106 = vmatpush2.msra.mxu0 0.0
  %4107 = vmatprep.subr.mxu0 0.0
  %4108 = vmatpush2.msra.mxu0 0.0
  %4109 = vmatprep.subr.mxu0 0.0
  %4110 = vmatpush2.msra.mxu0 0.0
  %4111 = vmatprep.subr.mxu0 0.0
  %4112 = vmatpush2.msra.mxu0 0.0
  %4113 = vmatprep.subr.mxu0 0.0
  %4114 = vmatpush2.msra.mxu0 0.0
  %4115 = vmatprep.subr.mxu0 0.0
  %4116 = vmatpush2.msra.mxu0 0.0
  %4117 = vmatprep.subr.mxu0 0.0
  %4118 = vmatpush2.msra.mxu0 0.0
  %4119 = vmatprep.subr.mxu0 0.0
  %4120 = vmatpush2.msra.mxu0 0.0
  %4121 = vmatprep.subr.mxu0 0.0
  %4122 = vmatpush2.msra.mxu0 0.0
  %4123 = vmatprep.subr.mxu0 0.0
  %4124 = vmatpush2.msra.mxu0 0.0
  %4125 = vmatprep.mubr.f32.mxu0 0.0
  %4126 = vmatmul.mubr.f32.gmra.mxu0 %v4059
  %v4127 = vpop.f32.mrf.mxu0
  %v4128 = vadd.f32 0.0, %v4127
  %v4129 = vpop.f32.mrf.mxu0
  %4130 = vdwg.mxu0
  %v4131 = vld [vmem:[%s3] sm:$0x1]
  %v4132 = vld [vmem:[%s3 + $0x1] sm:$0x1]
  %v4133 = vsel %vm399, %v4128, 0.0
  %4134 = vadd.xlane.f32.xlu0 %v4133
  %v4135 = vpop.xlane.xlu0 %4134
  %v4136 = vmul.f32 %v4135, %v406
  %v4137 = vsub.f32 %v4128, %v4136
  %v4138 = vmul.f32 %v4137, %v4137
  %v4139 = vsel %vm399, %v4138, 0.0
  %4140 = vadd.xlane.f32.xlu0 %v4139
  %v4141 = vpop.xlane.xlu0 %4140
  %v4142 = vmul.f32 %v4141, %v406
  %v4143 = vadd.f32 %v4142, 1e-06
  %v4144 = vrsqrt.pop %v4143
  %v4145 = vmul.f32 %v4137, %v4144
  %v4146 = vlaneseq
  %v4147 = vshrl.u32 %v4146, 7
  %v4148 = vsub.s32 0, %v4147
  %v4149 = vrot.slane %v4131, %v4148
  %v4150 = vmul.f32 %v4145, %v4149
  %v4151 = vlaneseq
  %v4152 = vshrl.u32 %v4151, 7
  %v4153 = vsub.s32 0, %v4152
  %v4154 = vrot.slane %v4132, %v4153
  %v4155 = vadd.f32 %v4150, %v4154
  %v4156 = vld [vmem:[%s6] sm:$0xff]
  %v4157 = vld [vmem:[%s6 + $0x8] sm:$0xff]
  %v4158 = vld [vmem:[%s6 + $0x10] sm:$0xff]
  %v4159 = vld [vmem:[%s6 + $0x18] sm:$0xff]
  %v4160 = vld [vmem:[%s3 + $0x2] sm:$0x1]
  %v4161 = vlaneseq
  %v4162 = vshrl.u32 %v4161, 7
  %v4163 = vsub.s32 0, %v4162
  %v4164 = vrot.slane %v4160, %v4163
  %v4166 = vsel %vm399, %v4155, 0
  %4168 = vmatprep.subr.mxu0 0.0
  %4169 = vmatpush1.msra.mxu0 0.0
  %4170 = vmatprep.subr.mxu0 0.0
  %4171 = vmatpush1.msra.mxu0 0.0
  %4172 = vmatprep.subr.mxu0 0.0
  %4173 = vmatpush1.msra.mxu0 0.0
  %4174 = vmatprep.subr.mxu0 0.0
  %4175 = vmatpush1.msra.mxu0 0.0
  %4176 = vmatprep.subr.mxu0 0.0
  %4177 = vmatpush1.msra.mxu0 0.0
  %4178 = vmatprep.subr.mxu0 0.0
  %4179 = vmatpush1.msra.mxu0 0.0
  %4180 = vmatprep.subr.mxu0 0.0
  %4181 = vmatpush1.msra.mxu0 0.0
  %4182 = vmatprep.subr.mxu0 0.0
  %4183 = vmatpush1.msra.mxu0 0.0
  %4184 = vmatprep.subr.mxu0 0.0
  %4185 = vmatpush1.msra.mxu0 0.0
  %4186 = vmatprep.subr.mxu0 0.0
  %4187 = vmatpush1.msra.mxu0 0.0
  %4188 = vmatprep.subr.mxu0 0.0
  %4189 = vmatpush1.msra.mxu0 0.0
  %4190 = vmatprep.subr.mxu0 0.0
  %4191 = vmatpush1.msra.mxu0 0.0
  %4192 = vmatprep.subr.mxu0 0.0
  %4193 = vmatpush1.msra.mxu0 %v4159
  %4194 = vmatprep.subr.mxu0 0.0
  %4195 = vmatpush1.msra.mxu0 %v4158
  %4196 = vmatprep.subr.mxu0 0.0
  %4197 = vmatpush1.msra.mxu0 %v4157
  %4198 = vmatprep.subr.mxu0 0.0
  %4199 = vmatpush1.msra.mxu0 %v4156
  %4200 = vmatprep.subr.mxu0 0.0
  %4201 = vmatpush2.msra.mxu0 0.0
  %4202 = vmatprep.subr.mxu0 0.0
  %4203 = vmatpush2.msra.mxu0 0.0
  %4204 = vmatprep.subr.mxu0 0.0
  %4205 = vmatpush2.msra.mxu0 0.0
  %4206 = vmatprep.subr.mxu0 0.0
  %4207 = vmatpush2.msra.mxu0 0.0
  %4208 = vmatprep.subr.mxu0 0.0
  %4209 = vmatpush2.msra.mxu0 0.0
  %4210 = vmatprep.subr.mxu0 0.0
  %4211 = vmatpush2.msra.mxu0 0.0
  %4212 = vmatprep.subr.mxu0 0.0
  %4213 = vmatpush2.msra.mxu0 0.0
  %4214 = vmatprep.subr.mxu0 0.0
  %4215 = vmatpush2.msra.mxu0 0.0
  %4216 = vmatprep.subr.mxu0 0.0
  %4217 = vmatpush2.msra.mxu0 0.0
  %4218 = vmatprep.subr.mxu0 0.0
  %4219 = vmatpush2.msra.mxu0 0.0
  %4220 = vmatprep.subr.mxu0 0.0
  %4221 = vmatpush2.msra.mxu0 0.0
  %4222 = vmatprep.subr.mxu0 0.0
  %4223 = vmatpush2.msra.mxu0 0.0
  %4224 = vmatprep.subr.mxu0 0.0
  %4225 = vmatpush2.msra.mxu0 0.0
  %4226 = vmatprep.subr.mxu0 0.0
  %4227 = vmatpush2.msra.mxu0 0.0
  %4228 = vmatprep.subr.mxu0 0.0
  %4229 = vmatpush2.msra.mxu0 0.0
  %4230 = vmatprep.subr.mxu0 0.0
  %4231 = vmatpush2.msra.mxu0 0.0
  %4232 = vmatprep.mubr.f32.mxu0 0.0
  %4233 = vmatmul.mubr.f32.gmra.mxu0 %v4166
  %v4234 = vpop.f32.mrf.mxu0
  %v4235 = vadd.f32 %v4164, %v4234
  %v4236 = vpop.f32.mrf.mxu0
  %4237 = vdwg.mxu0
  %4238 = vst [vmem:[%s7] sm:$0xff] %v4235
  // Predicated region
  $region30: #{vit_forward.1} parent=0 // pred_check
    _
  $region31: #{vit_forward.1} parent=0 // pred_check_branch
    %4240 = sbr.rel (0) target = $region33
  $region32: #{vit_forward.1} parent=0 // pred_region
    _
  $region33: #{vit_forward.1} parent=0 // pred_fallthru
    _
  // Predicated region
  $region34: #{vit_forward.1} parent=0 // pred_check
    _
  $region35: #{vit_forward.1} parent=0 // pred_check_branch
    %4242 = sbr.rel (0) target = $region37
  $region36: #{vit_forward.1} parent=0 // pred_region
    _
  $region37: #{vit_forward.1} parent=0 // pred_fallthru
    _

</llo_original>
